<compile_context>
chip_gen: v7x
topology: tpu7x:2x2x1
jax: 0.10.0
libtpu: 0.0.40
codegen_flags: <defaults>
</compile_context>

<pallas_src>
import jax
import jax.numpy as jnp
import numpy as np
from jax.experimental import pallas as pl
from jax.experimental.pallas import tpu as pltpu

F_IN = 32     # LSTM input_size
HID = 16      # LSTM hidden_size
REG1 = 8      # first Linear output
OUT = 1       # final outputs
MAX_TILE_N = 512


def _sigmoid_via_tanh(x):
    # sigmoid(x) == 0.5 * (tanh(x/2) + 1): single EUP op + cheap VPU work
    # instead of exp + reciprocal (relieves the single EUP slot, esp. v5e).
    return 0.5 * (jnp.tanh(0.5 * x) + 1.0)


def lstm_kernel(x_ref, wih_ref, whh_ref, b_ref, weff_ref, beff_ref,
                out_ref, gx_ref):
    # x_ref   : (T, F_IN, tile_n)   wih_ref: (4*HID, F_IN)   whh_ref: (4*HID, HID)
    # b_ref   : (4*HID, 1)          weff_ref: (HID, 1)       beff_ref: (1,) in SMEM
    # out_ref : (T, tile_n)         gx_ref : (T, 4*HID, tile_n) VMEM scratch
    T, _, tile_n = x_ref.shape

    # ---- Phase 1: hoisted input projection for all timesteps (off the serial
    # recurrence path).  Bias broadcast hoisted once (no per-step broadcast).
    b_bc = jnp.broadcast_to(b_ref[...], (4 * HID, tile_n))
    for t in range(T):
        gx_ref[t] = (
            jnp.dot(wih_ref[...], x_ref[t], preferred_element_type=jnp.float32)
            + b_bc)

    # ---- Phase 2: recurrence, fully unrolled (T small & static); only the
    # hidden-state matmul remains on the serial critical path.
    w_col = weff_ref[...]                                   # (HID, 1) fused head
    h = jnp.zeros((HID, tile_n), jnp.float32)
    c = jnp.zeros((HID, tile_n), jnp.float32)
    ys = []
    for t in range(T):
        gates = gx_ref[t] + jnp.dot(whh_ref[...], h,
                                    preferred_element_type=jnp.float32)
        i_g = _sigmoid_via_tanh(gates[0 * HID:1 * HID, :])
        f_g = _sigmoid_via_tanh(gates[1 * HID:2 * HID, :])
        g_g = jnp.tanh(gates[2 * HID:3 * HID, :])
        o_g = _sigmoid_via_tanh(gates[3 * HID:4 * HID, :])
        c = f_g * c + i_g * g_g
        h = o_g * jnp.tanh(c)
        # Fused head (w2@w1): VPU multiply + sublane reduce; overlaps with the
        # next step's MXU work thanks to the full unroll.
        ys.append(jnp.sum(h * w_col, axis=0, keepdims=True))    # (1, tile_n)

    # ---- Phase 3: single dense (T, tile_n) store (no per-row masked stores).
    out_ref[...] = jnp.concatenate(ys, axis=0) + beff_ref[0]


def lstm_forward(x, params, max_tile_n=MAX_TILE_N):
    B, T, F, H, W = x.shape
    assert F == F_IN
    N = B * H * W

    # Lane tile: multiple of 128, capped; pad N so the grid covers it exactly.
    tile_n = min(max_tile_n, pl.cdiv(N, 128) * 128)
    n_tiles = pl.cdiv(N, tile_n)
    N_pad = n_tiles * tile_n

    # Same flattening as the PyTorch module (N ordered as (B, H, W)), laid out
    # for the kernel as (T, F, N) so the batch sits lane-dense on the last axis.
    x_tfn = jnp.transpose(x, (1, 2, 0, 3, 4)).reshape(T, F, N)
    if N_pad != N:
        x_tfn = jnp.pad(x_tfn, ((0, 0), (0, 0), (0, N_pad - N)))

    wih = params["w_ih"]                                         # (4*HID, F_IN)
    whh = params["w_hh"]                                         # (4*HID, HID)
    b = (params["b_ih"] + params["b_hh"]).reshape(4 * HID, 1)
    # Fuse the two Linear heads (no nonlinearity between them).
    w_eff = (params["w2"] @ params["w1"]).reshape(HID, 1)        # (HID, 1)
    b_eff = (params["w2"] @ params["b1"] + params["b2"]).reshape(1)  # (1,)

    out_tn = pl.pallas_call(
        lstm_kernel,
        out_shape=jax.ShapeDtypeStruct((T, N_pad), jnp.float32),
        grid_spec=pltpu.PrefetchScalarGridSpec(
            num_scalar_prefetch=0,
            grid=(n_tiles,),
            in_specs=[
                pl.BlockSpec((T, F_IN, tile_n), lambda i: (0, 0, i)),
                pl.BlockSpec((4 * HID, F_IN), lambda i: (0, 0)),
                pl.BlockSpec((4 * HID, HID), lambda i: (0, 0)),
                pl.BlockSpec((4 * HID, 1), lambda i: (0, 0)),
                pl.BlockSpec((HID, 1), lambda i: (0, 0)),
                pl.BlockSpec(memory_space=pltpu.MemorySpace.SMEM),   # b_eff scalar
            ],
            out_specs=pl.BlockSpec((T, tile_n), lambda i: (0, i)),
            scratch_shapes=[
                # hoisted input-projection buffer (T, 4*HID, tile_n)
                pltpu.VMEM((T, 4 * HID, tile_n), jnp.float32),
            ],
        ),
        compiler_params=pltpu.CompilerParams(
            # N tiles are fully independent -> shard across v7x's 2 TensorCores.
            dimension_semantics=("parallel",),
            # Explicit budget: well under v7x's 64 MiB physical / 32 MiB scoped.
            vmem_limit_bytes=32 * 1024 * 1024,
        ),
    )(x_tfn, wih, whh, b, w_eff, b_eff)

    # Same return_shape as PyTorch: (T,N) -> (N,T) -> (B,H,W,T) -> (B,T,H,W)
    out_nt = out_tn[:, :N].T
    out = jnp.transpose(out_nt.reshape(B, H, W, T), (0, 3, 1, 2))
    return out


def lstm_reference(x, params):
    """Pure-JAX reference matching PyTorch nn.LSTM + reg1 semantics."""
    B, T, F, H, W = x.shape
    N = B * H * W
    xr = jnp.transpose(x, (0, 3, 4, 1, 2)).reshape(N, T, F)

    def step(carry, xt):
        h, c = carry
        gates = (xt @ params["w_ih"].T + params["b_ih"]
                 + h @ params["w_hh"].T + params["b_hh"])
        i, f, g, o = jnp.split(gates, 4, axis=-1)
        i, f, o = jax.nn.sigmoid(i), jax.nn.sigmoid(f), jax.nn.sigmoid(o)
        g = jnp.tanh(g)
        c = f * c + i * g
        h = o * jnp.tanh(c)
        return (h, c), h

    h0 = jnp.zeros((N, HID), jnp.float32)
    c0 = jnp.zeros((N, HID), jnp.float32)
    _, hs = jax.lax.scan(step, (h0, c0), jnp.transpose(xr, (1, 0, 2)))  # (T,N,HID)
    z = hs @ params["w1"].T + params["b1"]
    y = z @ params["w2"].T + params["b2"]                               # (T,N,1)
    out_nt = jnp.transpose(y[..., 0], (1, 0))                           # (N,T)
    return jnp.transpose(out_nt.reshape(B, H, W, T), (0, 3, 1, 2))


def init_params(key):
    ks = jax.random.split(key, 8)
    k_lstm = 1.0 / np.sqrt(HID)
    k_l1 = 1.0 / np.sqrt(HID)
    k_l2 = 1.0 / np.sqrt(REG1)
    u = lambda k, shape, a: jax.random.uniform(k, shape, jnp.float32, -a, a)
    return {
        "w_ih": u(ks[0], (4 * HID, F_IN), k_lstm),
        "w_hh": u(ks[1], (4 * HID, HID), k_lstm),
        "b_ih": u(ks[2], (4 * HID,), k_lstm),
        "b_hh": u(ks[3], (4 * HID,), k_lstm),
        "w1": u(ks[4], (REG1, HID), k_l1),
        "b1": u(ks[5], (REG1,), k_l1),
        "w2": u(ks[6], (OUT, REG1), k_l2),
        "b2": u(ks[7], (OUT,), k_l2),
    }


if __name__ == "__main__":
    key = jax.random.PRNGKey(0)
    kp, kx = jax.random.split(key)
    params = init_params(kp)

    # small shapes: B=2, seq=8, feat=32, spatial 4x4  ->  N = 32 (padded to 128)
    x = jax.random.normal(kx, (2, 8, F_IN, 4, 4), jnp.float32)

    out = jax.block_until_ready(lstm_forward(x, params))
    ref = jax.block_until_ready(lstm_reference(x, params))

    assert out.shape == (2, 8, 4, 4), out.shape
    np.testing.assert_allclose(np.asarray(out), np.asarray(ref),
                               rtol=2e-4, atol=1e-4)
    print("KERNEL_OK")
</pallas_src>

<mosaic_0001>
module attributes {stable_mosaic.version = 11 : i64} {
  func.func @lstm_kernel(%arg0: i32, %arg1: memref<8x32x128xf32, #tpu.memory_space<vmem>>, %arg2: memref<64x32xf32, #tpu.memory_space<vmem>>, %arg3: memref<64x16xf32, #tpu.memory_space<vmem>>, %arg4: memref<64x1xf32, #tpu.memory_space<vmem>>, %arg5: memref<16x1xf32, #tpu.memory_space<vmem>>, %arg6: memref<1xf32, #tpu.memory_space<smem>>, %arg7: memref<8x128xf32, #tpu.memory_space<vmem>>, %arg8: memref<8x64x128xf32, #tpu.memory_space<vmem>>) attributes {dimension_semantics = [#tpu.dimension_semantics<parallel>], iteration_bounds = array<i64: 1>, scalar_prefetch = 0 : i64, scratch_operands = 1 : i64, tpu.core_type = #tpu.core_type<tc>, window_params = [{transform_indices = @transform_0, window_bounds = array<i64: 8, 32, 128>}, {pipeline_mode = #tpu.pipeline_mode<synchronous>, transform_indices = @transform_1, window_bounds = array<i64: 64, 32>}, {pipeline_mode = #tpu.pipeline_mode<synchronous>, transform_indices = @transform_2, window_bounds = array<i64: 64, 16>}, {pipeline_mode = #tpu.pipeline_mode<synchronous>, transform_indices = @transform_3, window_bounds = array<i64: 64, 1>}, {pipeline_mode = #tpu.pipeline_mode<synchronous>, transform_indices = @transform_4, window_bounds = array<i64: 16, 1>}, {transform_indices = @transform_5, window_bounds = array<i64: 1>}, {transform_indices = @transform_6, window_bounds = array<i64: 8, 128>}]} {
    %c0 = arith.constant 0 : index
    %c0_0 = arith.constant 0 : index
    %0 = vector.load %arg4[%c0, %c0_0] : memref<64x1xf32, #tpu.memory_space<vmem>>, vector<64x1xf32>
    %1 = vector.shape_cast %0 : vector<64x1xf32> to vector<64x1xf32>
    %2 = vector.broadcast %1 : vector<64x1xf32> to vector<64x128xf32>
    %c0_1 = arith.constant 0 : index
    %c0_2 = arith.constant 0 : index
    %3 = vector.load %arg2[%c0_1, %c0_2] : memref<64x32xf32, #tpu.memory_space<vmem>>, vector<64x32xf32>
    %c0_3 = arith.constant 0 : index
    %c0_4 = arith.constant 0 : index
    %c0_5 = arith.constant 0 : index
    %4 = vector.load %arg1[%c0_3, %c0_4, %c0_5] : memref<8x32x128xf32, #tpu.memory_space<vmem>>, vector<1x32x128xf32>
    %5 = vector.shape_cast %4 : vector<1x32x128xf32> to vector<32x128xf32>
    %cst = arith.constant dense<0.000000e+00> : vector<64x128xf32>
    %6 = tpu.matmul %3, %5, %cst {dimension_numbers = #tpu.dot_dimension_numbers<[1], [0], [0], [1], [0, 0, 1, 1], [], []>} : vector<64x32xf32>, vector<32x128xf32>, vector<64x128xf32> -> vector<64x128xf32>
    %7 = arith.addf %6, %2 : vector<64x128xf32>
    %c0_6 = arith.constant 0 : index
    %c0_7 = arith.constant 0 : index
    %c0_8 = arith.constant 0 : index
    %8 = vector.load %arg8[%c0_6, %c0_7, %c0_8] : memref<8x64x128xf32, #tpu.memory_space<vmem>>, vector<1x64x128xf32>
    %9 = vector.shape_cast %8 : vector<1x64x128xf32> to vector<64x128xf32>
    %10 = vector.shape_cast %7 : vector<64x128xf32> to vector<1x64x128xf32>
    tpu.vector_store %arg8[%c0_6, %c0_7, %c0_8], %10 {strides = array<i32>} : memref<8x64x128xf32, #tpu.memory_space<vmem>>, vector<1x64x128xf32>,
    %c0_9 = arith.constant 0 : index
    %c0_10 = arith.constant 0 : index
    %11 = vector.load %arg2[%c0_9, %c0_10] : memref<64x32xf32, #tpu.memory_space<vmem>>, vector<64x32xf32>
    %c1 = arith.constant 1 : index
    %c0_11 = arith.constant 0 : index
    %c0_12 = arith.constant 0 : index
    %12 = vector.load %arg1[%c1, %c0_11, %c0_12] : memref<8x32x128xf32, #tpu.memory_space<vmem>>, vector<1x32x128xf32>
    %13 = vector.shape_cast %12 : vector<1x32x128xf32> to vector<32x128xf32>
    %cst_13 = arith.constant dense<0.000000e+00> : vector<64x128xf32>
    %14 = tpu.matmul %11, %13, %cst_13 {dimension_numbers = #tpu.dot_dimension_numbers<[1], [0], [0], [1], [0, 0, 1, 1], [], []>} : vector<64x32xf32>, vector<32x128xf32>, vector<64x128xf32> -> vector<64x128xf32>
    %15 = arith.addf %14, %2 : vector<64x128xf32>
    %c1_14 = arith.constant 1 : index
    %c0_15 = arith.constant 0 : index
    %c0_16 = arith.constant 0 : index
    %16 = vector.load %arg8[%c1_14, %c0_15, %c0_16] : memref<8x64x128xf32, #tpu.memory_space<vmem>>, vector<1x64x128xf32>
    %17 = vector.shape_cast %16 : vector<1x64x128xf32> to vector<64x128xf32>
    %18 = vector.shape_cast %15 : vector<64x128xf32> to vector<1x64x128xf32>
    tpu.vector_store %arg8[%c1_14, %c0_15, %c0_16], %18 {strides = array<i32>} : memref<8x64x128xf32, #tpu.memory_space<vmem>>, vector<1x64x128xf32>,
    %c0_17 = arith.constant 0 : index
    %c0_18 = arith.constant 0 : index
    %19 = vector.load %arg2[%c0_17, %c0_18] : memref<64x32xf32, #tpu.memory_space<vmem>>, vector<64x32xf32>
    %c2 = arith.constant 2 : index
    %c0_19 = arith.constant 0 : index
    %c0_20 = arith.constant 0 : index
    %20 = vector.load %arg1[%c2, %c0_19, %c0_20] : memref<8x32x128xf32, #tpu.memory_space<vmem>>, vector<1x32x128xf32>
    %21 = vector.shape_cast %20 : vector<1x32x128xf32> to vector<32x128xf32>
    %cst_21 = arith.constant dense<0.000000e+00> : vector<64x128xf32>
    %22 = tpu.matmul %19, %21, %cst_21 {dimension_numbers = #tpu.dot_dimension_numbers<[1], [0], [0], [1], [0, 0, 1, 1], [], []>} : vector<64x32xf32>, vector<32x128xf32>, vector<64x128xf32> -> vector<64x128xf32>
    %23 = arith.addf %22, %2 : vector<64x128xf32>
    %c2_22 = arith.constant 2 : index
    %c0_23 = arith.constant 0 : index
    %c0_24 = arith.constant 0 : index
    %24 = vector.load %arg8[%c2_22, %c0_23, %c0_24] : memref<8x64x128xf32, #tpu.memory_space<vmem>>, vector<1x64x128xf32>
    %25 = vector.shape_cast %24 : vector<1x64x128xf32> to vector<64x128xf32>
    %26 = vector.shape_cast %23 : vector<64x128xf32> to vector<1x64x128xf32>
    tpu.vector_store %arg8[%c2_22, %c0_23, %c0_24], %26 {strides = array<i32>} : memref<8x64x128xf32, #tpu.memory_space<vmem>>, vector<1x64x128xf32>,
    %c0_25 = arith.constant 0 : index
    %c0_26 = arith.constant 0 : index
    %27 = vector.load %arg2[%c0_25, %c0_26] : memref<64x32xf32, #tpu.memory_space<vmem>>, vector<64x32xf32>
    %c3 = arith.constant 3 : index
    %c0_27 = arith.constant 0 : index
    %c0_28 = arith.constant 0 : index
    %28 = vector.load %arg1[%c3, %c0_27, %c0_28] : memref<8x32x128xf32, #tpu.memory_space<vmem>>, vector<1x32x128xf32>
    %29 = vector.shape_cast %28 : vector<1x32x128xf32> to vector<32x128xf32>
    %cst_29 = arith.constant dense<0.000000e+00> : vector<64x128xf32>
    %30 = tpu.matmul %27, %29, %cst_29 {dimension_numbers = #tpu.dot_dimension_numbers<[1], [0], [0], [1], [0, 0, 1, 1], [], []>} : vector<64x32xf32>, vector<32x128xf32>, vector<64x128xf32> -> vector<64x128xf32>
    %31 = arith.addf %30, %2 : vector<64x128xf32>
    %c3_30 = arith.constant 3 : index
    %c0_31 = arith.constant 0 : index
    %c0_32 = arith.constant 0 : index
    %32 = vector.load %arg8[%c3_30, %c0_31, %c0_32] : memref<8x64x128xf32, #tpu.memory_space<vmem>>, vector<1x64x128xf32>
    %33 = vector.shape_cast %32 : vector<1x64x128xf32> to vector<64x128xf32>
    %34 = vector.shape_cast %31 : vector<64x128xf32> to vector<1x64x128xf32>
    tpu.vector_store %arg8[%c3_30, %c0_31, %c0_32], %34 {strides = array<i32>} : memref<8x64x128xf32, #tpu.memory_space<vmem>>, vector<1x64x128xf32>,
    %c0_33 = arith.constant 0 : index
    %c0_34 = arith.constant 0 : index
    %35 = vector.load %arg2[%c0_33, %c0_34] : memref<64x32xf32, #tpu.memory_space<vmem>>, vector<64x32xf32>
    %c4 = arith.constant 4 : index
    %c0_35 = arith.constant 0 : index
    %c0_36 = arith.constant 0 : index
    %36 = vector.load %arg1[%c4, %c0_35, %c0_36] : memref<8x32x128xf32, #tpu.memory_space<vmem>>, vector<1x32x128xf32>
    %37 = vector.shape_cast %36 : vector<1x32x128xf32> to vector<32x128xf32>
    %cst_37 = arith.constant dense<0.000000e+00> : vector<64x128xf32>
    %38 = tpu.matmul %35, %37, %cst_37 {dimension_numbers = #tpu.dot_dimension_numbers<[1], [0], [0], [1], [0, 0, 1, 1], [], []>} : vector<64x32xf32>, vector<32x128xf32>, vector<64x128xf32> -> vector<64x128xf32>
    %39 = arith.addf %38, %2 : vector<64x128xf32>
    %c4_38 = arith.constant 4 : index
    %c0_39 = arith.constant 0 : index
    %c0_40 = arith.constant 0 : index
    %40 = vector.load %arg8[%c4_38, %c0_39, %c0_40] : memref<8x64x128xf32, #tpu.memory_space<vmem>>, vector<1x64x128xf32>
    %41 = vector.shape_cast %40 : vector<1x64x128xf32> to vector<64x128xf32>
    %42 = vector.shape_cast %39 : vector<64x128xf32> to vector<1x64x128xf32>
    tpu.vector_store %arg8[%c4_38, %c0_39, %c0_40], %42 {strides = array<i32>} : memref<8x64x128xf32, #tpu.memory_space<vmem>>, vector<1x64x128xf32>,
    %c0_41 = arith.constant 0 : index
    %c0_42 = arith.constant 0 : index
    %43 = vector.load %arg2[%c0_41, %c0_42] : memref<64x32xf32, #tpu.memory_space<vmem>>, vector<64x32xf32>
    %c5 = arith.constant 5 : index
    %c0_43 = arith.constant 0 : index
    %c0_44 = arith.constant 0 : index
    %44 = vector.load %arg1[%c5, %c0_43, %c0_44] : memref<8x32x128xf32, #tpu.memory_space<vmem>>, vector<1x32x128xf32>
    %45 = vector.shape_cast %44 : vector<1x32x128xf32> to vector<32x128xf32>
    %cst_45 = arith.constant dense<0.000000e+00> : vector<64x128xf32>
    %46 = tpu.matmul %43, %45, %cst_45 {dimension_numbers = #tpu.dot_dimension_numbers<[1], [0], [0], [1], [0, 0, 1, 1], [], []>} : vector<64x32xf32>, vector<32x128xf32>, vector<64x128xf32> -> vector<64x128xf32>
    %47 = arith.addf %46, %2 : vector<64x128xf32>
    %c5_46 = arith.constant 5 : index
    %c0_47 = arith.constant 0 : index
    %c0_48 = arith.constant 0 : index
    %48 = vector.load %arg8[%c5_46, %c0_47, %c0_48] : memref<8x64x128xf32, #tpu.memory_space<vmem>>, vector<1x64x128xf32>
    %49 = vector.shape_cast %48 : vector<1x64x128xf32> to vector<64x128xf32>
    %50 = vector.shape_cast %47 : vector<64x128xf32> to vector<1x64x128xf32>
    tpu.vector_store %arg8[%c5_46, %c0_47, %c0_48], %50 {strides = array<i32>} : memref<8x64x128xf32, #tpu.memory_space<vmem>>, vector<1x64x128xf32>,
    %c0_49 = arith.constant 0 : index
    %c0_50 = arith.constant 0 : index
    %51 = vector.load %arg2[%c0_49, %c0_50] : memref<64x32xf32, #tpu.memory_space<vmem>>, vector<64x32xf32>
    %c6 = arith.constant 6 : index
    %c0_51 = arith.constant 0 : index
    %c0_52 = arith.constant 0 : index
    %52 = vector.load %arg1[%c6, %c0_51, %c0_52] : memref<8x32x128xf32, #tpu.memory_space<vmem>>, vector<1x32x128xf32>
    %53 = vector.shape_cast %52 : vector<1x32x128xf32> to vector<32x128xf32>
    %cst_53 = arith.constant dense<0.000000e+00> : vector<64x128xf32>
    %54 = tpu.matmul %51, %53, %cst_53 {dimension_numbers = #tpu.dot_dimension_numbers<[1], [0], [0], [1], [0, 0, 1, 1], [], []>} : vector<64x32xf32>, vector<32x128xf32>, vector<64x128xf32> -> vector<64x128xf32>
    %55 = arith.addf %54, %2 : vector<64x128xf32>
    %c6_54 = arith.constant 6 : index
    %c0_55 = arith.constant 0 : index
    %c0_56 = arith.constant 0 : index
    %56 = vector.load %arg8[%c6_54, %c0_55, %c0_56] : memref<8x64x128xf32, #tpu.memory_space<vmem>>, vector<1x64x128xf32>
    %57 = vector.shape_cast %56 : vector<1x64x128xf32> to vector<64x128xf32>
    %58 = vector.shape_cast %55 : vector<64x128xf32> to vector<1x64x128xf32>
    tpu.vector_store %arg8[%c6_54, %c0_55, %c0_56], %58 {strides = array<i32>} : memref<8x64x128xf32, #tpu.memory_space<vmem>>, vector<1x64x128xf32>,
    %c0_57 = arith.constant 0 : index
    %c0_58 = arith.constant 0 : index
    %59 = vector.load %arg2[%c0_57, %c0_58] : memref<64x32xf32, #tpu.memory_space<vmem>>, vector<64x32xf32>
    %c7 = arith.constant 7 : index
    %c0_59 = arith.constant 0 : index
    %c0_60 = arith.constant 0 : index
    %60 = vector.load %arg1[%c7, %c0_59, %c0_60] : memref<8x32x128xf32, #tpu.memory_space<vmem>>, vector<1x32x128xf32>
    %61 = vector.shape_cast %60 : vector<1x32x128xf32> to vector<32x128xf32>
    %cst_61 = arith.constant dense<0.000000e+00> : vector<64x128xf32>
    %62 = tpu.matmul %59, %61, %cst_61 {dimension_numbers = #tpu.dot_dimension_numbers<[1], [0], [0], [1], [0, 0, 1, 1], [], []>} : vector<64x32xf32>, vector<32x128xf32>, vector<64x128xf32> -> vector<64x128xf32>
    %63 = arith.addf %62, %2 : vector<64x128xf32>
    %c7_62 = arith.constant 7 : index
    %c0_63 = arith.constant 0 : index
    %c0_64 = arith.constant 0 : index
    %64 = vector.load %arg8[%c7_62, %c0_63, %c0_64] : memref<8x64x128xf32, #tpu.memory_space<vmem>>, vector<1x64x128xf32>
    %65 = vector.shape_cast %64 : vector<1x64x128xf32> to vector<64x128xf32>
    %66 = vector.shape_cast %63 : vector<64x128xf32> to vector<1x64x128xf32>
    tpu.vector_store %arg8[%c7_62, %c0_63, %c0_64], %66 {strides = array<i32>} : memref<8x64x128xf32, #tpu.memory_space<vmem>>, vector<1x64x128xf32>,
    %c0_65 = arith.constant 0 : index
    %c0_66 = arith.constant 0 : index
    %67 = vector.load %arg5[%c0_65, %c0_66] : memref<16x1xf32, #tpu.memory_space<vmem>>, vector<16x1xf32>
    %cst_67 = arith.constant 0.000000e+00 : f32
    %68 = vector.broadcast %cst_67 : f32 to vector<16x128xf32>
    %cst_68 = arith.constant 0.000000e+00 : f32
    %69 = vector.broadcast %cst_68 : f32 to vector<16x128xf32>
    %c0_69 = arith.constant 0 : index
    %c0_70 = arith.constant 0 : index
    %c0_71 = arith.constant 0 : index
    %70 = vector.load %arg8[%c0_69, %c0_70, %c0_71] : memref<8x64x128xf32, #tpu.memory_space<vmem>>, vector<1x64x128xf32>
    %71 = vector.shape_cast %70 : vector<1x64x128xf32> to vector<64x128xf32>
    %c0_72 = arith.constant 0 : index
    %c0_73 = arith.constant 0 : index
    %72 = vector.load %arg3[%c0_72, %c0_73] : memref<64x16xf32, #tpu.memory_space<vmem>>, vector<64x16xf32>
    %cst_74 = arith.constant dense<0.000000e+00> : vector<64x128xf32>
    %73 = tpu.matmul %72, %68, %cst_74 {dimension_numbers = #tpu.dot_dimension_numbers<[1], [0], [0], [1], [0, 0, 1, 1], [], []>} : vector<64x16xf32>, vector<16x128xf32>, vector<64x128xf32> -> vector<64x128xf32>
    %74 = arith.addf %71, %73 : vector<64x128xf32>
    %75 = vector.extract_strided_slice %74 {offsets = [0, 0], sizes = [16, 128], strides = [1, 1]} : vector<64x128xf32> to vector<16x128xf32>
    %cst_75 = arith.constant 5.000000e-01 : f32
    %76 = vector.broadcast %cst_75 : f32 to vector<16x128xf32>
    %77 = arith.mulf %76, %75 : vector<16x128xf32>
    %78 = math.tanh %77 : vector<16x128xf32>
    %cst_76 = arith.constant 1.000000e+00 : f32
    %79 = vector.broadcast %cst_76 : f32 to vector<16x128xf32>
    %80 = arith.addf %78, %79 : vector<16x128xf32>
    %cst_77 = arith.constant 5.000000e-01 : f32
    %81 = vector.broadcast %cst_77 : f32 to vector<16x128xf32>
    %82 = arith.mulf %81, %80 : vector<16x128xf32>
    %83 = vector.extract_strided_slice %74 {offsets = [16, 0], sizes = [16, 128], strides = [1, 1]} : vector<64x128xf32> to vector<16x128xf32>
    %cst_78 = arith.constant 5.000000e-01 : f32
    %84 = vector.broadcast %cst_78 : f32 to vector<16x128xf32>
    %85 = arith.mulf %84, %83 : vector<16x128xf32>
    %86 = math.tanh %85 : vector<16x128xf32>
    %cst_79 = arith.constant 1.000000e+00 : f32
    %87 = vector.broadcast %cst_79 : f32 to vector<16x128xf32>
    %88 = arith.addf %86, %87 : vector<16x128xf32>
    %cst_80 = arith.constant 5.000000e-01 : f32
    %89 = vector.broadcast %cst_80 : f32 to vector<16x128xf32>
    %90 = arith.mulf %89, %88 : vector<16x128xf32>
    %91 = vector.extract_strided_slice %74 {offsets = [32, 0], sizes = [16, 128], strides = [1, 1]} : vector<64x128xf32> to vector<16x128xf32>
    %92 = math.tanh %91 : vector<16x128xf32>
    %93 = vector.extract_strided_slice %74 {offsets = [48, 0], sizes = [16, 128], strides = [1, 1]} : vector<64x128xf32> to vector<16x128xf32>
    %cst_81 = arith.constant 5.000000e-01 : f32
    %94 = vector.broadcast %cst_81 : f32 to vector<16x128xf32>
    %95 = arith.mulf %94, %93 : vector<16x128xf32>
    %96 = math.tanh %95 : vector<16x128xf32>
    %cst_82 = arith.constant 1.000000e+00 : f32
    %97 = vector.broadcast %cst_82 : f32 to vector<16x128xf32>
    %98 = arith.addf %96, %97 : vector<16x128xf32>
    %cst_83 = arith.constant 5.000000e-01 : f32
    %99 = vector.broadcast %cst_83 : f32 to vector<16x128xf32>
    %100 = arith.mulf %99, %98 : vector<16x128xf32>
    %101 = arith.mulf %90, %69 : vector<16x128xf32>
    %102 = arith.mulf %82, %92 : vector<16x128xf32>
    %103 = arith.addf %101, %102 : vector<16x128xf32>
    %104 = math.tanh %103 : vector<16x128xf32>
    %105 = arith.mulf %100, %104 : vector<16x128xf32>
    %106 = vector.broadcast %67 : vector<16x1xf32> to vector<16x128xf32>
    %107 = arith.mulf %105, %106 : vector<16x128xf32>
    %cst_84 = arith.constant dense<0.000000e+00> : vector<128xf32>
    %108 = vector.multi_reduction <add>, %107, %cst_84 [0] : vector<16x128xf32> to vector<128xf32>
    %109 = vector.shape_cast %108 : vector<128xf32> to vector<1x128xf32>
    %c1_85 = arith.constant 1 : index
    %c0_86 = arith.constant 0 : index
    %c0_87 = arith.constant 0 : index
    %110 = vector.load %arg8[%c1_85, %c0_86, %c0_87] : memref<8x64x128xf32, #tpu.memory_space<vmem>>, vector<1x64x128xf32>
    %111 = vector.shape_cast %110 : vector<1x64x128xf32> to vector<64x128xf32>
    %c0_88 = arith.constant 0 : index
    %c0_89 = arith.constant 0 : index
    %112 = vector.load %arg3[%c0_88, %c0_89] : memref<64x16xf32, #tpu.memory_space<vmem>>, vector<64x16xf32>
    %cst_90 = arith.constant dense<0.000000e+00> : vector<64x128xf32>
    %113 = tpu.matmul %112, %105, %cst_90 {dimension_numbers = #tpu.dot_dimension_numbers<[1], [0], [0], [1], [0, 0, 1, 1], [], []>} : vector<64x16xf32>, vector<16x128xf32>, vector<64x128xf32> -> vector<64x128xf32>
    %114 = arith.addf %111, %113 : vector<64x128xf32>
    %115 = vector.extract_strided_slice %114 {offsets = [0, 0], sizes = [16, 128], strides = [1, 1]} : vector<64x128xf32> to vector<16x128xf32>
    %cst_91 = arith.constant 5.000000e-01 : f32
    %116 = vector.broadcast %cst_91 : f32 to vector<16x128xf32>
    %117 = arith.mulf %116, %115 : vector<16x128xf32>
    %118 = math.tanh %117 : vector<16x128xf32>
    %cst_92 = arith.constant 1.000000e+00 : f32
    %119 = vector.broadcast %cst_92 : f32 to vector<16x128xf32>
    %120 = arith.addf %118, %119 : vector<16x128xf32>
    %cst_93 = arith.constant 5.000000e-01 : f32
    %121 = vector.broadcast %cst_93 : f32 to vector<16x128xf32>
    %122 = arith.mulf %121, %120 : vector<16x128xf32>
    %123 = vector.extract_strided_slice %114 {offsets = [16, 0], sizes = [16, 128], strides = [1, 1]} : vector<64x128xf32> to vector<16x128xf32>
    %cst_94 = arith.constant 5.000000e-01 : f32
    %124 = vector.broadcast %cst_94 : f32 to vector<16x128xf32>
    %125 = arith.mulf %124, %123 : vector<16x128xf32>
    %126 = math.tanh %125 : vector<16x128xf32>
    %cst_95 = arith.constant 1.000000e+00 : f32
    %127 = vector.broadcast %cst_95 : f32 to vector<16x128xf32>
    %128 = arith.addf %126, %127 : vector<16x128xf32>
    %cst_96 = arith.constant 5.000000e-01 : f32
    %129 = vector.broadcast %cst_96 : f32 to vector<16x128xf32>
    %130 = arith.mulf %129, %128 : vector<16x128xf32>
    %131 = vector.extract_strided_slice %114 {offsets = [32, 0], sizes = [16, 128], strides = [1, 1]} : vector<64x128xf32> to vector<16x128xf32>
    %132 = math.tanh %131 : vector<16x128xf32>
    %133 = vector.extract_strided_slice %114 {offsets = [48, 0], sizes = [16, 128], strides = [1, 1]} : vector<64x128xf32> to vector<16x128xf32>
    %cst_97 = arith.constant 5.000000e-01 : f32
    %134 = vector.broadcast %cst_97 : f32 to vector<16x128xf32>
    %135 = arith.mulf %134, %133 : vector<16x128xf32>
    %136 = math.tanh %135 : vector<16x128xf32>
    %cst_98 = arith.constant 1.000000e+00 : f32
    %137 = vector.broadcast %cst_98 : f32 to vector<16x128xf32>
    %138 = arith.addf %136, %137 : vector<16x128xf32>
    %cst_99 = arith.constant 5.000000e-01 : f32
    %139 = vector.broadcast %cst_99 : f32 to vector<16x128xf32>
    %140 = arith.mulf %139, %138 : vector<16x128xf32>
    %141 = arith.mulf %130, %103 : vector<16x128xf32>
    %142 = arith.mulf %122, %132 : vector<16x128xf32>
    %143 = arith.addf %141, %142 : vector<16x128xf32>
    %144 = math.tanh %143 : vector<16x128xf32>
    %145 = arith.mulf %140, %144 : vector<16x128xf32>
    %146 = vector.broadcast %67 : vector<16x1xf32> to vector<16x128xf32>
    %147 = arith.mulf %145, %146 : vector<16x128xf32>
    %cst_100 = arith.constant dense<0.000000e+00> : vector<128xf32>
    %148 = vector.multi_reduction <add>, %147, %cst_100 [0] : vector<16x128xf32> to vector<128xf32>
    %149 = vector.shape_cast %148 : vector<128xf32> to vector<1x128xf32>
    %c2_101 = arith.constant 2 : index
    %c0_102 = arith.constant 0 : index
    %c0_103 = arith.constant 0 : index
    %150 = vector.load %arg8[%c2_101, %c0_102, %c0_103] : memref<8x64x128xf32, #tpu.memory_space<vmem>>, vector<1x64x128xf32>
    %151 = vector.shape_cast %150 : vector<1x64x128xf32> to vector<64x128xf32>
    %c0_104 = arith.constant 0 : index
    %c0_105 = arith.constant 0 : index
    %152 = vector.load %arg3[%c0_104, %c0_105] : memref<64x16xf32, #tpu.memory_space<vmem>>, vector<64x16xf32>
    %cst_106 = arith.constant dense<0.000000e+00> : vector<64x128xf32>
    %153 = tpu.matmul %152, %145, %cst_106 {dimension_numbers = #tpu.dot_dimension_numbers<[1], [0], [0], [1], [0, 0, 1, 1], [], []>} : vector<64x16xf32>, vector<16x128xf32>, vector<64x128xf32> -> vector<64x128xf32>
    %154 = arith.addf %151, %153 : vector<64x128xf32>
    %155 = vector.extract_strided_slice %154 {offsets = [0, 0], sizes = [16, 128], strides = [1, 1]} : vector<64x128xf32> to vector<16x128xf32>
    %cst_107 = arith.constant 5.000000e-01 : f32
    %156 = vector.broadcast %cst_107 : f32 to vector<16x128xf32>
    %157 = arith.mulf %156, %155 : vector<16x128xf32>
    %158 = math.tanh %157 : vector<16x128xf32>
    %cst_108 = arith.constant 1.000000e+00 : f32
    %159 = vector.broadcast %cst_108 : f32 to vector<16x128xf32>
    %160 = arith.addf %158, %159 : vector<16x128xf32>
    %cst_109 = arith.constant 5.000000e-01 : f32
    %161 = vector.broadcast %cst_109 : f32 to vector<16x128xf32>
    %162 = arith.mulf %161, %160 : vector<16x128xf32>
    %163 = vector.extract_strided_slice %154 {offsets = [16, 0], sizes = [16, 128], strides = [1, 1]} : vector<64x128xf32> to vector<16x128xf32>
    %cst_110 = arith.constant 5.000000e-01 : f32
    %164 = vector.broadcast %cst_110 : f32 to vector<16x128xf32>
    %165 = arith.mulf %164, %163 : vector<16x128xf32>
    %166 = math.tanh %165 : vector<16x128xf32>
    %cst_111 = arith.constant 1.000000e+00 : f32
    %167 = vector.broadcast %cst_111 : f32 to vector<16x128xf32>
    %168 = arith.addf %166, %167 : vector<16x128xf32>
    %cst_112 = arith.constant 5.000000e-01 : f32
    %169 = vector.broadcast %cst_112 : f32 to vector<16x128xf32>
    %170 = arith.mulf %169, %168 : vector<16x128xf32>
    %171 = vector.extract_strided_slice %154 {offsets = [32, 0], sizes = [16, 128], strides = [1, 1]} : vector<64x128xf32> to vector<16x128xf32>
    %172 = math.tanh %171 : vector<16x128xf32>
    %173 = vector.extract_strided_slice %154 {offsets = [48, 0], sizes = [16, 128], strides = [1, 1]} : vector<64x128xf32> to vector<16x128xf32>
    %cst_113 = arith.constant 5.000000e-01 : f32
    %174 = vector.broadcast %cst_113 : f32 to vector<16x128xf32>
    %175 = arith.mulf %174, %173 : vector<16x128xf32>
    %176 = math.tanh %175 : vector<16x128xf32>
    %cst_114 = arith.constant 1.000000e+00 : f32
    %177 = vector.broadcast %cst_114 : f32 to vector<16x128xf32>
    %178 = arith.addf %176, %177 : vector<16x128xf32>
    %cst_115 = arith.constant 5.000000e-01 : f32
    %179 = vector.broadcast %cst_115 : f32 to vector<16x128xf32>
    %180 = arith.mulf %179, %178 : vector<16x128xf32>
    %181 = arith.mulf %170, %143 : vector<16x128xf32>
    %182 = arith.mulf %162, %172 : vector<16x128xf32>
    %183 = arith.addf %181, %182 : vector<16x128xf32>
    %184 = math.tanh %183 : vector<16x128xf32>
    %185 = arith.mulf %180, %184 : vector<16x128xf32>
    %186 = vector.broadcast %67 : vector<16x1xf32> to vector<16x128xf32>
    %187 = arith.mulf %185, %186 : vector<16x128xf32>
    %cst_116 = arith.constant dense<0.000000e+00> : vector<128xf32>
    %188 = vector.multi_reduction <add>, %187, %cst_116 [0] : vector<16x128xf32> to vector<128xf32>
    %189 = vector.shape_cast %188 : vector<128xf32> to vector<1x128xf32>
    %c3_117 = arith.constant 3 : index
    %c0_118 = arith.constant 0 : index
    %c0_119 = arith.constant 0 : index
    %190 = vector.load %arg8[%c3_117, %c0_118, %c0_119] : memref<8x64x128xf32, #tpu.memory_space<vmem>>, vector<1x64x128xf32>
    %191 = vector.shape_cast %190 : vector<1x64x128xf32> to vector<64x128xf32>
    %c0_120 = arith.constant 0 : index
    %c0_121 = arith.constant 0 : index
    %192 = vector.load %arg3[%c0_120, %c0_121] : memref<64x16xf32, #tpu.memory_space<vmem>>, vector<64x16xf32>
    %cst_122 = arith.constant dense<0.000000e+00> : vector<64x128xf32>
    %193 = tpu.matmul %192, %185, %cst_122 {dimension_numbers = #tpu.dot_dimension_numbers<[1], [0], [0], [1], [0, 0, 1, 1], [], []>} : vector<64x16xf32>, vector<16x128xf32>, vector<64x128xf32> -> vector<64x128xf32>
    %194 = arith.addf %191, %193 : vector<64x128xf32>
    %195 = vector.extract_strided_slice %194 {offsets = [0, 0], sizes = [16, 128], strides = [1, 1]} : vector<64x128xf32> to vector<16x128xf32>
    %cst_123 = arith.constant 5.000000e-01 : f32
    %196 = vector.broadcast %cst_123 : f32 to vector<16x128xf32>
    %197 = arith.mulf %196, %195 : vector<16x128xf32>
    %198 = math.tanh %197 : vector<16x128xf32>
    %cst_124 = arith.constant 1.000000e+00 : f32
    %199 = vector.broadcast %cst_124 : f32 to vector<16x128xf32>
    %200 = arith.addf %198, %199 : vector<16x128xf32>
    %cst_125 = arith.constant 5.000000e-01 : f32
    %201 = vector.broadcast %cst_125 : f32 to vector<16x128xf32>
    %202 = arith.mulf %201, %200 : vector<16x128xf32>
    %203 = vector.extract_strided_slice %194 {offsets = [16, 0], sizes = [16, 128], strides = [1, 1]} : vector<64x128xf32> to vector<16x128xf32>
    %cst_126 = arith.constant 5.000000e-01 : f32
    %204 = vector.broadcast %cst_126 : f32 to vector<16x128xf32>
    %205 = arith.mulf %204, %203 : vector<16x128xf32>
    %206 = math.tanh %205 : vector<16x128xf32>
    %cst_127 = arith.constant 1.000000e+00 : f32
    %207 = vector.broadcast %cst_127 : f32 to vector<16x128xf32>
    %208 = arith.addf %206, %207 : vector<16x128xf32>
    %cst_128 = arith.constant 5.000000e-01 : f32
    %209 = vector.broadcast %cst_128 : f32 to vector<16x128xf32>
    %210 = arith.mulf %209, %208 : vector<16x128xf32>
    %211 = vector.extract_strided_slice %194 {offsets = [32, 0], sizes = [16, 128], strides = [1, 1]} : vector<64x128xf32> to vector<16x128xf32>
    %212 = math.tanh %211 : vector<16x128xf32>
    %213 = vector.extract_strided_slice %194 {offsets = [48, 0], sizes = [16, 128], strides = [1, 1]} : vector<64x128xf32> to vector<16x128xf32>
    %cst_129 = arith.constant 5.000000e-01 : f32
    %214 = vector.broadcast %cst_129 : f32 to vector<16x128xf32>
    %215 = arith.mulf %214, %213 : vector<16x128xf32>
    %216 = math.tanh %215 : vector<16x128xf32>
    %cst_130 = arith.constant 1.000000e+00 : f32
    %217 = vector.broadcast %cst_130 : f32 to vector<16x128xf32>
    %218 = arith.addf %216, %217 : vector<16x128xf32>
    %cst_131 = arith.constant 5.000000e-01 : f32
    %219 = vector.broadcast %cst_131 : f32 to vector<16x128xf32>
    %220 = arith.mulf %219, %218 : vector<16x128xf32>
    %221 = arith.mulf %210, %183 : vector<16x128xf32>
    %222 = arith.mulf %202, %212 : vector<16x128xf32>
    %223 = arith.addf %221, %222 : vector<16x128xf32>
    %224 = math.tanh %223 : vector<16x128xf32>
    %225 = arith.mulf %220, %224 : vector<16x128xf32>
    %226 = vector.broadcast %67 : vector<16x1xf32> to vector<16x128xf32>
    %227 = arith.mulf %225, %226 : vector<16x128xf32>
    %cst_132 = arith.constant dense<0.000000e+00> : vector<128xf32>
    %228 = vector.multi_reduction <add>, %227, %cst_132 [0] : vector<16x128xf32> to vector<128xf32>
    %229 = vector.shape_cast %228 : vector<128xf32> to vector<1x128xf32>
    %c4_133 = arith.constant 4 : index
    %c0_134 = arith.constant 0 : index
    %c0_135 = arith.constant 0 : index
    %230 = vector.load %arg8[%c4_133, %c0_134, %c0_135] : memref<8x64x128xf32, #tpu.memory_space<vmem>>, vector<1x64x128xf32>
    %231 = vector.shape_cast %230 : vector<1x64x128xf32> to vector<64x128xf32>
    %c0_136 = arith.constant 0 : index
    %c0_137 = arith.constant 0 : index
    %232 = vector.load %arg3[%c0_136, %c0_137] : memref<64x16xf32, #tpu.memory_space<vmem>>, vector<64x16xf32>
    %cst_138 = arith.constant dense<0.000000e+00> : vector<64x128xf32>
    %233 = tpu.matmul %232, %225, %cst_138 {dimension_numbers = #tpu.dot_dimension_numbers<[1], [0], [0], [1], [0, 0, 1, 1], [], []>} : vector<64x16xf32>, vector<16x128xf32>, vector<64x128xf32> -> vector<64x128xf32>
    %234 = arith.addf %231, %233 : vector<64x128xf32>
    %235 = vector.extract_strided_slice %234 {offsets = [0, 0], sizes = [16, 128], strides = [1, 1]} : vector<64x128xf32> to vector<16x128xf32>
    %cst_139 = arith.constant 5.000000e-01 : f32
    %236 = vector.broadcast %cst_139 : f32 to vector<16x128xf32>
    %237 = arith.mulf %236, %235 : vector<16x128xf32>
    %238 = math.tanh %237 : vector<16x128xf32>
    %cst_140 = arith.constant 1.000000e+00 : f32
    %239 = vector.broadcast %cst_140 : f32 to vector<16x128xf32>
    %240 = arith.addf %238, %239 : vector<16x128xf32>
    %cst_141 = arith.constant 5.000000e-01 : f32
    %241 = vector.broadcast %cst_141 : f32 to vector<16x128xf32>
    %242 = arith.mulf %241, %240 : vector<16x128xf32>
    %243 = vector.extract_strided_slice %234 {offsets = [16, 0], sizes = [16, 128], strides = [1, 1]} : vector<64x128xf32> to vector<16x128xf32>
    %cst_142 = arith.constant 5.000000e-01 : f32
    %244 = vector.broadcast %cst_142 : f32 to vector<16x128xf32>
    %245 = arith.mulf %244, %243 : vector<16x128xf32>
    %246 = math.tanh %245 : vector<16x128xf32>
    %cst_143 = arith.constant 1.000000e+00 : f32
    %247 = vector.broadcast %cst_143 : f32 to vector<16x128xf32>
    %248 = arith.addf %246, %247 : vector<16x128xf32>
    %cst_144 = arith.constant 5.000000e-01 : f32
    %249 = vector.broadcast %cst_144 : f32 to vector<16x128xf32>
    %250 = arith.mulf %249, %248 : vector<16x128xf32>
    %251 = vector.extract_strided_slice %234 {offsets = [32, 0], sizes = [16, 128], strides = [1, 1]} : vector<64x128xf32> to vector<16x128xf32>
    %252 = math.tanh %251 : vector<16x128xf32>
    %253 = vector.extract_strided_slice %234 {offsets = [48, 0], sizes = [16, 128], strides = [1, 1]} : vector<64x128xf32> to vector<16x128xf32>
    %cst_145 = arith.constant 5.000000e-01 : f32
    %254 = vector.broadcast %cst_145 : f32 to vector<16x128xf32>
    %255 = arith.mulf %254, %253 : vector<16x128xf32>
    %256 = math.tanh %255 : vector<16x128xf32>
    %cst_146 = arith.constant 1.000000e+00 : f32
    %257 = vector.broadcast %cst_146 : f32 to vector<16x128xf32>
    %258 = arith.addf %256, %257 : vector<16x128xf32>
    %cst_147 = arith.constant 5.000000e-01 : f32
    %259 = vector.broadcast %cst_147 : f32 to vector<16x128xf32>
    %260 = arith.mulf %259, %258 : vector<16x128xf32>
    %261 = arith.mulf %250, %223 : vector<16x128xf32>
    %262 = arith.mulf %242, %252 : vector<16x128xf32>
    %263 = arith.addf %261, %262 : vector<16x128xf32>
    %264 = math.tanh %263 : vector<16x128xf32>
    %265 = arith.mulf %260, %264 : vector<16x128xf32>
    %266 = vector.broadcast %67 : vector<16x1xf32> to vector<16x128xf32>
    %267 = arith.mulf %265, %266 : vector<16x128xf32>
    %cst_148 = arith.constant dense<0.000000e+00> : vector<128xf32>
    %268 = vector.multi_reduction <add>, %267, %cst_148 [0] : vector<16x128xf32> to vector<128xf32>
    %269 = vector.shape_cast %268 : vector<128xf32> to vector<1x128xf32>
    %c5_149 = arith.constant 5 : index
    %c0_150 = arith.constant 0 : index
    %c0_151 = arith.constant 0 : index
    %270 = vector.load %arg8[%c5_149, %c0_150, %c0_151] : memref<8x64x128xf32, #tpu.memory_space<vmem>>, vector<1x64x128xf32>
    %271 = vector.shape_cast %270 : vector<1x64x128xf32> to vector<64x128xf32>
    %c0_152 = arith.constant 0 : index
    %c0_153 = arith.constant 0 : index
    %272 = vector.load %arg3[%c0_152, %c0_153] : memref<64x16xf32, #tpu.memory_space<vmem>>, vector<64x16xf32>
    %cst_154 = arith.constant dense<0.000000e+00> : vector<64x128xf32>
    %273 = tpu.matmul %272, %265, %cst_154 {dimension_numbers = #tpu.dot_dimension_numbers<[1], [0], [0], [1], [0, 0, 1, 1], [], []>} : vector<64x16xf32>, vector<16x128xf32>, vector<64x128xf32> -> vector<64x128xf32>
    %274 = arith.addf %271, %273 : vector<64x128xf32>
    %275 = vector.extract_strided_slice %274 {offsets = [0, 0], sizes = [16, 128], strides = [1, 1]} : vector<64x128xf32> to vector<16x128xf32>
    %cst_155 = arith.constant 5.000000e-01 : f32
    %276 = vector.broadcast %cst_155 : f32 to vector<16x128xf32>
    %277 = arith.mulf %276, %275 : vector<16x128xf32>
    %278 = math.tanh %277 : vector<16x128xf32>
    %cst_156 = arith.constant 1.000000e+00 : f32
    %279 = vector.broadcast %cst_156 : f32 to vector<16x128xf32>
    %280 = arith.addf %278, %279 : vector<16x128xf32>
    %cst_157 = arith.constant 5.000000e-01 : f32
    %281 = vector.broadcast %cst_157 : f32 to vector<16x128xf32>
    %282 = arith.mulf %281, %280 : vector<16x128xf32>
    %283 = vector.extract_strided_slice %274 {offsets = [16, 0], sizes = [16, 128], strides = [1, 1]} : vector<64x128xf32> to vector<16x128xf32>
    %cst_158 = arith.constant 5.000000e-01 : f32
    %284 = vector.broadcast %cst_158 : f32 to vector<16x128xf32>
    %285 = arith.mulf %284, %283 : vector<16x128xf32>
    %286 = math.tanh %285 : vector<16x128xf32>
    %cst_159 = arith.constant 1.000000e+00 : f32
    %287 = vector.broadcast %cst_159 : f32 to vector<16x128xf32>
    %288 = arith.addf %286, %287 : vector<16x128xf32>
    %cst_160 = arith.constant 5.000000e-01 : f32
    %289 = vector.broadcast %cst_160 : f32 to vector<16x128xf32>
    %290 = arith.mulf %289, %288 : vector<16x128xf32>
    %291 = vector.extract_strided_slice %274 {offsets = [32, 0], sizes = [16, 128], strides = [1, 1]} : vector<64x128xf32> to vector<16x128xf32>
    %292 = math.tanh %291 : vector<16x128xf32>
    %293 = vector.extract_strided_slice %274 {offsets = [48, 0], sizes = [16, 128], strides = [1, 1]} : vector<64x128xf32> to vector<16x128xf32>
    %cst_161 = arith.constant 5.000000e-01 : f32
    %294 = vector.broadcast %cst_161 : f32 to vector<16x128xf32>
    %295 = arith.mulf %294, %293 : vector<16x128xf32>
    %296 = math.tanh %295 : vector<16x128xf32>
    %cst_162 = arith.constant 1.000000e+00 : f32
    %297 = vector.broadcast %cst_162 : f32 to vector<16x128xf32>
    %298 = arith.addf %296, %297 : vector<16x128xf32>
    %cst_163 = arith.constant 5.000000e-01 : f32
    %299 = vector.broadcast %cst_163 : f32 to vector<16x128xf32>
    %300 = arith.mulf %299, %298 : vector<16x128xf32>
    %301 = arith.mulf %290, %263 : vector<16x128xf32>
    %302 = arith.mulf %282, %292 : vector<16x128xf32>
    %303 = arith.addf %301, %302 : vector<16x128xf32>
    %304 = math.tanh %303 : vector<16x128xf32>
    %305 = arith.mulf %300, %304 : vector<16x128xf32>
    %306 = vector.broadcast %67 : vector<16x1xf32> to vector<16x128xf32>
    %307 = arith.mulf %305, %306 : vector<16x128xf32>
    %cst_164 = arith.constant dense<0.000000e+00> : vector<128xf32>
    %308 = vector.multi_reduction <add>, %307, %cst_164 [0] : vector<16x128xf32> to vector<128xf32>
    %309 = vector.shape_cast %308 : vector<128xf32> to vector<1x128xf32>
    %c6_165 = arith.constant 6 : index
    %c0_166 = arith.constant 0 : index
    %c0_167 = arith.constant 0 : index
    %310 = vector.load %arg8[%c6_165, %c0_166, %c0_167] : memref<8x64x128xf32, #tpu.memory_space<vmem>>, vector<1x64x128xf32>
    %311 = vector.shape_cast %310 : vector<1x64x128xf32> to vector<64x128xf32>
    %c0_168 = arith.constant 0 : index
    %c0_169 = arith.constant 0 : index
    %312 = vector.load %arg3[%c0_168, %c0_169] : memref<64x16xf32, #tpu.memory_space<vmem>>, vector<64x16xf32>
    %cst_170 = arith.constant dense<0.000000e+00> : vector<64x128xf32>
    %313 = tpu.matmul %312, %305, %cst_170 {dimension_numbers = #tpu.dot_dimension_numbers<[1], [0], [0], [1], [0, 0, 1, 1], [], []>} : vector<64x16xf32>, vector<16x128xf32>, vector<64x128xf32> -> vector<64x128xf32>
    %314 = arith.addf %311, %313 : vector<64x128xf32>
    %315 = vector.extract_strided_slice %314 {offsets = [0, 0], sizes = [16, 128], strides = [1, 1]} : vector<64x128xf32> to vector<16x128xf32>
    %cst_171 = arith.constant 5.000000e-01 : f32
    %316 = vector.broadcast %cst_171 : f32 to vector<16x128xf32>
    %317 = arith.mulf %316, %315 : vector<16x128xf32>
    %318 = math.tanh %317 : vector<16x128xf32>
    %cst_172 = arith.constant 1.000000e+00 : f32
    %319 = vector.broadcast %cst_172 : f32 to vector<16x128xf32>
    %320 = arith.addf %318, %319 : vector<16x128xf32>
    %cst_173 = arith.constant 5.000000e-01 : f32
    %321 = vector.broadcast %cst_173 : f32 to vector<16x128xf32>
    %322 = arith.mulf %321, %320 : vector<16x128xf32>
    %323 = vector.extract_strided_slice %314 {offsets = [16, 0], sizes = [16, 128], strides = [1, 1]} : vector<64x128xf32> to vector<16x128xf32>
    %cst_174 = arith.constant 5.000000e-01 : f32
    %324 = vector.broadcast %cst_174 : f32 to vector<16x128xf32>
    %325 = arith.mulf %324, %323 : vector<16x128xf32>
    %326 = math.tanh %325 : vector<16x128xf32>
    %cst_175 = arith.constant 1.000000e+00 : f32
    %327 = vector.broadcast %cst_175 : f32 to vector<16x128xf32>
    %328 = arith.addf %326, %327 : vector<16x128xf32>
    %cst_176 = arith.constant 5.000000e-01 : f32
    %329 = vector.broadcast %cst_176 : f32 to vector<16x128xf32>
    %330 = arith.mulf %329, %328 : vector<16x128xf32>
    %331 = vector.extract_strided_slice %314 {offsets = [32, 0], sizes = [16, 128], strides = [1, 1]} : vector<64x128xf32> to vector<16x128xf32>
    %332 = math.tanh %331 : vector<16x128xf32>
    %333 = vector.extract_strided_slice %314 {offsets = [48, 0], sizes = [16, 128], strides = [1, 1]} : vector<64x128xf32> to vector<16x128xf32>
    %cst_177 = arith.constant 5.000000e-01 : f32
    %334 = vector.broadcast %cst_177 : f32 to vector<16x128xf32>
    %335 = arith.mulf %334, %333 : vector<16x128xf32>
    %336 = math.tanh %335 : vector<16x128xf32>
    %cst_178 = arith.constant 1.000000e+00 : f32
    %337 = vector.broadcast %cst_178 : f32 to vector<16x128xf32>
    %338 = arith.addf %336, %337 : vector<16x128xf32>
    %cst_179 = arith.constant 5.000000e-01 : f32
    %339 = vector.broadcast %cst_179 : f32 to vector<16x128xf32>
    %340 = arith.mulf %339, %338 : vector<16x128xf32>
    %341 = arith.mulf %330, %303 : vector<16x128xf32>
    %342 = arith.mulf %322, %332 : vector<16x128xf32>
    %343 = arith.addf %341, %342 : vector<16x128xf32>
    %344 = math.tanh %343 : vector<16x128xf32>
    %345 = arith.mulf %340, %344 : vector<16x128xf32>
    %346 = vector.broadcast %67 : vector<16x1xf32> to vector<16x128xf32>
    %347 = arith.mulf %345, %346 : vector<16x128xf32>
    %cst_180 = arith.constant dense<0.000000e+00> : vector<128xf32>
    %348 = vector.multi_reduction <add>, %347, %cst_180 [0] : vector<16x128xf32> to vector<128xf32>
    %349 = vector.shape_cast %348 : vector<128xf32> to vector<1x128xf32>
    %c7_181 = arith.constant 7 : index
    %c0_182 = arith.constant 0 : index
    %c0_183 = arith.constant 0 : index
    %350 = vector.load %arg8[%c7_181, %c0_182, %c0_183] : memref<8x64x128xf32, #tpu.memory_space<vmem>>, vector<1x64x128xf32>
    %351 = vector.shape_cast %350 : vector<1x64x128xf32> to vector<64x128xf32>
    %c0_184 = arith.constant 0 : index
    %c0_185 = arith.constant 0 : index
    %352 = vector.load %arg3[%c0_184, %c0_185] : memref<64x16xf32, #tpu.memory_space<vmem>>, vector<64x16xf32>
    %cst_186 = arith.constant dense<0.000000e+00> : vector<64x128xf32>
    %353 = tpu.matmul %352, %345, %cst_186 {dimension_numbers = #tpu.dot_dimension_numbers<[1], [0], [0], [1], [0, 0, 1, 1], [], []>} : vector<64x16xf32>, vector<16x128xf32>, vector<64x128xf32> -> vector<64x128xf32>
    %354 = arith.addf %351, %353 : vector<64x128xf32>
    %355 = vector.extract_strided_slice %354 {offsets = [0, 0], sizes = [16, 128], strides = [1, 1]} : vector<64x128xf32> to vector<16x128xf32>
    %cst_187 = arith.constant 5.000000e-01 : f32
    %356 = vector.broadcast %cst_187 : f32 to vector<16x128xf32>
    %357 = arith.mulf %356, %355 : vector<16x128xf32>
    %358 = math.tanh %357 : vector<16x128xf32>
    %cst_188 = arith.constant 1.000000e+00 : f32
    %359 = vector.broadcast %cst_188 : f32 to vector<16x128xf32>
    %360 = arith.addf %358, %359 : vector<16x128xf32>
    %cst_189 = arith.constant 5.000000e-01 : f32
    %361 = vector.broadcast %cst_189 : f32 to vector<16x128xf32>
    %362 = arith.mulf %361, %360 : vector<16x128xf32>
    %363 = vector.extract_strided_slice %354 {offsets = [16, 0], sizes = [16, 128], strides = [1, 1]} : vector<64x128xf32> to vector<16x128xf32>
    %cst_190 = arith.constant 5.000000e-01 : f32
    %364 = vector.broadcast %cst_190 : f32 to vector<16x128xf32>
    %365 = arith.mulf %364, %363 : vector<16x128xf32>
    %366 = math.tanh %365 : vector<16x128xf32>
    %cst_191 = arith.constant 1.000000e+00 : f32
    %367 = vector.broadcast %cst_191 : f32 to vector<16x128xf32>
    %368 = arith.addf %366, %367 : vector<16x128xf32>
    %cst_192 = arith.constant 5.000000e-01 : f32
    %369 = vector.broadcast %cst_192 : f32 to vector<16x128xf32>
    %370 = arith.mulf %369, %368 : vector<16x128xf32>
    %371 = vector.extract_strided_slice %354 {offsets = [32, 0], sizes = [16, 128], strides = [1, 1]} : vector<64x128xf32> to vector<16x128xf32>
    %372 = math.tanh %371 : vector<16x128xf32>
    %373 = vector.extract_strided_slice %354 {offsets = [48, 0], sizes = [16, 128], strides = [1, 1]} : vector<64x128xf32> to vector<16x128xf32>
    %cst_193 = arith.constant 5.000000e-01 : f32
    %374 = vector.broadcast %cst_193 : f32 to vector<16x128xf32>
    %375 = arith.mulf %374, %373 : vector<16x128xf32>
    %376 = math.tanh %375 : vector<16x128xf32>
    %cst_194 = arith.constant 1.000000e+00 : f32
    %377 = vector.broadcast %cst_194 : f32 to vector<16x128xf32>
    %378 = arith.addf %376, %377 : vector<16x128xf32>
    %cst_195 = arith.constant 5.000000e-01 : f32
    %379 = vector.broadcast %cst_195 : f32 to vector<16x128xf32>
    %380 = arith.mulf %379, %378 : vector<16x128xf32>
    %381 = arith.mulf %370, %343 : vector<16x128xf32>
    %382 = arith.mulf %362, %372 : vector<16x128xf32>
    %383 = arith.addf %381, %382 : vector<16x128xf32>
    %384 = math.tanh %383 : vector<16x128xf32>
    %385 = arith.mulf %380, %384 : vector<16x128xf32>
    %386 = vector.broadcast %67 : vector<16x1xf32> to vector<16x128xf32>
    %387 = arith.mulf %385, %386 : vector<16x128xf32>
    %cst_196 = arith.constant dense<0.000000e+00> : vector<128xf32>
    %388 = vector.multi_reduction <add>, %387, %cst_196 [0] : vector<16x128xf32> to vector<128xf32>
    %389 = vector.shape_cast %388 : vector<128xf32> to vector<1x128xf32>
    %390 = tpu.concatenate %109, %149, %189, %229, %269, %309, %349, %389 in 0 : vector<1x128xf32>, vector<1x128xf32>, vector<1x128xf32>, vector<1x128xf32>, vector<1x128xf32>, vector<1x128xf32>, vector<1x128xf32>, vector<1x128xf32> -> vector<8x128xf32>
    %c0_197 = arith.constant 0 : index
    %391 = memref.load %arg6[%c0_197] : memref<1xf32, #tpu.memory_space<smem>>
    %392 = vector.broadcast %391 : f32 to vector<8x128xf32>
    %393 = arith.addf %390, %392 : vector<8x128xf32>
    %c0_198 = arith.constant 0 : index
    %c0_199 = arith.constant 0 : index
    %394 = vector.load %arg7[%c0_198, %c0_199] : memref<8x128xf32, #tpu.memory_space<vmem>>, vector<8x128xf32>
    tpu.vector_store %arg7[%c0_198, %c0_199], %393 {strides = array<i32>} : memref<8x128xf32, #tpu.memory_space<vmem>>, vector<8x128xf32>,
    return
  }
  func.func @transform_0(%arg0: i32) -> (i32, i32, i32) {
    %c0_i32 = arith.constant 0 : i32
    %c0_i32_0 = arith.constant 0 : i32
    %c0_i32_1 = arith.constant 0 : i32
    return %c0_i32, %c0_i32_0, %arg0 : i32, i32, i32
  }
  func.func @transform_1(%arg0: i32) -> (i32, i32) {
    %c0_i32 = arith.constant 0 : i32
    %c0_i32_0 = arith.constant 0 : i32
    %c0_i32_1 = arith.constant 0 : i32
    return %c0_i32, %c0_i32_0 : i32, i32
  }
  func.func @transform_2(%arg0: i32) -> (i32, i32) {
    %c0_i32 = arith.constant 0 : i32
    %c0_i32_0 = arith.constant 0 : i32
    %c0_i32_1 = arith.constant 0 : i32
    return %c0_i32, %c0_i32_0 : i32, i32
  }
  func.func @transform_3(%arg0: i32) -> (i32, i32) {
    %c0_i32 = arith.constant 0 : i32
    %c0_i32_0 = arith.constant 0 : i32
    %c0_i32_1 = arith.constant 0 : i32
    return %c0_i32, %c0_i32_0 : i32, i32
  }
  func.func @transform_4(%arg0: i32) -> (i32, i32) {
    %c0_i32 = arith.constant 0 : i32
    %c0_i32_0 = arith.constant 0 : i32
    %c0_i32_1 = arith.constant 0 : i32
    return %c0_i32, %c0_i32_0 : i32, i32
  }
  func.func @transform_5(%arg0: i32) -> i32 {
    %c0_i32 = arith.constant 0 : i32
    %c0_i32_0 = arith.constant 0 : i32
    return %c0_i32 : i32
  }
  func.func @transform_6(%arg0: i32) -> (i32, i32) {
    %c0_i32 = arith.constant 0 : i32
    %c0_i32_0 = arith.constant 0 : i32
    return %c0_i32, %arg0 : i32, i32
  }
}

</mosaic_0001>

<llo_original>
// kernel: tpu_custom_call.1
$region0: #{tpu_custom_call.1}
  #allocation0 [shape = 'u32[]', space=smem, size = 0x4, offset = 0x4, fixed_abs, tag = 'smem constant byte address 0x4 - core index']
  #allocation1 [shape = 'u32[144,128]{1,0:T(1,128)}', space=vmem, size = 0x12000, scoped, tag = 'internal scratch']
  #allocation2 [shape = 'f32[8,64,128]{2,1,0:T(8,128)}', space=vmem, size = 0x40000, scoped, tag = 'scratch operand']
  #allocation3 [shape = 'f32[1]{0:T(128)S(6)}', space=smem, size = 0x200, scoped, tag = 'scoped memory for tpu_custom_call.1']
  %s0 = inlined_call_operand.vmem [shape: f32[8,32,128], index: 0, kind: input, shape index: {}]
  %s1 = inlined_call_operand.vmem [shape: f32[64,32], index: 1, kind: input, shape index: {}]
  %s2 = inlined_call_operand.vmem [shape: f32[64,16], index: 2, kind: input, shape index: {}]
  %s3 = inlined_call_operand.vmem [shape: f32[64,1], index: 3, kind: input, shape index: {}]
  %s4 = inlined_call_operand.vmem [shape: f32[16,1], index: 4, kind: input, shape index: {}]
  %s5 = inlined_call_operand.<no memory space> [shape: f32[1], index: 5, kind: input, shape index: {}]
  %s6 = inlined_call_operand.hbm [shape: f32[8,128], index: 6, kind: output, shape index: {}]
  %s7 = sld [smem:[#allocation0]]
  $region34: #{tpu_custom_call.1} parent=0
    _
  %s9 = ssub.s32 1, %s7
  %s10 = scalar_select 0, %s9, %s7
  %11 = sst [smem:[#allocation3]] %s5
  $region1: #{tpu_custom_call.1} parent=0
    #allocation4 [shape = 'u8[4096]{0}', space=vmem, size = 0x1000, scoped, tag = 'output window, operand 0, single buffered']
    #allocation5 [shape = 's32[1]{0}', space=sflag, size = 0x4, scoped, tag = 'scoped memory for tpu_custom_call.1']
    %12 = vsyncpa [#allocation5], 0
    // Predicated region
    $region2: #{tpu_custom_call.1} parent=1 // pred_check
      _
    $region3: #{tpu_custom_call.1} parent=1 // pred_check_branch
      %14 = sbr.rel (0) target = $region5
    $region4: #{tpu_custom_call.1} parent=1 // pred_region
      _
    $region5: #{tpu_custom_call.1} parent=1 // pred_fallthru
      _
    // Predicated region
    $region6: #{tpu_custom_call.1} parent=1 // pred_check
      _
    $region7: #{tpu_custom_call.1} parent=1 // pred_check_branch
      %16 = sbr.rel (0) target = $region9
    $region8: #{tpu_custom_call.1} parent=1 // pred_region
      _
    $region9: #{tpu_custom_call.1} parent=1 // pred_fallthru
      _
    // Predicated region
    $region10: #{tpu_custom_call.1} parent=1 // pred_check
      _
    $region11: #{tpu_custom_call.1} parent=1 // pred_check_branch
      %18 = sbr.rel (0) target = $region13
    $region12: #{tpu_custom_call.1} parent=1 // pred_region
      _
    $region13: #{tpu_custom_call.1} parent=1 // pred_fallthru
      _
    // Predicated region
    $region14: #{tpu_custom_call.1} parent=1 // pred_check
      _
    $region15: #{tpu_custom_call.1} parent=1 // pred_check_branch
      %20 = sbr.rel (0) target = $region17
    $region16: #{tpu_custom_call.1} parent=1 // pred_region
      _
    $region17: #{tpu_custom_call.1} parent=1 // pred_fallthru
      _
    // Predicated region
    $region18: #{tpu_custom_call.1} parent=1 // pred_check
      _
    $region19: #{tpu_custom_call.1} parent=1 // pred_check_branch
      %22 = sbr.rel (0) target = $region21
    $region20: #{tpu_custom_call.1} parent=1 // pred_region
      _
    $region21: #{tpu_custom_call.1} parent=1 // pred_fallthru
      _
    // Predicated region
    $region22: #{tpu_custom_call.1} parent=1 // pred_check
      _
    $region23: #{tpu_custom_call.1} parent=1 // pred_check_branch
      %24 = sbr.rel (0) target = $region25
    $region24: #{tpu_custom_call.1} parent=1 // pred_region
      _
    $region25: #{tpu_custom_call.1} parent=1 // pred_fallthru
      _
    %v25 = vld [vmem:[%s3] sm:$0xff]
    %v26 = vld [vmem:[%s3 + $0x8] sm:$0xff]
    %v27 = vld [vmem:[%s3 + $0x10] sm:$0xff]
    %v28 = vld [vmem:[%s3 + $0x18] sm:$0xff]
    %v29 = vld [vmem:[%s3 + $0x20] sm:$0xff]
    %v30 = vld [vmem:[%s3 + $0x28] sm:$0xff]
    %v31 = vld [vmem:[%s3 + $0x30] sm:$0xff]
    %v32 = vld [vmem:[%s3 + $0x38] sm:$0xff]
    %34 = vset.pattern.permute.xlu0 0
    %35 = vperm.xlu0 %34, %v25
    %v36 = vpop.permute.xlu0 %35
    %39 = vset.pattern.permute.xlu0 0
    %40 = vperm.xlu0 %39, %v26
    %v41 = vpop.permute.xlu0 %40
    %44 = vset.pattern.permute.xlu0 0
    %45 = vperm.xlu0 %44, %v27
    %v46 = vpop.permute.xlu0 %45
    %49 = vset.pattern.permute.xlu0 0
    %50 = vperm.xlu0 %49, %v28
    %v51 = vpop.permute.xlu0 %50
    %54 = vset.pattern.permute.xlu0 0
    %55 = vperm.xlu0 %54, %v29
    %v56 = vpop.permute.xlu0 %55
    %59 = vset.pattern.permute.xlu0 0
    %60 = vperm.xlu0 %59, %v30
    %v61 = vpop.permute.xlu0 %60
    %64 = vset.pattern.permute.xlu0 0
    %65 = vperm.xlu0 %64, %v31
    %v66 = vpop.permute.xlu0 %65
    %69 = vset.pattern.permute.xlu0 0
    %70 = vperm.xlu0 %69, %v32
    %v71 = vpop.permute.xlu0 %70
    %v73 = vld [vmem:[%s1] sm:$0xff]
    %v74 = vld [vmem:[%s1 + $0x8] sm:$0xff]
    %v75 = vld [vmem:[%s1 + $0x10] sm:$0xff]
    %v76 = vld [vmem:[%s1 + $0x18] sm:$0xff]
    %v77 = vld [vmem:[%s1 + $0x20] sm:$0xff]
    %v78 = vld [vmem:[%s1 + $0x28] sm:$0xff]
    %v79 = vld [vmem:[%s1 + $0x30] sm:$0xff]
    %v80 = vld [vmem:[%s1 + $0x38] sm:$0xff]
    %v81 = vld [vmem:[%s0] sm:$0xff]
    %v82 = vld [vmem:[%s0 + $0x8] sm:$0xff]
    %v83 = vld [vmem:[%s0 + $0x10] sm:$0xff]
    %v84 = vld [vmem:[%s0 + $0x18] sm:$0xff]
    %vm85 = vcmask 261120
    %v87 = vsel %vm85, %v73, 0
    %v90 = vsel %vm85, %v74, 0
    %v93 = vsel %vm85, %v75, 0
    %v96 = vsel %vm85, %v76, 0
    %v99 = vsel %vm85, %v77, 0
    %v102 = vsel %vm85, %v78, 0
    %v105 = vsel %vm85, %v79, 0
    %v108 = vsel %vm85, %v80, 0
    %110 = vmatprep.subr.mxu0 0.0
    %111 = vmatpush1.msra.mxu0 %v81
    %112 = vmatprep.subr.mxu0 0.0
    %113 = vmatpush1.msra.mxu0 %v82
    %114 = vmatprep.subr.mxu0 0.0
    %115 = vmatpush1.msra.mxu0 %v83
    %116 = vmatprep.subr.mxu0 0.0
    %117 = vmatpush1.msra.mxu0 %v84
    %118 = vmatprep.subr.mxu0 0.0
    %119 = vmatpush1.msra.mxu0 0.0
    %120 = vmatprep.subr.mxu0 0.0
    %121 = vmatpush1.msra.mxu0 0.0
    %122 = vmatprep.subr.mxu0 0.0
    %123 = vmatpush1.msra.mxu0 0.0
    %124 = vmatprep.subr.mxu0 0.0
    %125 = vmatpush1.msra.mxu0 0.0
    %126 = vmatprep.subr.mxu0 0.0
    %127 = vmatpush1.msra.mxu0 0.0
    %128 = vmatprep.subr.mxu0 0.0
    %129 = vmatpush1.msra.mxu0 0.0
    %130 = vmatprep.subr.mxu0 0.0
    %131 = vmatpush1.msra.mxu0 0.0
    %132 = vmatprep.subr.mxu0 0.0
    %133 = vmatpush1.msra.mxu0 0.0
    %134 = vmatprep.subr.mxu0 0.0
    %135 = vmatpush1.msra.mxu0 0.0
    %136 = vmatprep.subr.mxu0 0.0
    %137 = vmatpush1.msra.mxu0 0.0
    %138 = vmatprep.subr.mxu0 0.0
    %139 = vmatpush1.msra.mxu0 0.0
    %140 = vmatprep.subr.mxu0 0.0
    %141 = vmatpush1.msra.mxu0 0.0
    %142 = vmatprep.subr.mxu0 0.0
    %143 = vmatpush1.msra.mxu0 0.0
    %144 = vmatprep.subr.mxu0 0.0
    %145 = vmatpush1.msra.mxu0 0.0
    %146 = vmatprep.subr.mxu0 0.0
    %147 = vmatpush1.msra.mxu0 0.0
    %148 = vmatprep.subr.mxu0 0.0
    %149 = vmatpush1.msra.mxu0 0.0
    %150 = vmatprep.subr.mxu0 0.0
    %151 = vmatpush1.msra.mxu0 0.0
    %152 = vmatprep.subr.mxu0 0.0
    %153 = vmatpush1.msra.mxu0 0.0
    %154 = vmatprep.subr.mxu0 0.0
    %155 = vmatpush1.msra.mxu0 0.0
    %156 = vmatprep.subr.mxu0 0.0
    %157 = vmatpush1.msra.mxu0 0.0
    %158 = vmatprep.subr.mxu0 0.0
    %159 = vmatpush1.msra.mxu0 0.0
    %160 = vmatprep.subr.mxu0 0.0
    %161 = vmatpush1.msra.mxu0 0.0
    %162 = vmatprep.subr.mxu0 0.0
    %163 = vmatpush1.msra.mxu0 0.0
    %164 = vmatprep.subr.mxu0 0.0
    %165 = vmatpush1.msra.mxu0 0.0
    %166 = vmatprep.subr.mxu0 0.0
    %167 = vmatpush1.msra.mxu0 0.0
    %168 = vmatprep.subr.mxu0 0.0
    %169 = vmatpush1.msra.mxu0 0.0
    %170 = vmatprep.subr.mxu0 0.0
    %171 = vmatpush1.msra.mxu0 0.0
    %172 = vmatprep.subr.mxu0 0.0
    %173 = vmatpush1.msra.mxu0 0.0
    %174 = vmatprep.mubr.f32.mxu0 0.0
    %175 = vmatmul.mubr.f32.gmra.mrb[0].mxu0 %v87
    %v176 = vpop.f32.mrb[0].mxu0
    %v177 = vadd.f32 %v36, %v176
    %v178 = vpop.f32.mrb[0].mxu0
    %179 = vmatprep.mubr.f32.mxu0 0.0
    %180 = vmatmul.mubr.f32.gmra.mrb[0].mxu0 %v90
    %v181 = vpop.f32.mrb[0].mxu0
    %v182 = vadd.f32 %v41, %v181
    %v183 = vpop.f32.mrb[0].mxu0
    %184 = vmatprep.mubr.f32.mxu0 0.0
    %185 = vmatmul.mubr.f32.gmra.mrb[0].mxu0 %v93
    %v186 = vpop.f32.mrb[0].mxu0
    %v187 = vadd.f32 %v46, %v186
    %v188 = vpop.f32.mrb[0].mxu0
    %189 = vmatprep.mubr.f32.mxu0 0.0
    %190 = vmatmul.mubr.f32.gmra.mrb[0].mxu0 %v96
    %v191 = vpop.f32.mrb[0].mxu0
    %v192 = vadd.f32 %v51, %v191
    %v193 = vpop.f32.mrb[0].mxu0
    %194 = vmatprep.mubr.f32.mxu0 0.0
    %195 = vmatmul.mubr.f32.gmra.mrb[0].mxu0 %v99
    %v196 = vpop.f32.mrb[0].mxu0
    %v197 = vadd.f32 %v56, %v196
    %v198 = vpop.f32.mrb[0].mxu0
    %199 = vmatprep.mubr.f32.mxu0 0.0
    %200 = vmatmul.mubr.f32.gmra.mrb[0].mxu0 %v102
    %v201 = vpop.f32.mrb[0].mxu0
    %v202 = vadd.f32 %v61, %v201
    %v203 = vpop.f32.mrb[0].mxu0
    %204 = vmatprep.mubr.f32.mxu0 0.0
    %205 = vmatmul.mubr.f32.gmra.mrb[0].mxu0 %v105
    %v206 = vpop.f32.mrb[0].mxu0
    %v207 = vadd.f32 %v66, %v206
    %v208 = vpop.f32.mrb[0].mxu0
    %209 = vmatprep.mubr.f32.mxu0 0.0
    %210 = vmatmul.mubr.f32.gmra.mrb[0].mxu0 %v108
    %v211 = vpop.f32.mrb[0].mxu0
    %v212 = vadd.f32 %v71, %v211
    %v213 = vpop.f32.mrb[0].mxu0
    %214 = vdwg.mxu0
    %215 = vst [vmem:[#allocation2] sm:$0xff] %v177
    %216 = vst [vmem:[#allocation2 + $0x8] sm:$0xff] %v182
    %217 = vst [vmem:[#allocation2 + $0x10] sm:$0xff] %v187
    %218 = vst [vmem:[#allocation2 + $0x18] sm:$0xff] %v192
    %219 = vst [vmem:[#allocation2 + $0x20] sm:$0xff] %v197
    %220 = vst [vmem:[#allocation2 + $0x28] sm:$0xff] %v202
    %221 = vst [vmem:[#allocation2 + $0x30] sm:$0xff] %v207
    %222 = vst [vmem:[#allocation2 + $0x38] sm:$0xff] %v212
    %v223 = vld [vmem:[%s1] sm:$0xff]
    %v224 = vld [vmem:[%s1 + $0x8] sm:$0xff]
    %v225 = vld [vmem:[%s1 + $0x10] sm:$0xff]
    %v226 = vld [vmem:[%s1 + $0x18] sm:$0xff]
    %v227 = vld [vmem:[%s1 + $0x20] sm:$0xff]
    %v228 = vld [vmem:[%s1 + $0x28] sm:$0xff]
    %v229 = vld [vmem:[%s1 + $0x30] sm:$0xff]
    %v230 = vld [vmem:[%s1 + $0x38] sm:$0xff]
    %s231 = scalar_lea.vmem %s0, 32
    %v232 = vld [vmem:[%s231] sm:$0xff]
    %v233 = vld [vmem:[%s231 + $0x8] sm:$0xff]
    %v234 = vld [vmem:[%s231 + $0x10] sm:$0xff]
    %v235 = vld [vmem:[%s231 + $0x18] sm:$0xff]
    %v237 = vsel %vm85, %v223, 0
    %v240 = vsel %vm85, %v224, 0
    %v243 = vsel %vm85, %v225, 0
    %v246 = vsel %vm85, %v226, 0
    %v249 = vsel %vm85, %v227, 0
    %v252 = vsel %vm85, %v228, 0
    %v255 = vsel %vm85, %v229, 0
    %v258 = vsel %vm85, %v230, 0
    %260 = vmatprep.subr.mxu0 0.0
    %261 = vmatpush1.msra.mxu0 %v232
    %262 = vmatprep.subr.mxu0 0.0
    %263 = vmatpush1.msra.mxu0 %v233
    %264 = vmatprep.subr.mxu0 0.0
    %265 = vmatpush1.msra.mxu0 %v234
    %266 = vmatprep.subr.mxu0 0.0
    %267 = vmatpush1.msra.mxu0 %v235
    %268 = vmatprep.subr.mxu0 0.0
    %269 = vmatpush1.msra.mxu0 0.0
    %270 = vmatprep.subr.mxu0 0.0
    %271 = vmatpush1.msra.mxu0 0.0
    %272 = vmatprep.subr.mxu0 0.0
    %273 = vmatpush1.msra.mxu0 0.0
    %274 = vmatprep.subr.mxu0 0.0
    %275 = vmatpush1.msra.mxu0 0.0
    %276 = vmatprep.subr.mxu0 0.0
    %277 = vmatpush1.msra.mxu0 0.0
    %278 = vmatprep.subr.mxu0 0.0
    %279 = vmatpush1.msra.mxu0 0.0
    %280 = vmatprep.subr.mxu0 0.0
    %281 = vmatpush1.msra.mxu0 0.0
    %282 = vmatprep.subr.mxu0 0.0
    %283 = vmatpush1.msra.mxu0 0.0
    %284 = vmatprep.subr.mxu0 0.0
    %285 = vmatpush1.msra.mxu0 0.0
    %286 = vmatprep.subr.mxu0 0.0
    %287 = vmatpush1.msra.mxu0 0.0
    %288 = vmatprep.subr.mxu0 0.0
    %289 = vmatpush1.msra.mxu0 0.0
    %290 = vmatprep.subr.mxu0 0.0
    %291 = vmatpush1.msra.mxu0 0.0
    %292 = vmatprep.subr.mxu0 0.0
    %293 = vmatpush1.msra.mxu0 0.0
    %294 = vmatprep.subr.mxu0 0.0
    %295 = vmatpush1.msra.mxu0 0.0
    %296 = vmatprep.subr.mxu0 0.0
    %297 = vmatpush1.msra.mxu0 0.0
    %298 = vmatprep.subr.mxu0 0.0
    %299 = vmatpush1.msra.mxu0 0.0
    %300 = vmatprep.subr.mxu0 0.0
    %301 = vmatpush1.msra.mxu0 0.0
    %302 = vmatprep.subr.mxu0 0.0
    %303 = vmatpush1.msra.mxu0 0.0
    %304 = vmatprep.subr.mxu0 0.0
    %305 = vmatpush1.msra.mxu0 0.0
    %306 = vmatprep.subr.mxu0 0.0
    %307 = vmatpush1.msra.mxu0 0.0
    %308 = vmatprep.subr.mxu0 0.0
    %309 = vmatpush1.msra.mxu0 0.0
    %310 = vmatprep.subr.mxu0 0.0
    %311 = vmatpush1.msra.mxu0 0.0
    %312 = vmatprep.subr.mxu0 0.0
    %313 = vmatpush1.msra.mxu0 0.0
    %314 = vmatprep.subr.mxu0 0.0
    %315 = vmatpush1.msra.mxu0 0.0
    %316 = vmatprep.subr.mxu0 0.0
    %317 = vmatpush1.msra.mxu0 0.0
    %318 = vmatprep.subr.mxu0 0.0
    %319 = vmatpush1.msra.mxu0 0.0
    %320 = vmatprep.subr.mxu0 0.0
    %321 = vmatpush1.msra.mxu0 0.0
    %322 = vmatprep.subr.mxu0 0.0
    %323 = vmatpush1.msra.mxu0 0.0
    %324 = vmatprep.mubr.f32.mxu0 0.0
    %325 = vmatmul.mubr.f32.gmra.mrb[0].mxu0 %v237
    %v326 = vpop.f32.mrb[0].mxu0
    %v327 = vadd.f32 %v36, %v326
    %v328 = vpop.f32.mrb[0].mxu0
    %329 = vmatprep.mubr.f32.mxu0 0.0
    %330 = vmatmul.mubr.f32.gmra.mrb[0].mxu0 %v240
    %v331 = vpop.f32.mrb[0].mxu0
    %v332 = vadd.f32 %v41, %v331
    %v333 = vpop.f32.mrb[0].mxu0
    %334 = vmatprep.mubr.f32.mxu0 0.0
    %335 = vmatmul.mubr.f32.gmra.mrb[0].mxu0 %v243
    %v336 = vpop.f32.mrb[0].mxu0
    %v337 = vadd.f32 %v46, %v336
    %v338 = vpop.f32.mrb[0].mxu0
    %339 = vmatprep.mubr.f32.mxu0 0.0
    %340 = vmatmul.mubr.f32.gmra.mrb[0].mxu0 %v246
    %v341 = vpop.f32.mrb[0].mxu0
    %v342 = vadd.f32 %v51, %v341
    %v343 = vpop.f32.mrb[0].mxu0
    %344 = vmatprep.mubr.f32.mxu0 0.0
    %345 = vmatmul.mubr.f32.gmra.mrb[0].mxu0 %v249
    %v346 = vpop.f32.mrb[0].mxu0
    %v347 = vadd.f32 %v56, %v346
    %v348 = vpop.f32.mrb[0].mxu0
    %349 = vmatprep.mubr.f32.mxu0 0.0
    %350 = vmatmul.mubr.f32.gmra.mrb[0].mxu0 %v252
    %v351 = vpop.f32.mrb[0].mxu0
    %v352 = vadd.f32 %v61, %v351
    %v353 = vpop.f32.mrb[0].mxu0
    %354 = vmatprep.mubr.f32.mxu0 0.0
    %355 = vmatmul.mubr.f32.gmra.mrb[0].mxu0 %v255
    %v356 = vpop.f32.mrb[0].mxu0
    %v357 = vadd.f32 %v66, %v356
    %v358 = vpop.f32.mrb[0].mxu0
    %359 = vmatprep.mubr.f32.mxu0 0.0
    %360 = vmatmul.mubr.f32.gmra.mrb[0].mxu0 %v258
    %v361 = vpop.f32.mrb[0].mxu0
    %v362 = vadd.f32 %v71, %v361
    %v363 = vpop.f32.mrb[0].mxu0
    %364 = vdwg.mxu0
    %s365 = scalar_lea.vmem [#allocation2], 64
    %366 = vst [vmem:[%s365] sm:$0xff] %v327
    %367 = vst [vmem:[%s365 + $0x8] sm:$0xff] %v332
    %368 = vst [vmem:[%s365 + $0x10] sm:$0xff] %v337
    %369 = vst [vmem:[%s365 + $0x18] sm:$0xff] %v342
    %370 = vst [vmem:[%s365 + $0x20] sm:$0xff] %v347
    %371 = vst [vmem:[%s365 + $0x28] sm:$0xff] %v352
    %372 = vst [vmem:[%s365 + $0x30] sm:$0xff] %v357
    %373 = vst [vmem:[%s365 + $0x38] sm:$0xff] %v362
    %v374 = vld [vmem:[%s1] sm:$0xff]
    %v375 = vld [vmem:[%s1 + $0x8] sm:$0xff]
    %v376 = vld [vmem:[%s1 + $0x10] sm:$0xff]
    %v377 = vld [vmem:[%s1 + $0x18] sm:$0xff]
    %v378 = vld [vmem:[%s1 + $0x20] sm:$0xff]
    %v379 = vld [vmem:[%s1 + $0x28] sm:$0xff]
    %v380 = vld [vmem:[%s1 + $0x30] sm:$0xff]
    %v381 = vld [vmem:[%s1 + $0x38] sm:$0xff]
    %s382 = scalar_lea.vmem %s0, 64
    %v383 = vld [vmem:[%s382] sm:$0xff]
    %v384 = vld [vmem:[%s382 + $0x8] sm:$0xff]
    %v385 = vld [vmem:[%s382 + $0x10] sm:$0xff]
    %v386 = vld [vmem:[%s382 + $0x18] sm:$0xff]
    %v388 = vsel %vm85, %v374, 0
    %v391 = vsel %vm85, %v375, 0
    %v394 = vsel %vm85, %v376, 0
    %v397 = vsel %vm85, %v377, 0
    %v400 = vsel %vm85, %v378, 0
    %v403 = vsel %vm85, %v379, 0
    %v406 = vsel %vm85, %v380, 0
    %v409 = vsel %vm85, %v381, 0
    %411 = vmatprep.subr.mxu0 0.0
    %412 = vmatpush1.msra.mxu0 %v383
    %413 = vmatprep.subr.mxu0 0.0
    %414 = vmatpush1.msra.mxu0 %v384
    %415 = vmatprep.subr.mxu0 0.0
    %416 = vmatpush1.msra.mxu0 %v385
    %417 = vmatprep.subr.mxu0 0.0
    %418 = vmatpush1.msra.mxu0 %v386
    %419 = vmatprep.subr.mxu0 0.0
    %420 = vmatpush1.msra.mxu0 0.0
    %421 = vmatprep.subr.mxu0 0.0
    %422 = vmatpush1.msra.mxu0 0.0
    %423 = vmatprep.subr.mxu0 0.0
    %424 = vmatpush1.msra.mxu0 0.0
    %425 = vmatprep.subr.mxu0 0.0
    %426 = vmatpush1.msra.mxu0 0.0
    %427 = vmatprep.subr.mxu0 0.0
    %428 = vmatpush1.msra.mxu0 0.0
    %429 = vmatprep.subr.mxu0 0.0
    %430 = vmatpush1.msra.mxu0 0.0
    %431 = vmatprep.subr.mxu0 0.0
    %432 = vmatpush1.msra.mxu0 0.0
    %433 = vmatprep.subr.mxu0 0.0
    %434 = vmatpush1.msra.mxu0 0.0
    %435 = vmatprep.subr.mxu0 0.0
    %436 = vmatpush1.msra.mxu0 0.0
    %437 = vmatprep.subr.mxu0 0.0
    %438 = vmatpush1.msra.mxu0 0.0
    %439 = vmatprep.subr.mxu0 0.0
    %440 = vmatpush1.msra.mxu0 0.0
    %441 = vmatprep.subr.mxu0 0.0
    %442 = vmatpush1.msra.mxu0 0.0
    %443 = vmatprep.subr.mxu0 0.0
    %444 = vmatpush1.msra.mxu0 0.0
    %445 = vmatprep.subr.mxu0 0.0
    %446 = vmatpush1.msra.mxu0 0.0
    %447 = vmatprep.subr.mxu0 0.0
    %448 = vmatpush1.msra.mxu0 0.0
    %449 = vmatprep.subr.mxu0 0.0
    %450 = vmatpush1.msra.mxu0 0.0
    %451 = vmatprep.subr.mxu0 0.0
    %452 = vmatpush1.msra.mxu0 0.0
    %453 = vmatprep.subr.mxu0 0.0
    %454 = vmatpush1.msra.mxu0 0.0
    %455 = vmatprep.subr.mxu0 0.0
    %456 = vmatpush1.msra.mxu0 0.0
    %457 = vmatprep.subr.mxu0 0.0
    %458 = vmatpush1.msra.mxu0 0.0
    %459 = vmatprep.subr.mxu0 0.0
    %460 = vmatpush1.msra.mxu0 0.0
    %461 = vmatprep.subr.mxu0 0.0
    %462 = vmatpush1.msra.mxu0 0.0
    %463 = vmatprep.subr.mxu0 0.0
    %464 = vmatpush1.msra.mxu0 0.0
    %465 = vmatprep.subr.mxu0 0.0
    %466 = vmatpush1.msra.mxu0 0.0
    %467 = vmatprep.subr.mxu0 0.0
    %468 = vmatpush1.msra.mxu0 0.0
    %469 = vmatprep.subr.mxu0 0.0
    %470 = vmatpush1.msra.mxu0 0.0
    %471 = vmatprep.subr.mxu0 0.0
    %472 = vmatpush1.msra.mxu0 0.0
    %473 = vmatprep.subr.mxu0 0.0
    %474 = vmatpush1.msra.mxu0 0.0
    %475 = vmatprep.mubr.f32.mxu0 0.0
    %476 = vmatmul.mubr.f32.gmra.mrb[0].mxu0 %v388
    %v477 = vpop.f32.mrb[0].mxu0
    %v478 = vadd.f32 %v36, %v477
    %v479 = vpop.f32.mrb[0].mxu0
    %480 = vmatprep.mubr.f32.mxu0 0.0
    %481 = vmatmul.mubr.f32.gmra.mrb[0].mxu0 %v391
    %v482 = vpop.f32.mrb[0].mxu0
    %v483 = vadd.f32 %v41, %v482
    %v484 = vpop.f32.mrb[0].mxu0
    %485 = vmatprep.mubr.f32.mxu0 0.0
    %486 = vmatmul.mubr.f32.gmra.mrb[0].mxu0 %v394
    %v487 = vpop.f32.mrb[0].mxu0
    %v488 = vadd.f32 %v46, %v487
    %v489 = vpop.f32.mrb[0].mxu0
    %490 = vmatprep.mubr.f32.mxu0 0.0
    %491 = vmatmul.mubr.f32.gmra.mrb[0].mxu0 %v397
    %v492 = vpop.f32.mrb[0].mxu0
    %v493 = vadd.f32 %v51, %v492
    %v494 = vpop.f32.mrb[0].mxu0
    %495 = vmatprep.mubr.f32.mxu0 0.0
    %496 = vmatmul.mubr.f32.gmra.mrb[0].mxu0 %v400
    %v497 = vpop.f32.mrb[0].mxu0
    %v498 = vadd.f32 %v56, %v497
    %v499 = vpop.f32.mrb[0].mxu0
    %500 = vmatprep.mubr.f32.mxu0 0.0
    %501 = vmatmul.mubr.f32.gmra.mrb[0].mxu0 %v403
    %v502 = vpop.f32.mrb[0].mxu0
    %v503 = vadd.f32 %v61, %v502
    %v504 = vpop.f32.mrb[0].mxu0
    %505 = vmatprep.mubr.f32.mxu0 0.0
    %506 = vmatmul.mubr.f32.gmra.mrb[0].mxu0 %v406
    %v507 = vpop.f32.mrb[0].mxu0
    %v508 = vadd.f32 %v66, %v507
    %v509 = vpop.f32.mrb[0].mxu0
    %510 = vmatprep.mubr.f32.mxu0 0.0
    %511 = vmatmul.mubr.f32.gmra.mrb[0].mxu0 %v409
    %v512 = vpop.f32.mrb[0].mxu0
    %v513 = vadd.f32 %v71, %v512
    %v514 = vpop.f32.mrb[0].mxu0
    %515 = vdwg.mxu0
    %s516 = scalar_lea.vmem [#allocation2], 128
    %517 = vst [vmem:[%s516] sm:$0xff] %v478
    %518 = vst [vmem:[%s516 + $0x8] sm:$0xff] %v483
    %519 = vst [vmem:[%s516 + $0x10] sm:$0xff] %v488
    %520 = vst [vmem:[%s516 + $0x18] sm:$0xff] %v493
    %521 = vst [vmem:[%s516 + $0x20] sm:$0xff] %v498
    %522 = vst [vmem:[%s516 + $0x28] sm:$0xff] %v503
    %523 = vst [vmem:[%s516 + $0x30] sm:$0xff] %v508
    %524 = vst [vmem:[%s516 + $0x38] sm:$0xff] %v513
    %v525 = vld [vmem:[%s1] sm:$0xff]
    %v526 = vld [vmem:[%s1 + $0x8] sm:$0xff]
    %v527 = vld [vmem:[%s1 + $0x10] sm:$0xff]
    %v528 = vld [vmem:[%s1 + $0x18] sm:$0xff]
    %v529 = vld [vmem:[%s1 + $0x20] sm:$0xff]
    %v530 = vld [vmem:[%s1 + $0x28] sm:$0xff]
    %v531 = vld [vmem:[%s1 + $0x30] sm:$0xff]
    %v532 = vld [vmem:[%s1 + $0x38] sm:$0xff]
    %s533 = scalar_lea.vmem %s0, 96
    %v534 = vld [vmem:[%s533] sm:$0xff]
    %v535 = vld [vmem:[%s533 + $0x8] sm:$0xff]
    %v536 = vld [vmem:[%s533 + $0x10] sm:$0xff]
    %v537 = vld [vmem:[%s533 + $0x18] sm:$0xff]
    %v539 = vsel %vm85, %v525, 0
    %v542 = vsel %vm85, %v526, 0
    %v545 = vsel %vm85, %v527, 0
    %v548 = vsel %vm85, %v528, 0
    %v551 = vsel %vm85, %v529, 0
    %v554 = vsel %vm85, %v530, 0
    %v557 = vsel %vm85, %v531, 0
    %v560 = vsel %vm85, %v532, 0
    %562 = vmatprep.subr.mxu0 0.0
    %563 = vmatpush1.msra.mxu0 %v534
    %564 = vmatprep.subr.mxu0 0.0
    %565 = vmatpush1.msra.mxu0 %v535
    %566 = vmatprep.subr.mxu0 0.0
    %567 = vmatpush1.msra.mxu0 %v536
    %568 = vmatprep.subr.mxu0 0.0
    %569 = vmatpush1.msra.mxu0 %v537
    %570 = vmatprep.subr.mxu0 0.0
    %571 = vmatpush1.msra.mxu0 0.0
    %572 = vmatprep.subr.mxu0 0.0
    %573 = vmatpush1.msra.mxu0 0.0
    %574 = vmatprep.subr.mxu0 0.0
    %575 = vmatpush1.msra.mxu0 0.0
    %576 = vmatprep.subr.mxu0 0.0
    %577 = vmatpush1.msra.mxu0 0.0
    %578 = vmatprep.subr.mxu0 0.0
    %579 = vmatpush1.msra.mxu0 0.0
    %580 = vmatprep.subr.mxu0 0.0
    %581 = vmatpush1.msra.mxu0 0.0
    %582 = vmatprep.subr.mxu0 0.0
    %583 = vmatpush1.msra.mxu0 0.0
    %584 = vmatprep.subr.mxu0 0.0
    %585 = vmatpush1.msra.mxu0 0.0
    %586 = vmatprep.subr.mxu0 0.0
    %587 = vmatpush1.msra.mxu0 0.0
    %588 = vmatprep.subr.mxu0 0.0
    %589 = vmatpush1.msra.mxu0 0.0
    %590 = vmatprep.subr.mxu0 0.0
    %591 = vmatpush1.msra.mxu0 0.0
    %592 = vmatprep.subr.mxu0 0.0
    %593 = vmatpush1.msra.mxu0 0.0
    %594 = vmatprep.subr.mxu0 0.0
    %595 = vmatpush1.msra.mxu0 0.0
    %596 = vmatprep.subr.mxu0 0.0
    %597 = vmatpush1.msra.mxu0 0.0
    %598 = vmatprep.subr.mxu0 0.0
    %599 = vmatpush1.msra.mxu0 0.0
    %600 = vmatprep.subr.mxu0 0.0
    %601 = vmatpush1.msra.mxu0 0.0
    %602 = vmatprep.subr.mxu0 0.0
    %603 = vmatpush1.msra.mxu0 0.0
    %604 = vmatprep.subr.mxu0 0.0
    %605 = vmatpush1.msra.mxu0 0.0
    %606 = vmatprep.subr.mxu0 0.0
    %607 = vmatpush1.msra.mxu0 0.0
    %608 = vmatprep.subr.mxu0 0.0
    %609 = vmatpush1.msra.mxu0 0.0
    %610 = vmatprep.subr.mxu0 0.0
    %611 = vmatpush1.msra.mxu0 0.0
    %612 = vmatprep.subr.mxu0 0.0
    %613 = vmatpush1.msra.mxu0 0.0
    %614 = vmatprep.subr.mxu0 0.0
    %615 = vmatpush1.msra.mxu0 0.0
    %616 = vmatprep.subr.mxu0 0.0
    %617 = vmatpush1.msra.mxu0 0.0
    %618 = vmatprep.subr.mxu0 0.0
    %619 = vmatpush1.msra.mxu0 0.0
    %620 = vmatprep.subr.mxu0 0.0
    %621 = vmatpush1.msra.mxu0 0.0
    %622 = vmatprep.subr.mxu0 0.0
    %623 = vmatpush1.msra.mxu0 0.0
    %624 = vmatprep.subr.mxu0 0.0
    %625 = vmatpush1.msra.mxu0 0.0
    %626 = vmatprep.mubr.f32.mxu0 0.0
    %627 = vmatmul.mubr.f32.gmra.mrb[0].mxu0 %v539
    %v628 = vpop.f32.mrb[0].mxu0
    %v629 = vadd.f32 %v36, %v628
    %v630 = vpop.f32.mrb[0].mxu0
    %631 = vmatprep.mubr.f32.mxu0 0.0
    %632 = vmatmul.mubr.f32.gmra.mrb[0].mxu0 %v542
    %v633 = vpop.f32.mrb[0].mxu0
    %v634 = vadd.f32 %v41, %v633
    %v635 = vpop.f32.mrb[0].mxu0
    %636 = vmatprep.mubr.f32.mxu0 0.0
    %637 = vmatmul.mubr.f32.gmra.mrb[0].mxu0 %v545
    %v638 = vpop.f32.mrb[0].mxu0
    %v639 = vadd.f32 %v46, %v638
    %v640 = vpop.f32.mrb[0].mxu0
    %641 = vmatprep.mubr.f32.mxu0 0.0
    %642 = vmatmul.mubr.f32.gmra.mrb[0].mxu0 %v548
    %v643 = vpop.f32.mrb[0].mxu0
    %v644 = vadd.f32 %v51, %v643
    %v645 = vpop.f32.mrb[0].mxu0
    %646 = vmatprep.mubr.f32.mxu0 0.0
    %647 = vmatmul.mubr.f32.gmra.mrb[0].mxu0 %v551
    %v648 = vpop.f32.mrb[0].mxu0
    %v649 = vadd.f32 %v56, %v648
    %v650 = vpop.f32.mrb[0].mxu0
    %651 = vmatprep.mubr.f32.mxu0 0.0
    %652 = vmatmul.mubr.f32.gmra.mrb[0].mxu0 %v554
    %v653 = vpop.f32.mrb[0].mxu0
    %v654 = vadd.f32 %v61, %v653
    %v655 = vpop.f32.mrb[0].mxu0
    %656 = vmatprep.mubr.f32.mxu0 0.0
    %657 = vmatmul.mubr.f32.gmra.mrb[0].mxu0 %v557
    %v658 = vpop.f32.mrb[0].mxu0
    %v659 = vadd.f32 %v66, %v658
    %v660 = vpop.f32.mrb[0].mxu0
    %661 = vmatprep.mubr.f32.mxu0 0.0
    %662 = vmatmul.mubr.f32.gmra.mrb[0].mxu0 %v560
    %v663 = vpop.f32.mrb[0].mxu0
    %v664 = vadd.f32 %v71, %v663
    %v665 = vpop.f32.mrb[0].mxu0
    %666 = vdwg.mxu0
    %s667 = scalar_lea.vmem [#allocation2], 192
    %668 = vst [vmem:[%s667] sm:$0xff] %v629
    %669 = vst [vmem:[%s667 + $0x8] sm:$0xff] %v634
    %670 = vst [vmem:[%s667 + $0x10] sm:$0xff] %v639
    %671 = vst [vmem:[%s667 + $0x18] sm:$0xff] %v644
    %672 = vst [vmem:[%s667 + $0x20] sm:$0xff] %v649
    %673 = vst [vmem:[%s667 + $0x28] sm:$0xff] %v654
    %674 = vst [vmem:[%s667 + $0x30] sm:$0xff] %v659
    %675 = vst [vmem:[%s667 + $0x38] sm:$0xff] %v664
    %v676 = vld [vmem:[%s1] sm:$0xff]
    %v677 = vld [vmem:[%s1 + $0x8] sm:$0xff]
    %v678 = vld [vmem:[%s1 + $0x10] sm:$0xff]
    %v679 = vld [vmem:[%s1 + $0x18] sm:$0xff]
    %v680 = vld [vmem:[%s1 + $0x20] sm:$0xff]
    %v681 = vld [vmem:[%s1 + $0x28] sm:$0xff]
    %v682 = vld [vmem:[%s1 + $0x30] sm:$0xff]
    %v683 = vld [vmem:[%s1 + $0x38] sm:$0xff]
    %s684 = scalar_lea.vmem %s0, 128
    %v685 = vld [vmem:[%s684] sm:$0xff]
    %v686 = vld [vmem:[%s684 + $0x8] sm:$0xff]
    %v687 = vld [vmem:[%s684 + $0x10] sm:$0xff]
    %v688 = vld [vmem:[%s684 + $0x18] sm:$0xff]
    %v690 = vsel %vm85, %v676, 0
    %v693 = vsel %vm85, %v677, 0
    %v696 = vsel %vm85, %v678, 0
    %v699 = vsel %vm85, %v679, 0
    %v702 = vsel %vm85, %v680, 0
    %v705 = vsel %vm85, %v681, 0
    %v708 = vsel %vm85, %v682, 0
    %v711 = vsel %vm85, %v683, 0
    %713 = vmatprep.subr.mxu0 0.0
    %714 = vmatpush1.msra.mxu0 %v685
    %715 = vmatprep.subr.mxu0 0.0
    %716 = vmatpush1.msra.mxu0 %v686
    %717 = vmatprep.subr.mxu0 0.0
    %718 = vmatpush1.msra.mxu0 %v687
    %719 = vmatprep.subr.mxu0 0.0
    %720 = vmatpush1.msra.mxu0 %v688
    %721 = vmatprep.subr.mxu0 0.0
    %722 = vmatpush1.msra.mxu0 0.0
    %723 = vmatprep.subr.mxu0 0.0
    %724 = vmatpush1.msra.mxu0 0.0
    %725 = vmatprep.subr.mxu0 0.0
    %726 = vmatpush1.msra.mxu0 0.0
    %727 = vmatprep.subr.mxu0 0.0
    %728 = vmatpush1.msra.mxu0 0.0
    %729 = vmatprep.subr.mxu0 0.0
    %730 = vmatpush1.msra.mxu0 0.0
    %731 = vmatprep.subr.mxu0 0.0
    %732 = vmatpush1.msra.mxu0 0.0
    %733 = vmatprep.subr.mxu0 0.0
    %734 = vmatpush1.msra.mxu0 0.0
    %735 = vmatprep.subr.mxu0 0.0
    %736 = vmatpush1.msra.mxu0 0.0
    %737 = vmatprep.subr.mxu0 0.0
    %738 = vmatpush1.msra.mxu0 0.0
    %739 = vmatprep.subr.mxu0 0.0
    %740 = vmatpush1.msra.mxu0 0.0
    %741 = vmatprep.subr.mxu0 0.0
    %742 = vmatpush1.msra.mxu0 0.0
    %743 = vmatprep.subr.mxu0 0.0
    %744 = vmatpush1.msra.mxu0 0.0
    %745 = vmatprep.subr.mxu0 0.0
    %746 = vmatpush1.msra.mxu0 0.0
    %747 = vmatprep.subr.mxu0 0.0
    %748 = vmatpush1.msra.mxu0 0.0
    %749 = vmatprep.subr.mxu0 0.0
    %750 = vmatpush1.msra.mxu0 0.0
    %751 = vmatprep.subr.mxu0 0.0
    %752 = vmatpush1.msra.mxu0 0.0
    %753 = vmatprep.subr.mxu0 0.0
    %754 = vmatpush1.msra.mxu0 0.0
    %755 = vmatprep.subr.mxu0 0.0
    %756 = vmatpush1.msra.mxu0 0.0
    %757 = vmatprep.subr.mxu0 0.0
    %758 = vmatpush1.msra.mxu0 0.0
    %759 = vmatprep.subr.mxu0 0.0
    %760 = vmatpush1.msra.mxu0 0.0
    %761 = vmatprep.subr.mxu0 0.0
    %762 = vmatpush1.msra.mxu0 0.0
    %763 = vmatprep.subr.mxu0 0.0
    %764 = vmatpush1.msra.mxu0 0.0
    %765 = vmatprep.subr.mxu0 0.0
    %766 = vmatpush1.msra.mxu0 0.0
    %767 = vmatprep.subr.mxu0 0.0
    %768 = vmatpush1.msra.mxu0 0.0
    %769 = vmatprep.subr.mxu0 0.0
    %770 = vmatpush1.msra.mxu0 0.0
    %771 = vmatprep.subr.mxu0 0.0
    %772 = vmatpush1.msra.mxu0 0.0
    %773 = vmatprep.subr.mxu0 0.0
    %774 = vmatpush1.msra.mxu0 0.0
    %775 = vmatprep.subr.mxu0 0.0
    %776 = vmatpush1.msra.mxu0 0.0
    %777 = vmatprep.mubr.f32.mxu0 0.0
    %778 = vmatmul.mubr.f32.gmra.mrb[0].mxu0 %v690
    %v779 = vpop.f32.mrb[0].mxu0
    %v780 = vadd.f32 %v36, %v779
    %v781 = vpop.f32.mrb[0].mxu0
    %782 = vmatprep.mubr.f32.mxu0 0.0
    %783 = vmatmul.mubr.f32.gmra.mrb[0].mxu0 %v693
    %v784 = vpop.f32.mrb[0].mxu0
    %v785 = vadd.f32 %v41, %v784
    %v786 = vpop.f32.mrb[0].mxu0
    %787 = vmatprep.mubr.f32.mxu0 0.0
    %788 = vmatmul.mubr.f32.gmra.mrb[0].mxu0 %v696
    %v789 = vpop.f32.mrb[0].mxu0
    %v790 = vadd.f32 %v46, %v789
    %v791 = vpop.f32.mrb[0].mxu0
    %792 = vmatprep.mubr.f32.mxu0 0.0
    %793 = vmatmul.mubr.f32.gmra.mrb[0].mxu0 %v699
    %v794 = vpop.f32.mrb[0].mxu0
    %v795 = vadd.f32 %v51, %v794
    %v796 = vpop.f32.mrb[0].mxu0
    %797 = vmatprep.mubr.f32.mxu0 0.0
    %798 = vmatmul.mubr.f32.gmra.mrb[0].mxu0 %v702
    %v799 = vpop.f32.mrb[0].mxu0
    %v800 = vadd.f32 %v56, %v799
    %v801 = vpop.f32.mrb[0].mxu0
    %802 = vmatprep.mubr.f32.mxu0 0.0
    %803 = vmatmul.mubr.f32.gmra.mrb[0].mxu0 %v705
    %v804 = vpop.f32.mrb[0].mxu0
    %v805 = vadd.f32 %v61, %v804
    %v806 = vpop.f32.mrb[0].mxu0
    %807 = vmatprep.mubr.f32.mxu0 0.0
    %808 = vmatmul.mubr.f32.gmra.mrb[0].mxu0 %v708
    %v809 = vpop.f32.mrb[0].mxu0
    %v810 = vadd.f32 %v66, %v809
    %v811 = vpop.f32.mrb[0].mxu0
    %812 = vmatprep.mubr.f32.mxu0 0.0
    %813 = vmatmul.mubr.f32.gmra.mrb[0].mxu0 %v711
    %v814 = vpop.f32.mrb[0].mxu0
    %v815 = vadd.f32 %v71, %v814
    %v816 = vpop.f32.mrb[0].mxu0
    %817 = vdwg.mxu0
    %s818 = scalar_lea.vmem [#allocation2], 256
    %819 = vst [vmem:[%s818] sm:$0xff] %v780
    %820 = vst [vmem:[%s818 + $0x8] sm:$0xff] %v785
    %821 = vst [vmem:[%s818 + $0x10] sm:$0xff] %v790
    %822 = vst [vmem:[%s818 + $0x18] sm:$0xff] %v795
    %823 = vst [vmem:[%s818 + $0x20] sm:$0xff] %v800
    %824 = vst [vmem:[%s818 + $0x28] sm:$0xff] %v805
    %825 = vst [vmem:[%s818 + $0x30] sm:$0xff] %v810
    %826 = vst [vmem:[%s818 + $0x38] sm:$0xff] %v815
    %v827 = vld [vmem:[%s1] sm:$0xff]
    %v828 = vld [vmem:[%s1 + $0x8] sm:$0xff]
    %v829 = vld [vmem:[%s1 + $0x10] sm:$0xff]
    %v830 = vld [vmem:[%s1 + $0x18] sm:$0xff]
    %v831 = vld [vmem:[%s1 + $0x20] sm:$0xff]
    %v832 = vld [vmem:[%s1 + $0x28] sm:$0xff]
    %v833 = vld [vmem:[%s1 + $0x30] sm:$0xff]
    %v834 = vld [vmem:[%s1 + $0x38] sm:$0xff]
    %s835 = scalar_lea.vmem %s0, 160
    %v836 = vld [vmem:[%s835] sm:$0xff]
    %v837 = vld [vmem:[%s835 + $0x8] sm:$0xff]
    %v838 = vld [vmem:[%s835 + $0x10] sm:$0xff]
    %v839 = vld [vmem:[%s835 + $0x18] sm:$0xff]
    %v841 = vsel %vm85, %v827, 0
    %v844 = vsel %vm85, %v828, 0
    %v847 = vsel %vm85, %v829, 0
    %v850 = vsel %vm85, %v830, 0
    %v853 = vsel %vm85, %v831, 0
    %v856 = vsel %vm85, %v832, 0
    %v859 = vsel %vm85, %v833, 0
    %v862 = vsel %vm85, %v834, 0
    %864 = vmatprep.subr.mxu0 0.0
    %865 = vmatpush1.msra.mxu0 %v836
    %866 = vmatprep.subr.mxu0 0.0
    %867 = vmatpush1.msra.mxu0 %v837
    %868 = vmatprep.subr.mxu0 0.0
    %869 = vmatpush1.msra.mxu0 %v838
    %870 = vmatprep.subr.mxu0 0.0
    %871 = vmatpush1.msra.mxu0 %v839
    %872 = vmatprep.subr.mxu0 0.0
    %873 = vmatpush1.msra.mxu0 0.0
    %874 = vmatprep.subr.mxu0 0.0
    %875 = vmatpush1.msra.mxu0 0.0
    %876 = vmatprep.subr.mxu0 0.0
    %877 = vmatpush1.msra.mxu0 0.0
    %878 = vmatprep.subr.mxu0 0.0
    %879 = vmatpush1.msra.mxu0 0.0
    %880 = vmatprep.subr.mxu0 0.0
    %881 = vmatpush1.msra.mxu0 0.0
    %882 = vmatprep.subr.mxu0 0.0
    %883 = vmatpush1.msra.mxu0 0.0
    %884 = vmatprep.subr.mxu0 0.0
    %885 = vmatpush1.msra.mxu0 0.0
    %886 = vmatprep.subr.mxu0 0.0
    %887 = vmatpush1.msra.mxu0 0.0
    %888 = vmatprep.subr.mxu0 0.0
    %889 = vmatpush1.msra.mxu0 0.0
    %890 = vmatprep.subr.mxu0 0.0
    %891 = vmatpush1.msra.mxu0 0.0
    %892 = vmatprep.subr.mxu0 0.0
    %893 = vmatpush1.msra.mxu0 0.0
    %894 = vmatprep.subr.mxu0 0.0
    %895 = vmatpush1.msra.mxu0 0.0
    %896 = vmatprep.subr.mxu0 0.0
    %897 = vmatpush1.msra.mxu0 0.0
    %898 = vmatprep.subr.mxu0 0.0
    %899 = vmatpush1.msra.mxu0 0.0
    %900 = vmatprep.subr.mxu0 0.0
    %901 = vmatpush1.msra.mxu0 0.0
    %902 = vmatprep.subr.mxu0 0.0
    %903 = vmatpush1.msra.mxu0 0.0
    %904 = vmatprep.subr.mxu0 0.0
    %905 = vmatpush1.msra.mxu0 0.0
    %906 = vmatprep.subr.mxu0 0.0
    %907 = vmatpush1.msra.mxu0 0.0
    %908 = vmatprep.subr.mxu0 0.0
    %909 = vmatpush1.msra.mxu0 0.0
    %910 = vmatprep.subr.mxu0 0.0
    %911 = vmatpush1.msra.mxu0 0.0
    %912 = vmatprep.subr.mxu0 0.0
    %913 = vmatpush1.msra.mxu0 0.0
    %914 = vmatprep.subr.mxu0 0.0
    %915 = vmatpush1.msra.mxu0 0.0
    %916 = vmatprep.subr.mxu0 0.0
    %917 = vmatpush1.msra.mxu0 0.0
    %918 = vmatprep.subr.mxu0 0.0
    %919 = vmatpush1.msra.mxu0 0.0
    %920 = vmatprep.subr.mxu0 0.0
    %921 = vmatpush1.msra.mxu0 0.0
    %922 = vmatprep.subr.mxu0 0.0
    %923 = vmatpush1.msra.mxu0 0.0
    %924 = vmatprep.subr.mxu0 0.0
    %925 = vmatpush1.msra.mxu0 0.0
    %926 = vmatprep.subr.mxu0 0.0
    %927 = vmatpush1.msra.mxu0 0.0
    %928 = vmatprep.mubr.f32.mxu0 0.0
    %929 = vmatmul.mubr.f32.gmra.mrb[0].mxu0 %v841
    %v930 = vpop.f32.mrb[0].mxu0
    %v931 = vadd.f32 %v36, %v930
    %v932 = vpop.f32.mrb[0].mxu0
    %933 = vmatprep.mubr.f32.mxu0 0.0
    %934 = vmatmul.mubr.f32.gmra.mrb[0].mxu0 %v844
    %v935 = vpop.f32.mrb[0].mxu0
    %v936 = vadd.f32 %v41, %v935
    %v937 = vpop.f32.mrb[0].mxu0
    %938 = vmatprep.mubr.f32.mxu0 0.0
    %939 = vmatmul.mubr.f32.gmra.mrb[0].mxu0 %v847
    %v940 = vpop.f32.mrb[0].mxu0
    %v941 = vadd.f32 %v46, %v940
    %v942 = vpop.f32.mrb[0].mxu0
    %943 = vmatprep.mubr.f32.mxu0 0.0
    %944 = vmatmul.mubr.f32.gmra.mrb[0].mxu0 %v850
    %v945 = vpop.f32.mrb[0].mxu0
    %v946 = vadd.f32 %v51, %v945
    %v947 = vpop.f32.mrb[0].mxu0
    %948 = vmatprep.mubr.f32.mxu0 0.0
    %949 = vmatmul.mubr.f32.gmra.mrb[0].mxu0 %v853
    %v950 = vpop.f32.mrb[0].mxu0
    %v951 = vadd.f32 %v56, %v950
    %v952 = vpop.f32.mrb[0].mxu0
    %953 = vmatprep.mubr.f32.mxu0 0.0
    %954 = vmatmul.mubr.f32.gmra.mrb[0].mxu0 %v856
    %v955 = vpop.f32.mrb[0].mxu0
    %v956 = vadd.f32 %v61, %v955
    %v957 = vpop.f32.mrb[0].mxu0
    %958 = vmatprep.mubr.f32.mxu0 0.0
    %959 = vmatmul.mubr.f32.gmra.mrb[0].mxu0 %v859
    %v960 = vpop.f32.mrb[0].mxu0
    %v961 = vadd.f32 %v66, %v960
    %v962 = vpop.f32.mrb[0].mxu0
    %963 = vmatprep.mubr.f32.mxu0 0.0
    %964 = vmatmul.mubr.f32.gmra.mrb[0].mxu0 %v862
    %v965 = vpop.f32.mrb[0].mxu0
    %v966 = vadd.f32 %v71, %v965
    %v967 = vpop.f32.mrb[0].mxu0
    %968 = vdwg.mxu0
    %s969 = scalar_lea.vmem [#allocation2], 320
    %970 = vst [vmem:[%s969] sm:$0xff] %v931
    %971 = vst [vmem:[%s969 + $0x8] sm:$0xff] %v936
    %972 = vst [vmem:[%s969 + $0x10] sm:$0xff] %v941
    %973 = vst [vmem:[%s969 + $0x18] sm:$0xff] %v946
    %974 = vst [vmem:[%s969 + $0x20] sm:$0xff] %v951
    %975 = vst [vmem:[%s969 + $0x28] sm:$0xff] %v956
    %976 = vst [vmem:[%s969 + $0x30] sm:$0xff] %v961
    %977 = vst [vmem:[%s969 + $0x38] sm:$0xff] %v966
    %v978 = vld [vmem:[%s1] sm:$0xff]
    %v979 = vld [vmem:[%s1 + $0x8] sm:$0xff]
    %v980 = vld [vmem:[%s1 + $0x10] sm:$0xff]
    %v981 = vld [vmem:[%s1 + $0x18] sm:$0xff]
    %v982 = vld [vmem:[%s1 + $0x20] sm:$0xff]
    %v983 = vld [vmem:[%s1 + $0x28] sm:$0xff]
    %v984 = vld [vmem:[%s1 + $0x30] sm:$0xff]
    %v985 = vld [vmem:[%s1 + $0x38] sm:$0xff]
    %s986 = scalar_lea.vmem %s0, 192
    %v987 = vld [vmem:[%s986] sm:$0xff]
    %v988 = vld [vmem:[%s986 + $0x8] sm:$0xff]
    %v989 = vld [vmem:[%s986 + $0x10] sm:$0xff]
    %v990 = vld [vmem:[%s986 + $0x18] sm:$0xff]
    %v992 = vsel %vm85, %v978, 0
    %v995 = vsel %vm85, %v979, 0
    %v998 = vsel %vm85, %v980, 0
    %v1001 = vsel %vm85, %v981, 0
    %v1004 = vsel %vm85, %v982, 0
    %v1007 = vsel %vm85, %v983, 0
    %v1010 = vsel %vm85, %v984, 0
    %v1013 = vsel %vm85, %v985, 0
    %1015 = vmatprep.subr.mxu0 0.0
    %1016 = vmatpush1.msra.mxu0 %v987
    %1017 = vmatprep.subr.mxu0 0.0
    %1018 = vmatpush1.msra.mxu0 %v988
    %1019 = vmatprep.subr.mxu0 0.0
    %1020 = vmatpush1.msra.mxu0 %v989
    %1021 = vmatprep.subr.mxu0 0.0
    %1022 = vmatpush1.msra.mxu0 %v990
    %1023 = vmatprep.subr.mxu0 0.0
    %1024 = vmatpush1.msra.mxu0 0.0
    %1025 = vmatprep.subr.mxu0 0.0
    %1026 = vmatpush1.msra.mxu0 0.0
    %1027 = vmatprep.subr.mxu0 0.0
    %1028 = vmatpush1.msra.mxu0 0.0
    %1029 = vmatprep.subr.mxu0 0.0
    %1030 = vmatpush1.msra.mxu0 0.0
    %1031 = vmatprep.subr.mxu0 0.0
    %1032 = vmatpush1.msra.mxu0 0.0
    %1033 = vmatprep.subr.mxu0 0.0
    %1034 = vmatpush1.msra.mxu0 0.0
    %1035 = vmatprep.subr.mxu0 0.0
    %1036 = vmatpush1.msra.mxu0 0.0
    %1037 = vmatprep.subr.mxu0 0.0
    %1038 = vmatpush1.msra.mxu0 0.0
    %1039 = vmatprep.subr.mxu0 0.0
    %1040 = vmatpush1.msra.mxu0 0.0
    %1041 = vmatprep.subr.mxu0 0.0
    %1042 = vmatpush1.msra.mxu0 0.0
    %1043 = vmatprep.subr.mxu0 0.0
    %1044 = vmatpush1.msra.mxu0 0.0
    %1045 = vmatprep.subr.mxu0 0.0
    %1046 = vmatpush1.msra.mxu0 0.0
    %1047 = vmatprep.subr.mxu0 0.0
    %1048 = vmatpush1.msra.mxu0 0.0
    %1049 = vmatprep.subr.mxu0 0.0
    %1050 = vmatpush1.msra.mxu0 0.0
    %1051 = vmatprep.subr.mxu0 0.0
    %1052 = vmatpush1.msra.mxu0 0.0
    %1053 = vmatprep.subr.mxu0 0.0
    %1054 = vmatpush1.msra.mxu0 0.0
    %1055 = vmatprep.subr.mxu0 0.0
    %1056 = vmatpush1.msra.mxu0 0.0
    %1057 = vmatprep.subr.mxu0 0.0
    %1058 = vmatpush1.msra.mxu0 0.0
    %1059 = vmatprep.subr.mxu0 0.0
    %1060 = vmatpush1.msra.mxu0 0.0
    %1061 = vmatprep.subr.mxu0 0.0
    %1062 = vmatpush1.msra.mxu0 0.0
    %1063 = vmatprep.subr.mxu0 0.0
    %1064 = vmatpush1.msra.mxu0 0.0
    %1065 = vmatprep.subr.mxu0 0.0
    %1066 = vmatpush1.msra.mxu0 0.0
    %1067 = vmatprep.subr.mxu0 0.0
    %1068 = vmatpush1.msra.mxu0 0.0
    %1069 = vmatprep.subr.mxu0 0.0
    %1070 = vmatpush1.msra.mxu0 0.0
    %1071 = vmatprep.subr.mxu0 0.0
    %1072 = vmatpush1.msra.mxu0 0.0
    %1073 = vmatprep.subr.mxu0 0.0
    %1074 = vmatpush1.msra.mxu0 0.0
    %1075 = vmatprep.subr.mxu0 0.0
    %1076 = vmatpush1.msra.mxu0 0.0
    %1077 = vmatprep.subr.mxu0 0.0
    %1078 = vmatpush1.msra.mxu0 0.0
    %1079 = vmatprep.mubr.f32.mxu0 0.0
    %1080 = vmatmul.mubr.f32.gmra.mrb[0].mxu0 %v992
    %v1081 = vpop.f32.mrb[0].mxu0
    %v1082 = vadd.f32 %v36, %v1081
    %v1083 = vpop.f32.mrb[0].mxu0
    %1084 = vmatprep.mubr.f32.mxu0 0.0
    %1085 = vmatmul.mubr.f32.gmra.mrb[0].mxu0 %v995
    %v1086 = vpop.f32.mrb[0].mxu0
    %v1087 = vadd.f32 %v41, %v1086
    %v1088 = vpop.f32.mrb[0].mxu0
    %1089 = vmatprep.mubr.f32.mxu0 0.0
    %1090 = vmatmul.mubr.f32.gmra.mrb[0].mxu0 %v998
    %v1091 = vpop.f32.mrb[0].mxu0
    %v1092 = vadd.f32 %v46, %v1091
    %v1093 = vpop.f32.mrb[0].mxu0
    %1094 = vmatprep.mubr.f32.mxu0 0.0
    %1095 = vmatmul.mubr.f32.gmra.mrb[0].mxu0 %v1001
    %v1096 = vpop.f32.mrb[0].mxu0
    %v1097 = vadd.f32 %v51, %v1096
    %v1098 = vpop.f32.mrb[0].mxu0
    %1099 = vmatprep.mubr.f32.mxu0 0.0
    %1100 = vmatmul.mubr.f32.gmra.mrb[0].mxu0 %v1004
    %v1101 = vpop.f32.mrb[0].mxu0
    %v1102 = vadd.f32 %v56, %v1101
    %v1103 = vpop.f32.mrb[0].mxu0
    %1104 = vmatprep.mubr.f32.mxu0 0.0
    %1105 = vmatmul.mubr.f32.gmra.mrb[0].mxu0 %v1007
    %v1106 = vpop.f32.mrb[0].mxu0
    %v1107 = vadd.f32 %v61, %v1106
    %v1108 = vpop.f32.mrb[0].mxu0
    %1109 = vmatprep.mubr.f32.mxu0 0.0
    %1110 = vmatmul.mubr.f32.gmra.mrb[0].mxu0 %v1010
    %v1111 = vpop.f32.mrb[0].mxu0
    %v1112 = vadd.f32 %v66, %v1111
    %v1113 = vpop.f32.mrb[0].mxu0
    %1114 = vmatprep.mubr.f32.mxu0 0.0
    %1115 = vmatmul.mubr.f32.gmra.mrb[0].mxu0 %v1013
    %v1116 = vpop.f32.mrb[0].mxu0
    %v1117 = vadd.f32 %v71, %v1116
    %v1118 = vpop.f32.mrb[0].mxu0
    %1119 = vdwg.mxu0
    %s1120 = scalar_lea.vmem [#allocation2], 384
    %1121 = vst [vmem:[%s1120] sm:$0xff] %v1082
    %1122 = vst [vmem:[%s1120 + $0x8] sm:$0xff] %v1087
    %1123 = vst [vmem:[%s1120 + $0x10] sm:$0xff] %v1092
    %1124 = vst [vmem:[%s1120 + $0x18] sm:$0xff] %v1097
    %1125 = vst [vmem:[%s1120 + $0x20] sm:$0xff] %v1102
    %1126 = vst [vmem:[%s1120 + $0x28] sm:$0xff] %v1107
    %1127 = vst [vmem:[%s1120 + $0x30] sm:$0xff] %v1112
    %1128 = vst [vmem:[%s1120 + $0x38] sm:$0xff] %v1117
    %v1129 = vld [vmem:[%s1] sm:$0xff]
    %v1130 = vld [vmem:[%s1 + $0x8] sm:$0xff]
    %v1131 = vld [vmem:[%s1 + $0x10] sm:$0xff]
    %v1132 = vld [vmem:[%s1 + $0x18] sm:$0xff]
    %v1133 = vld [vmem:[%s1 + $0x20] sm:$0xff]
    %v1134 = vld [vmem:[%s1 + $0x28] sm:$0xff]
    %v1135 = vld [vmem:[%s1 + $0x30] sm:$0xff]
    %v1136 = vld [vmem:[%s1 + $0x38] sm:$0xff]
    %s1137 = scalar_lea.vmem %s0, 224
    %v1138 = vld [vmem:[%s1137] sm:$0xff]
    %v1139 = vld [vmem:[%s1137 + $0x8] sm:$0xff]
    %v1140 = vld [vmem:[%s1137 + $0x10] sm:$0xff]
    %v1141 = vld [vmem:[%s1137 + $0x18] sm:$0xff]
    %v1143 = vsel %vm85, %v1129, 0
    %v1146 = vsel %vm85, %v1130, 0
    %v1149 = vsel %vm85, %v1131, 0
    %v1152 = vsel %vm85, %v1132, 0
    %v1155 = vsel %vm85, %v1133, 0
    %v1158 = vsel %vm85, %v1134, 0
    %v1161 = vsel %vm85, %v1135, 0
    %v1164 = vsel %vm85, %v1136, 0
    %1166 = vmatprep.subr.mxu0 0.0
    %1167 = vmatpush1.msra.mxu0 %v1138
    %1168 = vmatprep.subr.mxu0 0.0
    %1169 = vmatpush1.msra.mxu0 %v1139
    %1170 = vmatprep.subr.mxu0 0.0
    %1171 = vmatpush1.msra.mxu0 %v1140
    %1172 = vmatprep.subr.mxu0 0.0
    %1173 = vmatpush1.msra.mxu0 %v1141
    %1174 = vmatprep.subr.mxu0 0.0
    %1175 = vmatpush1.msra.mxu0 0.0
    %1176 = vmatprep.subr.mxu0 0.0
    %1177 = vmatpush1.msra.mxu0 0.0
    %1178 = vmatprep.subr.mxu0 0.0
    %1179 = vmatpush1.msra.mxu0 0.0
    %1180 = vmatprep.subr.mxu0 0.0
    %1181 = vmatpush1.msra.mxu0 0.0
    %1182 = vmatprep.subr.mxu0 0.0
    %1183 = vmatpush1.msra.mxu0 0.0
    %1184 = vmatprep.subr.mxu0 0.0
    %1185 = vmatpush1.msra.mxu0 0.0
    %1186 = vmatprep.subr.mxu0 0.0
    %1187 = vmatpush1.msra.mxu0 0.0
    %1188 = vmatprep.subr.mxu0 0.0
    %1189 = vmatpush1.msra.mxu0 0.0
    %1190 = vmatprep.subr.mxu0 0.0
    %1191 = vmatpush1.msra.mxu0 0.0
    %1192 = vmatprep.subr.mxu0 0.0
    %1193 = vmatpush1.msra.mxu0 0.0
    %1194 = vmatprep.subr.mxu0 0.0
    %1195 = vmatpush1.msra.mxu0 0.0
    %1196 = vmatprep.subr.mxu0 0.0
    %1197 = vmatpush1.msra.mxu0 0.0
    %1198 = vmatprep.subr.mxu0 0.0
    %1199 = vmatpush1.msra.mxu0 0.0
    %1200 = vmatprep.subr.mxu0 0.0
    %1201 = vmatpush1.msra.mxu0 0.0
    %1202 = vmatprep.subr.mxu0 0.0
    %1203 = vmatpush1.msra.mxu0 0.0
    %1204 = vmatprep.subr.mxu0 0.0
    %1205 = vmatpush1.msra.mxu0 0.0
    %1206 = vmatprep.subr.mxu0 0.0
    %1207 = vmatpush1.msra.mxu0 0.0
    %1208 = vmatprep.subr.mxu0 0.0
    %1209 = vmatpush1.msra.mxu0 0.0
    %1210 = vmatprep.subr.mxu0 0.0
    %1211 = vmatpush1.msra.mxu0 0.0
    %1212 = vmatprep.subr.mxu0 0.0
    %1213 = vmatpush1.msra.mxu0 0.0
    %1214 = vmatprep.subr.mxu0 0.0
    %1215 = vmatpush1.msra.mxu0 0.0
    %1216 = vmatprep.subr.mxu0 0.0
    %1217 = vmatpush1.msra.mxu0 0.0
    %1218 = vmatprep.subr.mxu0 0.0
    %1219 = vmatpush1.msra.mxu0 0.0
    %1220 = vmatprep.subr.mxu0 0.0
    %1221 = vmatpush1.msra.mxu0 0.0
    %1222 = vmatprep.subr.mxu0 0.0
    %1223 = vmatpush1.msra.mxu0 0.0
    %1224 = vmatprep.subr.mxu0 0.0
    %1225 = vmatpush1.msra.mxu0 0.0
    %1226 = vmatprep.subr.mxu0 0.0
    %1227 = vmatpush1.msra.mxu0 0.0
    %1228 = vmatprep.subr.mxu0 0.0
    %1229 = vmatpush1.msra.mxu0 0.0
    %1230 = vmatprep.mubr.f32.mxu0 0.0
    %1231 = vmatmul.mubr.f32.gmra.mrb[0].mxu0 %v1143
    %v1232 = vpop.f32.mrb[0].mxu0
    %v1233 = vadd.f32 %v36, %v1232
    %v1234 = vpop.f32.mrb[0].mxu0
    %1235 = vmatprep.mubr.f32.mxu0 0.0
    %1236 = vmatmul.mubr.f32.gmra.mrb[0].mxu0 %v1146
    %v1237 = vpop.f32.mrb[0].mxu0
    %v1238 = vadd.f32 %v41, %v1237
    %v1239 = vpop.f32.mrb[0].mxu0
    %1240 = vmatprep.mubr.f32.mxu0 0.0
    %1241 = vmatmul.mubr.f32.gmra.mrb[0].mxu0 %v1149
    %v1242 = vpop.f32.mrb[0].mxu0
    %v1243 = vadd.f32 %v46, %v1242
    %v1244 = vpop.f32.mrb[0].mxu0
    %1245 = vmatprep.mubr.f32.mxu0 0.0
    %1246 = vmatmul.mubr.f32.gmra.mrb[0].mxu0 %v1152
    %v1247 = vpop.f32.mrb[0].mxu0
    %v1248 = vadd.f32 %v51, %v1247
    %v1249 = vpop.f32.mrb[0].mxu0
    %1250 = vmatprep.mubr.f32.mxu0 0.0
    %1251 = vmatmul.mubr.f32.gmra.mrb[0].mxu0 %v1155
    %v1252 = vpop.f32.mrb[0].mxu0
    %v1253 = vadd.f32 %v56, %v1252
    %v1254 = vpop.f32.mrb[0].mxu0
    %1255 = vmatprep.mubr.f32.mxu0 0.0
    %1256 = vmatmul.mubr.f32.gmra.mrb[0].mxu0 %v1158
    %v1257 = vpop.f32.mrb[0].mxu0
    %v1258 = vadd.f32 %v61, %v1257
    %v1259 = vpop.f32.mrb[0].mxu0
    %1260 = vmatprep.mubr.f32.mxu0 0.0
    %1261 = vmatmul.mubr.f32.gmra.mrb[0].mxu0 %v1161
    %v1262 = vpop.f32.mrb[0].mxu0
    %v1263 = vadd.f32 %v66, %v1262
    %v1264 = vpop.f32.mrb[0].mxu0
    %1265 = vmatprep.mubr.f32.mxu0 0.0
    %1266 = vmatmul.mubr.f32.gmra.mrb[0].mxu0 %v1164
    %v1267 = vpop.f32.mrb[0].mxu0
    %v1268 = vadd.f32 %v71, %v1267
    %v1269 = vpop.f32.mrb[0].mxu0
    %1270 = vdwg.mxu0
    %s1271 = scalar_lea.vmem [#allocation2], 448
    %1272 = vst [vmem:[%s1271] sm:$0xff] %v1233
    %1273 = vst [vmem:[%s1271 + $0x8] sm:$0xff] %v1238
    %1274 = vst [vmem:[%s1271 + $0x10] sm:$0xff] %v1243
    %1275 = vst [vmem:[%s1271 + $0x18] sm:$0xff] %v1248
    %1276 = vst [vmem:[%s1271 + $0x20] sm:$0xff] %v1253
    %1277 = vst [vmem:[%s1271 + $0x28] sm:$0xff] %v1258
    %1278 = vst [vmem:[%s1271 + $0x30] sm:$0xff] %v1263
    %1279 = vst [vmem:[%s1271 + $0x38] sm:$0xff] %v1268
    %v1280 = vld [vmem:[%s4] sm:$0xff]
    %v1281 = vld [vmem:[%s4 + $0x8] sm:$0xff]
    %v1282 = vld [vmem:[#allocation2] sm:$0xff]
    %v1283 = vld [vmem:[#allocation2 + $0x8] sm:$0xff]
    %v1284 = vld [vmem:[#allocation2 + $0x10] sm:$0xff]
    %v1285 = vld [vmem:[#allocation2 + $0x18] sm:$0xff]
    %v1286 = vld [vmem:[#allocation2 + $0x20] sm:$0xff]
    %v1287 = vld [vmem:[#allocation2 + $0x28] sm:$0xff]
    %v1288 = vld [vmem:[#allocation2 + $0x30] sm:$0xff]
    %v1289 = vld [vmem:[#allocation2 + $0x38] sm:$0xff]
    %v1290 = vld [vmem:[%s2] sm:$0xff]
    %v1291 = vld [vmem:[%s2 + $0x8] sm:$0xff]
    %v1292 = vld [vmem:[%s2 + $0x10] sm:$0xff]
    %v1293 = vld [vmem:[%s2 + $0x18] sm:$0xff]
    %v1294 = vld [vmem:[%s2 + $0x20] sm:$0xff]
    %v1295 = vld [vmem:[%s2 + $0x28] sm:$0xff]
    %v1296 = vld [vmem:[%s2 + $0x30] sm:$0xff]
    %v1297 = vld [vmem:[%s2 + $0x38] sm:$0xff]
    %vm1298 = vcmask 130048
    %v1300 = vsel %vm1298, %v1290, 0
    %v1303 = vsel %vm1298, %v1291, 0
    %v1306 = vsel %vm1298, %v1292, 0
    %v1309 = vsel %vm1298, %v1293, 0
    %v1312 = vsel %vm1298, %v1294, 0
    %v1315 = vsel %vm1298, %v1295, 0
    %v1318 = vsel %vm1298, %v1296, 0
    %v1321 = vsel %vm1298, %v1297, 0
    %1323 = vmatprep.subr.mxu0 0.0
    %1324 = vmatpush1.msra.mxu0 0.0
    %1325 = vmatprep.subr.mxu0 0.0
    %1326 = vmatpush1.msra.mxu0 0.0
    %1327 = vmatprep.subr.mxu0 0.0
    %1328 = vmatpush1.msra.mxu0 0.0
    %1329 = vmatprep.subr.mxu0 0.0
    %1330 = vmatpush1.msra.mxu0 0.0
    %1331 = vmatprep.subr.mxu0 0.0
    %1332 = vmatpush1.msra.mxu0 0.0
    %1333 = vmatprep.subr.mxu0 0.0
    %1334 = vmatpush1.msra.mxu0 0.0
    %1335 = vmatprep.subr.mxu0 0.0
    %1336 = vmatpush1.msra.mxu0 0.0
    %1337 = vmatprep.subr.mxu0 0.0
    %1338 = vmatpush1.msra.mxu0 0.0
    %1339 = vmatprep.subr.mxu0 0.0
    %1340 = vmatpush1.msra.mxu0 0.0
    %1341 = vmatprep.subr.mxu0 0.0
    %1342 = vmatpush1.msra.mxu0 0.0
    %1343 = vmatprep.subr.mxu0 0.0
    %1344 = vmatpush1.msra.mxu0 0.0
    %1345 = vmatprep.subr.mxu0 0.0
    %1346 = vmatpush1.msra.mxu0 0.0
    %1347 = vmatprep.subr.mxu0 0.0
    %1348 = vmatpush1.msra.mxu0 0.0
    %1349 = vmatprep.subr.mxu0 0.0
    %1350 = vmatpush1.msra.mxu0 0.0
    %1351 = vmatprep.subr.mxu0 0.0
    %1352 = vmatpush1.msra.mxu0 0.0
    %1353 = vmatprep.subr.mxu0 0.0
    %1354 = vmatpush1.msra.mxu0 0.0
    %1355 = vmatprep.subr.mxu0 0.0
    %1356 = vmatpush1.msra.mxu0 0.0
    %1357 = vmatprep.subr.mxu0 0.0
    %1358 = vmatpush1.msra.mxu0 0.0
    %1359 = vmatprep.subr.mxu0 0.0
    %1360 = vmatpush1.msra.mxu0 0.0
    %1361 = vmatprep.subr.mxu0 0.0
    %1362 = vmatpush1.msra.mxu0 0.0
    %1363 = vmatprep.subr.mxu0 0.0
    %1364 = vmatpush1.msra.mxu0 0.0
    %1365 = vmatprep.subr.mxu0 0.0
    %1366 = vmatpush1.msra.mxu0 0.0
    %1367 = vmatprep.subr.mxu0 0.0
    %1368 = vmatpush1.msra.mxu0 0.0
    %1369 = vmatprep.subr.mxu0 0.0
    %1370 = vmatpush1.msra.mxu0 0.0
    %1371 = vmatprep.subr.mxu0 0.0
    %1372 = vmatpush1.msra.mxu0 0.0
    %1373 = vmatprep.subr.mxu0 0.0
    %1374 = vmatpush1.msra.mxu0 0.0
    %1375 = vmatprep.subr.mxu0 0.0
    %1376 = vmatpush1.msra.mxu0 0.0
    %1377 = vmatprep.subr.mxu0 0.0
    %1378 = vmatpush1.msra.mxu0 0.0
    %1379 = vmatprep.subr.mxu0 0.0
    %1380 = vmatpush1.msra.mxu0 0.0
    %1381 = vmatprep.subr.mxu0 0.0
    %1382 = vmatpush1.msra.mxu0 0.0
    %1383 = vmatprep.subr.mxu0 0.0
    %1384 = vmatpush1.msra.mxu0 0.0
    %1385 = vmatprep.subr.mxu0 0.0
    %1386 = vmatpush1.msra.mxu0 0.0
    %1387 = vmatprep.mubr.f32.mxu0 0.0
    %1388 = vmatmul.mubr.f32.gmra.mrb[0].mxu0 %v1300
    %v1389 = vpop.f32.mrb[0].mxu0
    %v1390 = vadd.f32 0.0, %v1389
    %v1391 = vpop.f32.mrb[0].mxu0
    %1392 = vmatprep.mubr.f32.mxu0 0.0
    %1393 = vmatmul.mubr.f32.gmra.mrb[0].mxu0 %v1303
    %v1394 = vpop.f32.mrb[0].mxu0
    %v1395 = vadd.f32 0.0, %v1394
    %v1396 = vpop.f32.mrb[0].mxu0
    %1397 = vmatprep.mubr.f32.mxu0 0.0
    %1398 = vmatmul.mubr.f32.gmra.mrb[0].mxu0 %v1306
    %v1399 = vpop.f32.mrb[0].mxu0
    %v1400 = vadd.f32 0.0, %v1399
    %v1401 = vpop.f32.mrb[0].mxu0
    %1402 = vmatprep.mubr.f32.mxu0 0.0
    %1403 = vmatmul.mubr.f32.gmra.mrb[0].mxu0 %v1309
    %v1404 = vpop.f32.mrb[0].mxu0
    %v1405 = vadd.f32 0.0, %v1404
    %v1406 = vpop.f32.mrb[0].mxu0
    %1407 = vmatprep.mubr.f32.mxu0 0.0
    %1408 = vmatmul.mubr.f32.gmra.mrb[0].mxu0 %v1312
    %v1409 = vpop.f32.mrb[0].mxu0
    %v1410 = vadd.f32 0.0, %v1409
    %v1411 = vpop.f32.mrb[0].mxu0
    %1412 = vmatprep.mubr.f32.mxu0 0.0
    %1413 = vmatmul.mubr.f32.gmra.mrb[0].mxu0 %v1315
    %v1414 = vpop.f32.mrb[0].mxu0
    %v1415 = vadd.f32 0.0, %v1414
    %v1416 = vpop.f32.mrb[0].mxu0
    %1417 = vmatprep.mubr.f32.mxu0 0.0
    %1418 = vmatmul.mubr.f32.gmra.mrb[0].mxu0 %v1318
    %v1419 = vpop.f32.mrb[0].mxu0
    %v1420 = vadd.f32 0.0, %v1419
    %v1421 = vpop.f32.mrb[0].mxu0
    %1422 = vmatprep.mubr.f32.mxu0 0.0
    %1423 = vmatmul.mubr.f32.gmra.mrb[0].mxu0 %v1321
    %v1424 = vpop.f32.mrb[0].mxu0
    %v1425 = vadd.f32 0.0, %v1424
    %v1426 = vpop.f32.mrb[0].mxu0
    %1427 = vdwg.mxu0
    %v1428 = vadd.f32 %v1282, %v1390
    %v1429 = vadd.f32 %v1283, %v1395
    %v1430 = vadd.f32 %v1284, %v1400
    %v1431 = vadd.f32 %v1285, %v1405
    %v1432 = vadd.f32 %v1286, %v1410
    %v1433 = vadd.f32 %v1287, %v1415
    %v1434 = vadd.f32 %v1288, %v1420
    %v1435 = vadd.f32 %v1289, %v1425
    %v1436 = vmul.f32 %v1428, 0.5
    %v1437 = vmul.f32 %v1429, 0.5
    %v1438 = vtanh.pop %v1436
    %v1439 = vtanh.pop %v1437
    %v1440 = vadd.f32 %v1438, 1.0
    %v1441 = vadd.f32 %v1439, 1.0
    %v1442 = vmul.f32 %v1440, 0.5
    %v1443 = vmul.f32 %v1441, 0.5
    %v1444 = vmul.f32 %v1430, 0.5
    %v1445 = vmul.f32 %v1431, 0.5
    %v1446 = vtanh.pop %v1444
    %v1447 = vtanh.pop %v1445
    %v1448 = vadd.f32 %v1446, 1.0
    %v1449 = vadd.f32 %v1447, 1.0
    %v1450 = vmul.f32 %v1448, 0.5
    %v1451 = vmul.f32 %v1449, 0.5
    %v1452 = vtanh.pop %v1432
    %v1453 = vtanh.pop %v1433
    %v1454 = vmul.f32 %v1434, 0.5
    %v1455 = vmul.f32 %v1435, 0.5
    %v1456 = vtanh.pop %v1454
    %v1457 = vtanh.pop %v1455
    %v1458 = vadd.f32 %v1456, 1.0
    %v1459 = vadd.f32 %v1457, 1.0
    %v1460 = vmul.f32 %v1458, 0.5
    %v1461 = vmul.f32 %v1459, 0.5
    %v1462 = vmul.f32 %v1450, 0.0
    %v1463 = vmul.f32 %v1451, 0.0
    %v1464 = vmul.f32 %v1442, %v1452
    %v1465 = vmul.f32 %v1443, %v1453
    %v1466 = vadd.f32 %v1462, %v1464
    %v1467 = vadd.f32 %v1463, %v1465
    %v1468 = vtanh.pop %v1466
    %v1469 = vtanh.pop %v1467
    %v1470 = vmul.f32 %v1460, %v1468
    %v1471 = vmul.f32 %v1461, %v1469
    %1473 = vset.pattern.permute.xlu0 0
    %1474 = vperm.xlu0 %1473, %v1280
    %v1475 = vpop.permute.xlu0 %1474
    %1478 = vset.pattern.permute.xlu0 0
    %1479 = vperm.xlu0 %1478, %v1281
    %v1480 = vpop.permute.xlu0 %1479
    %v1482 = vmul.f32 %v1470, %v1475
    %v1483 = vmul.f32 %v1471, %v1480
    %v1484 = vadd.f32 %v1482, %v1483
    %v1485 = vrot.slane %v1484, 4
    %v1486 = vadd.f32 %v1484, %v1485
    %v1487 = vrot.slane %v1486, 2
    %v1488 = vadd.f32 %v1486, %v1487
    %v1489 = vrot.slane %v1488, 1
    %v1490 = vadd.f32 %v1488, %v1489
    %v1491 = vld [vmem:[%s365] sm:$0xff]
    %v1492 = vld [vmem:[%s365 + $0x8] sm:$0xff]
    %v1493 = vld [vmem:[%s365 + $0x10] sm:$0xff]
    %v1494 = vld [vmem:[%s365 + $0x18] sm:$0xff]
    %v1495 = vld [vmem:[%s365 + $0x20] sm:$0xff]
    %v1496 = vld [vmem:[%s365 + $0x28] sm:$0xff]
    %v1497 = vld [vmem:[%s365 + $0x30] sm:$0xff]
    %v1498 = vld [vmem:[%s365 + $0x38] sm:$0xff]
    %1499 = vmatprep.subr.mxu0 0.0
    %1500 = vmatpush1.msra.mxu0 %v1470
    %1501 = vmatprep.subr.mxu0 0.0
    %1502 = vmatpush1.msra.mxu0 %v1471
    %1503 = vmatprep.subr.mxu0 0.0
    %1504 = vmatpush1.msra.mxu0 0.0
    %1505 = vmatprep.subr.mxu0 0.0
    %1506 = vmatpush1.msra.mxu0 0.0
    %1507 = vmatprep.subr.mxu0 0.0
    %1508 = vmatpush1.msra.mxu0 0.0
    %1509 = vmatprep.subr.mxu0 0.0
    %1510 = vmatpush1.msra.mxu0 0.0
    %1511 = vmatprep.subr.mxu0 0.0
    %1512 = vmatpush1.msra.mxu0 0.0
    %1513 = vmatprep.subr.mxu0 0.0
    %1514 = vmatpush1.msra.mxu0 0.0
    %1515 = vmatprep.subr.mxu0 0.0
    %1516 = vmatpush1.msra.mxu0 0.0
    %1517 = vmatprep.subr.mxu0 0.0
    %1518 = vmatpush1.msra.mxu0 0.0
    %1519 = vmatprep.subr.mxu0 0.0
    %1520 = vmatpush1.msra.mxu0 0.0
    %1521 = vmatprep.subr.mxu0 0.0
    %1522 = vmatpush1.msra.mxu0 0.0
    %1523 = vmatprep.subr.mxu0 0.0
    %1524 = vmatpush1.msra.mxu0 0.0
    %1525 = vmatprep.subr.mxu0 0.0
    %1526 = vmatpush1.msra.mxu0 0.0
    %1527 = vmatprep.subr.mxu0 0.0
    %1528 = vmatpush1.msra.mxu0 0.0
    %1529 = vmatprep.subr.mxu0 0.0
    %1530 = vmatpush1.msra.mxu0 0.0
    %1531 = vmatprep.subr.mxu0 0.0
    %1532 = vmatpush1.msra.mxu0 0.0
    %1533 = vmatprep.subr.mxu0 0.0
    %1534 = vmatpush1.msra.mxu0 0.0
    %1535 = vmatprep.subr.mxu0 0.0
    %1536 = vmatpush1.msra.mxu0 0.0
    %1537 = vmatprep.subr.mxu0 0.0
    %1538 = vmatpush1.msra.mxu0 0.0
    %1539 = vmatprep.subr.mxu0 0.0
    %1540 = vmatpush1.msra.mxu0 0.0
    %1541 = vmatprep.subr.mxu0 0.0
    %1542 = vmatpush1.msra.mxu0 0.0
    %1543 = vmatprep.subr.mxu0 0.0
    %1544 = vmatpush1.msra.mxu0 0.0
    %1545 = vmatprep.subr.mxu0 0.0
    %1546 = vmatpush1.msra.mxu0 0.0
    %1547 = vmatprep.subr.mxu0 0.0
    %1548 = vmatpush1.msra.mxu0 0.0
    %1549 = vmatprep.subr.mxu0 0.0
    %1550 = vmatpush1.msra.mxu0 0.0
    %1551 = vmatprep.subr.mxu0 0.0
    %1552 = vmatpush1.msra.mxu0 0.0
    %1553 = vmatprep.subr.mxu0 0.0
    %1554 = vmatpush1.msra.mxu0 0.0
    %1555 = vmatprep.subr.mxu0 0.0
    %1556 = vmatpush1.msra.mxu0 0.0
    %1557 = vmatprep.subr.mxu0 0.0
    %1558 = vmatpush1.msra.mxu0 0.0
    %1559 = vmatprep.subr.mxu0 0.0
    %1560 = vmatpush1.msra.mxu0 0.0
    %1561 = vmatprep.subr.mxu0 0.0
    %1562 = vmatpush1.msra.mxu0 0.0
    %1563 = vmatprep.mubr.f32.mxu0 0.0
    %1564 = vmatmul.mubr.f32.gmra.mrb[0].mxu0 %v1300
    %v1565 = vpop.f32.mrb[0].mxu0
    %v1566 = vadd.f32 0.0, %v1565
    %v1567 = vpop.f32.mrb[0].mxu0
    %1568 = vmatprep.mubr.f32.mxu0 0.0
    %1569 = vmatmul.mubr.f32.gmra.mrb[0].mxu0 %v1303
    %v1570 = vpop.f32.mrb[0].mxu0
    %v1571 = vadd.f32 0.0, %v1570
    %v1572 = vpop.f32.mrb[0].mxu0
    %1573 = vmatprep.mubr.f32.mxu0 0.0
    %1574 = vmatmul.mubr.f32.gmra.mrb[0].mxu0 %v1306
    %v1575 = vpop.f32.mrb[0].mxu0
    %v1576 = vadd.f32 0.0, %v1575
    %v1577 = vpop.f32.mrb[0].mxu0
    %1578 = vmatprep.mubr.f32.mxu0 0.0
    %1579 = vmatmul.mubr.f32.gmra.mrb[0].mxu0 %v1309
    %v1580 = vpop.f32.mrb[0].mxu0
    %v1581 = vadd.f32 0.0, %v1580
    %v1582 = vpop.f32.mrb[0].mxu0
    %1583 = vmatprep.mubr.f32.mxu0 0.0
    %1584 = vmatmul.mubr.f32.gmra.mrb[0].mxu0 %v1312
    %v1585 = vpop.f32.mrb[0].mxu0
    %v1586 = vadd.f32 0.0, %v1585
    %v1587 = vpop.f32.mrb[0].mxu0
    %1588 = vmatprep.mubr.f32.mxu0 0.0
    %1589 = vmatmul.mubr.f32.gmra.mrb[0].mxu0 %v1315
    %v1590 = vpop.f32.mrb[0].mxu0
    %v1591 = vadd.f32 0.0, %v1590
    %v1592 = vpop.f32.mrb[0].mxu0
    %1593 = vmatprep.mubr.f32.mxu0 0.0
    %1594 = vmatmul.mubr.f32.gmra.mrb[0].mxu0 %v1318
    %v1595 = vpop.f32.mrb[0].mxu0
    %v1596 = vadd.f32 0.0, %v1595
    %v1597 = vpop.f32.mrb[0].mxu0
    %1598 = vmatprep.mubr.f32.mxu0 0.0
    %1599 = vmatmul.mubr.f32.gmra.mrb[0].mxu0 %v1321
    %v1600 = vpop.f32.mrb[0].mxu0
    %v1601 = vadd.f32 0.0, %v1600
    %v1602 = vpop.f32.mrb[0].mxu0
    %1603 = vdwg.mxu0
    %v1604 = vadd.f32 %v1491, %v1566
    %v1605 = vadd.f32 %v1492, %v1571
    %v1606 = vadd.f32 %v1493, %v1576
    %v1607 = vadd.f32 %v1494, %v1581
    %v1608 = vadd.f32 %v1495, %v1586
    %v1609 = vadd.f32 %v1496, %v1591
    %v1610 = vadd.f32 %v1497, %v1596
    %v1611 = vadd.f32 %v1498, %v1601
    %v1612 = vmul.f32 %v1604, 0.5
    %v1613 = vmul.f32 %v1605, 0.5
    %v1614 = vtanh.pop %v1612
    %v1615 = vtanh.pop %v1613
    %v1616 = vadd.f32 %v1614, 1.0
    %v1617 = vadd.f32 %v1615, 1.0
    %v1618 = vmul.f32 %v1616, 0.5
    %v1619 = vmul.f32 %v1617, 0.5
    %v1620 = vmul.f32 %v1606, 0.5
    %v1621 = vmul.f32 %v1607, 0.5
    %v1622 = vtanh.pop %v1620
    %v1623 = vtanh.pop %v1621
    %v1624 = vadd.f32 %v1622, 1.0
    %v1625 = vadd.f32 %v1623, 1.0
    %v1626 = vmul.f32 %v1624, 0.5
    %v1627 = vmul.f32 %v1625, 0.5
    %v1628 = vtanh.pop %v1608
    %v1629 = vtanh.pop %v1609
    %v1630 = vmul.f32 %v1610, 0.5
    %v1631 = vmul.f32 %v1611, 0.5
    %v1632 = vtanh.pop %v1630
    %v1633 = vtanh.pop %v1631
    %v1634 = vadd.f32 %v1632, 1.0
    %v1635 = vadd.f32 %v1633, 1.0
    %v1636 = vmul.f32 %v1634, 0.5
    %v1637 = vmul.f32 %v1635, 0.5
    %v1638 = vmul.f32 %v1626, %v1466
    %v1639 = vmul.f32 %v1627, %v1467
    %v1640 = vmul.f32 %v1618, %v1628
    %v1641 = vmul.f32 %v1619, %v1629
    %v1642 = vadd.f32 %v1638, %v1640
    %v1643 = vadd.f32 %v1639, %v1641
    %v1644 = vtanh.pop %v1642
    %v1645 = vtanh.pop %v1643
    %v1646 = vmul.f32 %v1636, %v1644
    %v1647 = vmul.f32 %v1637, %v1645
    %v1648 = vmul.f32 %v1646, %v1475
    %v1649 = vmul.f32 %v1647, %v1480
    %v1650 = vadd.f32 %v1648, %v1649
    %v1651 = vrot.slane %v1650, 4
    %v1652 = vadd.f32 %v1650, %v1651
    %v1653 = vrot.slane %v1652, 2
    %v1654 = vadd.f32 %v1652, %v1653
    %v1655 = vrot.slane %v1654, 1
    %v1656 = vadd.f32 %v1654, %v1655
    %v1657 = vld [vmem:[%s516] sm:$0xff]
    %v1658 = vld [vmem:[%s516 + $0x8] sm:$0xff]
    %v1659 = vld [vmem:[%s516 + $0x10] sm:$0xff]
    %v1660 = vld [vmem:[%s516 + $0x18] sm:$0xff]
    %v1661 = vld [vmem:[%s516 + $0x20] sm:$0xff]
    %v1662 = vld [vmem:[%s516 + $0x28] sm:$0xff]
    %v1663 = vld [vmem:[%s516 + $0x30] sm:$0xff]
    %v1664 = vld [vmem:[%s516 + $0x38] sm:$0xff]
    %1665 = vmatprep.subr.mxu0 0.0
    %1666 = vmatpush1.msra.mxu0 %v1646
    %1667 = vmatprep.subr.mxu0 0.0
    %1668 = vmatpush1.msra.mxu0 %v1647
    %1669 = vmatprep.subr.mxu0 0.0
    %1670 = vmatpush1.msra.mxu0 0.0
    %1671 = vmatprep.subr.mxu0 0.0
    %1672 = vmatpush1.msra.mxu0 0.0
    %1673 = vmatprep.subr.mxu0 0.0
    %1674 = vmatpush1.msra.mxu0 0.0
    %1675 = vmatprep.subr.mxu0 0.0
    %1676 = vmatpush1.msra.mxu0 0.0
    %1677 = vmatprep.subr.mxu0 0.0
    %1678 = vmatpush1.msra.mxu0 0.0
    %1679 = vmatprep.subr.mxu0 0.0
    %1680 = vmatpush1.msra.mxu0 0.0
    %1681 = vmatprep.subr.mxu0 0.0
    %1682 = vmatpush1.msra.mxu0 0.0
    %1683 = vmatprep.subr.mxu0 0.0
    %1684 = vmatpush1.msra.mxu0 0.0
    %1685 = vmatprep.subr.mxu0 0.0
    %1686 = vmatpush1.msra.mxu0 0.0
    %1687 = vmatprep.subr.mxu0 0.0
    %1688 = vmatpush1.msra.mxu0 0.0
    %1689 = vmatprep.subr.mxu0 0.0
    %1690 = vmatpush1.msra.mxu0 0.0
    %1691 = vmatprep.subr.mxu0 0.0
    %1692 = vmatpush1.msra.mxu0 0.0
    %1693 = vmatprep.subr.mxu0 0.0
    %1694 = vmatpush1.msra.mxu0 0.0
    %1695 = vmatprep.subr.mxu0 0.0
    %1696 = vmatpush1.msra.mxu0 0.0
    %1697 = vmatprep.subr.mxu0 0.0
    %1698 = vmatpush1.msra.mxu0 0.0
    %1699 = vmatprep.subr.mxu0 0.0
    %1700 = vmatpush1.msra.mxu0 0.0
    %1701 = vmatprep.subr.mxu0 0.0
    %1702 = vmatpush1.msra.mxu0 0.0
    %1703 = vmatprep.subr.mxu0 0.0
    %1704 = vmatpush1.msra.mxu0 0.0
    %1705 = vmatprep.subr.mxu0 0.0
    %1706 = vmatpush1.msra.mxu0 0.0
    %1707 = vmatprep.subr.mxu0 0.0
    %1708 = vmatpush1.msra.mxu0 0.0
    %1709 = vmatprep.subr.mxu0 0.0
    %1710 = vmatpush1.msra.mxu0 0.0
    %1711 = vmatprep.subr.mxu0 0.0
    %1712 = vmatpush1.msra.mxu0 0.0
    %1713 = vmatprep.subr.mxu0 0.0
    %1714 = vmatpush1.msra.mxu0 0.0
    %1715 = vmatprep.subr.mxu0 0.0
    %1716 = vmatpush1.msra.mxu0 0.0
    %1717 = vmatprep.subr.mxu0 0.0
    %1718 = vmatpush1.msra.mxu0 0.0
    %1719 = vmatprep.subr.mxu0 0.0
    %1720 = vmatpush1.msra.mxu0 0.0
    %1721 = vmatprep.subr.mxu0 0.0
    %1722 = vmatpush1.msra.mxu0 0.0
    %1723 = vmatprep.subr.mxu0 0.0
    %1724 = vmatpush1.msra.mxu0 0.0
    %1725 = vmatprep.subr.mxu0 0.0
    %1726 = vmatpush1.msra.mxu0 0.0
    %1727 = vmatprep.subr.mxu0 0.0
    %1728 = vmatpush1.msra.mxu0 0.0
    %1729 = vmatprep.mubr.f32.mxu0 0.0
    %1730 = vmatmul.mubr.f32.gmra.mrb[0].mxu0 %v1300
    %v1731 = vpop.f32.mrb[0].mxu0
    %v1732 = vadd.f32 0.0, %v1731
    %v1733 = vpop.f32.mrb[0].mxu0
    %1734 = vmatprep.mubr.f32.mxu0 0.0
    %1735 = vmatmul.mubr.f32.gmra.mrb[0].mxu0 %v1303
    %v1736 = vpop.f32.mrb[0].mxu0
    %v1737 = vadd.f32 0.0, %v1736
    %v1738 = vpop.f32.mrb[0].mxu0
    %1739 = vmatprep.mubr.f32.mxu0 0.0
    %1740 = vmatmul.mubr.f32.gmra.mrb[0].mxu0 %v1306
    %v1741 = vpop.f32.mrb[0].mxu0
    %v1742 = vadd.f32 0.0, %v1741
    %v1743 = vpop.f32.mrb[0].mxu0
    %1744 = vmatprep.mubr.f32.mxu0 0.0
    %1745 = vmatmul.mubr.f32.gmra.mrb[0].mxu0 %v1309
    %v1746 = vpop.f32.mrb[0].mxu0
    %v1747 = vadd.f32 0.0, %v1746
    %v1748 = vpop.f32.mrb[0].mxu0
    %1749 = vmatprep.mubr.f32.mxu0 0.0
    %1750 = vmatmul.mubr.f32.gmra.mrb[0].mxu0 %v1312
    %v1751 = vpop.f32.mrb[0].mxu0
    %v1752 = vadd.f32 0.0, %v1751
    %v1753 = vpop.f32.mrb[0].mxu0
    %1754 = vmatprep.mubr.f32.mxu0 0.0
    %1755 = vmatmul.mubr.f32.gmra.mrb[0].mxu0 %v1315
    %v1756 = vpop.f32.mrb[0].mxu0
    %v1757 = vadd.f32 0.0, %v1756
    %v1758 = vpop.f32.mrb[0].mxu0
    %1759 = vmatprep.mubr.f32.mxu0 0.0
    %1760 = vmatmul.mubr.f32.gmra.mrb[0].mxu0 %v1318
    %v1761 = vpop.f32.mrb[0].mxu0
    %v1762 = vadd.f32 0.0, %v1761
    %v1763 = vpop.f32.mrb[0].mxu0
    %1764 = vmatprep.mubr.f32.mxu0 0.0
    %1765 = vmatmul.mubr.f32.gmra.mrb[0].mxu0 %v1321
    %v1766 = vpop.f32.mrb[0].mxu0
    %v1767 = vadd.f32 0.0, %v1766
    %v1768 = vpop.f32.mrb[0].mxu0
    %1769 = vdwg.mxu0
    %v1770 = vadd.f32 %v1657, %v1732
    %v1771 = vadd.f32 %v1658, %v1737
    %v1772 = vadd.f32 %v1659, %v1742
    %v1773 = vadd.f32 %v1660, %v1747
    %v1774 = vadd.f32 %v1661, %v1752
    %v1775 = vadd.f32 %v1662, %v1757
    %v1776 = vadd.f32 %v1663, %v1762
    %v1777 = vadd.f32 %v1664, %v1767
    %v1778 = vmul.f32 %v1770, 0.5
    %v1779 = vmul.f32 %v1771, 0.5
    %v1780 = vtanh.pop %v1778
    %v1781 = vtanh.pop %v1779
    %v1782 = vadd.f32 %v1780, 1.0
    %v1783 = vadd.f32 %v1781, 1.0
    %v1784 = vmul.f32 %v1782, 0.5
    %v1785 = vmul.f32 %v1783, 0.5
    %v1786 = vmul.f32 %v1772, 0.5
    %v1787 = vmul.f32 %v1773, 0.5
    %v1788 = vtanh.pop %v1786
    %v1789 = vtanh.pop %v1787
    %v1790 = vadd.f32 %v1788, 1.0
    %v1791 = vadd.f32 %v1789, 1.0
    %v1792 = vmul.f32 %v1790, 0.5
    %v1793 = vmul.f32 %v1791, 0.5
    %v1794 = vtanh.pop %v1774
    %v1795 = vtanh.pop %v1775
    %v1796 = vmul.f32 %v1776, 0.5
    %v1797 = vmul.f32 %v1777, 0.5
    %v1798 = vtanh.pop %v1796
    %v1799 = vtanh.pop %v1797
    %v1800 = vadd.f32 %v1798, 1.0
    %v1801 = vadd.f32 %v1799, 1.0
    %v1802 = vmul.f32 %v1800, 0.5
    %v1803 = vmul.f32 %v1801, 0.5
    %v1804 = vmul.f32 %v1792, %v1642
    %v1805 = vmul.f32 %v1793, %v1643
    %v1806 = vmul.f32 %v1784, %v1794
    %v1807 = vmul.f32 %v1785, %v1795
    %v1808 = vadd.f32 %v1804, %v1806
    %v1809 = vadd.f32 %v1805, %v1807
    %v1810 = vtanh.pop %v1808
    %v1811 = vtanh.pop %v1809
    %v1812 = vmul.f32 %v1802, %v1810
    %v1813 = vmul.f32 %v1803, %v1811
    %v1814 = vmul.f32 %v1812, %v1475
    %v1815 = vmul.f32 %v1813, %v1480
    %v1816 = vadd.f32 %v1814, %v1815
    %v1817 = vrot.slane %v1816, 4
    %v1818 = vadd.f32 %v1816, %v1817
    %v1819 = vrot.slane %v1818, 2
    %v1820 = vadd.f32 %v1818, %v1819
    %v1821 = vrot.slane %v1820, 1
    %v1822 = vadd.f32 %v1820, %v1821
    %v1823 = vld [vmem:[%s667] sm:$0xff]
    %v1824 = vld [vmem:[%s667 + $0x8] sm:$0xff]
    %v1825 = vld [vmem:[%s667 + $0x10] sm:$0xff]
    %v1826 = vld [vmem:[%s667 + $0x18] sm:$0xff]
    %v1827 = vld [vmem:[%s667 + $0x20] sm:$0xff]
    %v1828 = vld [vmem:[%s667 + $0x28] sm:$0xff]
    %v1829 = vld [vmem:[%s667 + $0x30] sm:$0xff]
    %v1830 = vld [vmem:[%s667 + $0x38] sm:$0xff]
    %1831 = vmatprep.subr.mxu0 0.0
    %1832 = vmatpush1.msra.mxu0 %v1812
    %1833 = vmatprep.subr.mxu0 0.0
    %1834 = vmatpush1.msra.mxu0 %v1813
    %1835 = vmatprep.subr.mxu0 0.0
    %1836 = vmatpush1.msra.mxu0 0.0
    %1837 = vmatprep.subr.mxu0 0.0
    %1838 = vmatpush1.msra.mxu0 0.0
    %1839 = vmatprep.subr.mxu0 0.0
    %1840 = vmatpush1.msra.mxu0 0.0
    %1841 = vmatprep.subr.mxu0 0.0
    %1842 = vmatpush1.msra.mxu0 0.0
    %1843 = vmatprep.subr.mxu0 0.0
    %1844 = vmatpush1.msra.mxu0 0.0
    %1845 = vmatprep.subr.mxu0 0.0
    %1846 = vmatpush1.msra.mxu0 0.0
    %1847 = vmatprep.subr.mxu0 0.0
    %1848 = vmatpush1.msra.mxu0 0.0
    %1849 = vmatprep.subr.mxu0 0.0
    %1850 = vmatpush1.msra.mxu0 0.0
    %1851 = vmatprep.subr.mxu0 0.0
    %1852 = vmatpush1.msra.mxu0 0.0
    %1853 = vmatprep.subr.mxu0 0.0
    %1854 = vmatpush1.msra.mxu0 0.0
    %1855 = vmatprep.subr.mxu0 0.0
    %1856 = vmatpush1.msra.mxu0 0.0
    %1857 = vmatprep.subr.mxu0 0.0
    %1858 = vmatpush1.msra.mxu0 0.0
    %1859 = vmatprep.subr.mxu0 0.0
    %1860 = vmatpush1.msra.mxu0 0.0
    %1861 = vmatprep.subr.mxu0 0.0
    %1862 = vmatpush1.msra.mxu0 0.0
    %1863 = vmatprep.subr.mxu0 0.0
    %1864 = vmatpush1.msra.mxu0 0.0
    %1865 = vmatprep.subr.mxu0 0.0
    %1866 = vmatpush1.msra.mxu0 0.0
    %1867 = vmatprep.subr.mxu0 0.0
    %1868 = vmatpush1.msra.mxu0 0.0
    %1869 = vmatprep.subr.mxu0 0.0
    %1870 = vmatpush1.msra.mxu0 0.0
    %1871 = vmatprep.subr.mxu0 0.0
    %1872 = vmatpush1.msra.mxu0 0.0
    %1873 = vmatprep.subr.mxu0 0.0
    %1874 = vmatpush1.msra.mxu0 0.0
    %1875 = vmatprep.subr.mxu0 0.0
    %1876 = vmatpush1.msra.mxu0 0.0
    %1877 = vmatprep.subr.mxu0 0.0
    %1878 = vmatpush1.msra.mxu0 0.0
    %1879 = vmatprep.subr.mxu0 0.0
    %1880 = vmatpush1.msra.mxu0 0.0
    %1881 = vmatprep.subr.mxu0 0.0
    %1882 = vmatpush1.msra.mxu0 0.0
    %1883 = vmatprep.subr.mxu0 0.0
    %1884 = vmatpush1.msra.mxu0 0.0
    %1885 = vmatprep.subr.mxu0 0.0
    %1886 = vmatpush1.msra.mxu0 0.0
    %1887 = vmatprep.subr.mxu0 0.0
    %1888 = vmatpush1.msra.mxu0 0.0
    %1889 = vmatprep.subr.mxu0 0.0
    %1890 = vmatpush1.msra.mxu0 0.0
    %1891 = vmatprep.subr.mxu0 0.0
    %1892 = vmatpush1.msra.mxu0 0.0
    %1893 = vmatprep.subr.mxu0 0.0
    %1894 = vmatpush1.msra.mxu0 0.0
    %1895 = vmatprep.mubr.f32.mxu0 0.0
    %1896 = vmatmul.mubr.f32.gmra.mrb[0].mxu0 %v1300
    %v1897 = vpop.f32.mrb[0].mxu0
    %v1898 = vadd.f32 0.0, %v1897
    %v1899 = vpop.f32.mrb[0].mxu0
    %1900 = vmatprep.mubr.f32.mxu0 0.0
    %1901 = vmatmul.mubr.f32.gmra.mrb[0].mxu0 %v1303
    %v1902 = vpop.f32.mrb[0].mxu0
    %v1903 = vadd.f32 0.0, %v1902
    %v1904 = vpop.f32.mrb[0].mxu0
    %1905 = vmatprep.mubr.f32.mxu0 0.0
    %1906 = vmatmul.mubr.f32.gmra.mrb[0].mxu0 %v1306
    %v1907 = vpop.f32.mrb[0].mxu0
    %v1908 = vadd.f32 0.0, %v1907
    %v1909 = vpop.f32.mrb[0].mxu0
    %1910 = vmatprep.mubr.f32.mxu0 0.0
    %1911 = vmatmul.mubr.f32.gmra.mrb[0].mxu0 %v1309
    %v1912 = vpop.f32.mrb[0].mxu0
    %v1913 = vadd.f32 0.0, %v1912
    %v1914 = vpop.f32.mrb[0].mxu0
    %1915 = vmatprep.mubr.f32.mxu0 0.0
    %1916 = vmatmul.mubr.f32.gmra.mrb[0].mxu0 %v1312
    %v1917 = vpop.f32.mrb[0].mxu0
    %v1918 = vadd.f32 0.0, %v1917
    %v1919 = vpop.f32.mrb[0].mxu0
    %1920 = vmatprep.mubr.f32.mxu0 0.0
    %1921 = vmatmul.mubr.f32.gmra.mrb[0].mxu0 %v1315
    %v1922 = vpop.f32.mrb[0].mxu0
    %v1923 = vadd.f32 0.0, %v1922
    %v1924 = vpop.f32.mrb[0].mxu0
    %1925 = vmatprep.mubr.f32.mxu0 0.0
    %1926 = vmatmul.mubr.f32.gmra.mrb[0].mxu0 %v1318
    %v1927 = vpop.f32.mrb[0].mxu0
    %v1928 = vadd.f32 0.0, %v1927
    %v1929 = vpop.f32.mrb[0].mxu0
    %1930 = vmatprep.mubr.f32.mxu0 0.0
    %1931 = vmatmul.mubr.f32.gmra.mrb[0].mxu0 %v1321
    %v1932 = vpop.f32.mrb[0].mxu0
    %v1933 = vadd.f32 0.0, %v1932
    %v1934 = vpop.f32.mrb[0].mxu0
    %1935 = vdwg.mxu0
    %v1936 = vadd.f32 %v1823, %v1898
    %v1937 = vadd.f32 %v1824, %v1903
    %v1938 = vadd.f32 %v1825, %v1908
    %v1939 = vadd.f32 %v1826, %v1913
    %v1940 = vadd.f32 %v1827, %v1918
    %v1941 = vadd.f32 %v1828, %v1923
    %v1942 = vadd.f32 %v1829, %v1928
    %v1943 = vadd.f32 %v1830, %v1933
    %v1944 = vmul.f32 %v1936, 0.5
    %v1945 = vmul.f32 %v1937, 0.5
    %v1946 = vtanh.pop %v1944
    %v1947 = vtanh.pop %v1945
    %v1948 = vadd.f32 %v1946, 1.0
    %v1949 = vadd.f32 %v1947, 1.0
    %v1950 = vmul.f32 %v1948, 0.5
    %v1951 = vmul.f32 %v1949, 0.5
    %v1952 = vmul.f32 %v1938, 0.5
    %v1953 = vmul.f32 %v1939, 0.5
    %v1954 = vtanh.pop %v1952
    %v1955 = vtanh.pop %v1953
    %v1956 = vadd.f32 %v1954, 1.0
    %v1957 = vadd.f32 %v1955, 1.0
    %v1958 = vmul.f32 %v1956, 0.5
    %v1959 = vmul.f32 %v1957, 0.5
    %v1960 = vtanh.pop %v1940
    %v1961 = vtanh.pop %v1941
    %v1962 = vmul.f32 %v1942, 0.5
    %v1963 = vmul.f32 %v1943, 0.5
    %v1964 = vtanh.pop %v1962
    %v1965 = vtanh.pop %v1963
    %v1966 = vadd.f32 %v1964, 1.0
    %v1967 = vadd.f32 %v1965, 1.0
    %v1968 = vmul.f32 %v1966, 0.5
    %v1969 = vmul.f32 %v1967, 0.5
    %v1970 = vmul.f32 %v1958, %v1808
    %v1971 = vmul.f32 %v1959, %v1809
    %v1972 = vmul.f32 %v1950, %v1960
    %v1973 = vmul.f32 %v1951, %v1961
    %v1974 = vadd.f32 %v1970, %v1972
    %v1975 = vadd.f32 %v1971, %v1973
    %v1976 = vtanh.pop %v1974
    %v1977 = vtanh.pop %v1975
    %v1978 = vmul.f32 %v1968, %v1976
    %v1979 = vmul.f32 %v1969, %v1977
    %v1980 = vmul.f32 %v1978, %v1475
    %v1981 = vmul.f32 %v1979, %v1480
    %v1982 = vadd.f32 %v1980, %v1981
    %v1983 = vrot.slane %v1982, 4
    %v1984 = vadd.f32 %v1982, %v1983
    %v1985 = vrot.slane %v1984, 2
    %v1986 = vadd.f32 %v1984, %v1985
    %v1987 = vrot.slane %v1986, 1
    %v1988 = vadd.f32 %v1986, %v1987
    %v1989 = vld [vmem:[%s818] sm:$0xff]
    %v1990 = vld [vmem:[%s818 + $0x8] sm:$0xff]
    %v1991 = vld [vmem:[%s818 + $0x10] sm:$0xff]
    %v1992 = vld [vmem:[%s818 + $0x18] sm:$0xff]
    %v1993 = vld [vmem:[%s818 + $0x20] sm:$0xff]
    %v1994 = vld [vmem:[%s818 + $0x28] sm:$0xff]
    %v1995 = vld [vmem:[%s818 + $0x30] sm:$0xff]
    %v1996 = vld [vmem:[%s818 + $0x38] sm:$0xff]
    %1997 = vmatprep.subr.mxu0 0.0
    %1998 = vmatpush1.msra.mxu0 %v1978
    %1999 = vmatprep.subr.mxu0 0.0
    %2000 = vmatpush1.msra.mxu0 %v1979
    %2001 = vmatprep.subr.mxu0 0.0
    %2002 = vmatpush1.msra.mxu0 0.0
    %2003 = vmatprep.subr.mxu0 0.0
    %2004 = vmatpush1.msra.mxu0 0.0
    %2005 = vmatprep.subr.mxu0 0.0
    %2006 = vmatpush1.msra.mxu0 0.0
    %2007 = vmatprep.subr.mxu0 0.0
    %2008 = vmatpush1.msra.mxu0 0.0
    %2009 = vmatprep.subr.mxu0 0.0
    %2010 = vmatpush1.msra.mxu0 0.0
    %2011 = vmatprep.subr.mxu0 0.0
    %2012 = vmatpush1.msra.mxu0 0.0
    %2013 = vmatprep.subr.mxu0 0.0
    %2014 = vmatpush1.msra.mxu0 0.0
    %2015 = vmatprep.subr.mxu0 0.0
    %2016 = vmatpush1.msra.mxu0 0.0
    %2017 = vmatprep.subr.mxu0 0.0
    %2018 = vmatpush1.msra.mxu0 0.0
    %2019 = vmatprep.subr.mxu0 0.0
    %2020 = vmatpush1.msra.mxu0 0.0
    %2021 = vmatprep.subr.mxu0 0.0
    %2022 = vmatpush1.msra.mxu0 0.0
    %2023 = vmatprep.subr.mxu0 0.0
    %2024 = vmatpush1.msra.mxu0 0.0
    %2025 = vmatprep.subr.mxu0 0.0
    %2026 = vmatpush1.msra.mxu0 0.0
    %2027 = vmatprep.subr.mxu0 0.0
    %2028 = vmatpush1.msra.mxu0 0.0
    %2029 = vmatprep.subr.mxu0 0.0
    %2030 = vmatpush1.msra.mxu0 0.0
    %2031 = vmatprep.subr.mxu0 0.0
    %2032 = vmatpush1.msra.mxu0 0.0
    %2033 = vmatprep.subr.mxu0 0.0
    %2034 = vmatpush1.msra.mxu0 0.0
    %2035 = vmatprep.subr.mxu0 0.0
    %2036 = vmatpush1.msra.mxu0 0.0
    %2037 = vmatprep.subr.mxu0 0.0
    %2038 = vmatpush1.msra.mxu0 0.0
    %2039 = vmatprep.subr.mxu0 0.0
    %2040 = vmatpush1.msra.mxu0 0.0
    %2041 = vmatprep.subr.mxu0 0.0
    %2042 = vmatpush1.msra.mxu0 0.0
    %2043 = vmatprep.subr.mxu0 0.0
    %2044 = vmatpush1.msra.mxu0 0.0
    %2045 = vmatprep.subr.mxu0 0.0
    %2046 = vmatpush1.msra.mxu0 0.0
    %2047 = vmatprep.subr.mxu0 0.0
    %2048 = vmatpush1.msra.mxu0 0.0
    %2049 = vmatprep.subr.mxu0 0.0
    %2050 = vmatpush1.msra.mxu0 0.0
    %2051 = vmatprep.subr.mxu0 0.0
    %2052 = vmatpush1.msra.mxu0 0.0
    %2053 = vmatprep.subr.mxu0 0.0
    %2054 = vmatpush1.msra.mxu0 0.0
    %2055 = vmatprep.subr.mxu0 0.0
    %2056 = vmatpush1.msra.mxu0 0.0
    %2057 = vmatprep.subr.mxu0 0.0
    %2058 = vmatpush1.msra.mxu0 0.0
    %2059 = vmatprep.subr.mxu0 0.0
    %2060 = vmatpush1.msra.mxu0 0.0
    %2061 = vmatprep.mubr.f32.mxu0 0.0
    %2062 = vmatmul.mubr.f32.gmra.mrb[0].mxu0 %v1300
    %v2063 = vpop.f32.mrb[0].mxu0
    %v2064 = vadd.f32 0.0, %v2063
    %v2065 = vpop.f32.mrb[0].mxu0
    %2066 = vmatprep.mubr.f32.mxu0 0.0
    %2067 = vmatmul.mubr.f32.gmra.mrb[0].mxu0 %v1303
    %v2068 = vpop.f32.mrb[0].mxu0
    %v2069 = vadd.f32 0.0, %v2068
    %v2070 = vpop.f32.mrb[0].mxu0
    %2071 = vmatprep.mubr.f32.mxu0 0.0
    %2072 = vmatmul.mubr.f32.gmra.mrb[0].mxu0 %v1306
    %v2073 = vpop.f32.mrb[0].mxu0
    %v2074 = vadd.f32 0.0, %v2073
    %v2075 = vpop.f32.mrb[0].mxu0
    %2076 = vmatprep.mubr.f32.mxu0 0.0
    %2077 = vmatmul.mubr.f32.gmra.mrb[0].mxu0 %v1309
    %v2078 = vpop.f32.mrb[0].mxu0
    %v2079 = vadd.f32 0.0, %v2078
    %v2080 = vpop.f32.mrb[0].mxu0
    %2081 = vmatprep.mubr.f32.mxu0 0.0
    %2082 = vmatmul.mubr.f32.gmra.mrb[0].mxu0 %v1312
    %v2083 = vpop.f32.mrb[0].mxu0
    %v2084 = vadd.f32 0.0, %v2083
    %v2085 = vpop.f32.mrb[0].mxu0
    %2086 = vmatprep.mubr.f32.mxu0 0.0
    %2087 = vmatmul.mubr.f32.gmra.mrb[0].mxu0 %v1315
    %v2088 = vpop.f32.mrb[0].mxu0
    %v2089 = vadd.f32 0.0, %v2088
    %v2090 = vpop.f32.mrb[0].mxu0
    %2091 = vmatprep.mubr.f32.mxu0 0.0
    %2092 = vmatmul.mubr.f32.gmra.mrb[0].mxu0 %v1318
    %v2093 = vpop.f32.mrb[0].mxu0
    %v2094 = vadd.f32 0.0, %v2093
    %v2095 = vpop.f32.mrb[0].mxu0
    %2096 = vmatprep.mubr.f32.mxu0 0.0
    %2097 = vmatmul.mubr.f32.gmra.mrb[0].mxu0 %v1321
    %v2098 = vpop.f32.mrb[0].mxu0
    %v2099 = vadd.f32 0.0, %v2098
    %v2100 = vpop.f32.mrb[0].mxu0
    %2101 = vdwg.mxu0
    %v2102 = vadd.f32 %v1989, %v2064
    %v2103 = vadd.f32 %v1990, %v2069
    %v2104 = vadd.f32 %v1991, %v2074
    %v2105 = vadd.f32 %v1992, %v2079
    %v2106 = vadd.f32 %v1993, %v2084
    %v2107 = vadd.f32 %v1994, %v2089
    %v2108 = vadd.f32 %v1995, %v2094
    %v2109 = vadd.f32 %v1996, %v2099
    %v2110 = vmul.f32 %v2102, 0.5
    %v2111 = vmul.f32 %v2103, 0.5
    %v2112 = vtanh.pop %v2110
    %v2113 = vtanh.pop %v2111
    %v2114 = vadd.f32 %v2112, 1.0
    %v2115 = vadd.f32 %v2113, 1.0
    %v2116 = vmul.f32 %v2114, 0.5
    %v2117 = vmul.f32 %v2115, 0.5
    %v2118 = vmul.f32 %v2104, 0.5
    %v2119 = vmul.f32 %v2105, 0.5
    %v2120 = vtanh.pop %v2118
    %v2121 = vtanh.pop %v2119
    %v2122 = vadd.f32 %v2120, 1.0
    %v2123 = vadd.f32 %v2121, 1.0
    %v2124 = vmul.f32 %v2122, 0.5
    %v2125 = vmul.f32 %v2123, 0.5
    %v2126 = vtanh.pop %v2106
    %v2127 = vtanh.pop %v2107
    %v2128 = vmul.f32 %v2108, 0.5
    %v2129 = vmul.f32 %v2109, 0.5
    %v2130 = vtanh.pop %v2128
    %v2131 = vtanh.pop %v2129
    %v2132 = vadd.f32 %v2130, 1.0
    %v2133 = vadd.f32 %v2131, 1.0
    %v2134 = vmul.f32 %v2132, 0.5
    %v2135 = vmul.f32 %v2133, 0.5
    %v2136 = vmul.f32 %v2124, %v1974
    %v2137 = vmul.f32 %v2125, %v1975
    %v2138 = vmul.f32 %v2116, %v2126
    %v2139 = vmul.f32 %v2117, %v2127
    %v2140 = vadd.f32 %v2136, %v2138
    %v2141 = vadd.f32 %v2137, %v2139
    %v2142 = vtanh.pop %v2140
    %v2143 = vtanh.pop %v2141
    %v2144 = vmul.f32 %v2134, %v2142
    %v2145 = vmul.f32 %v2135, %v2143
    %v2146 = vmul.f32 %v2144, %v1475
    %v2147 = vmul.f32 %v2145, %v1480
    %v2148 = vadd.f32 %v2146, %v2147
    %v2149 = vrot.slane %v2148, 4
    %v2150 = vadd.f32 %v2148, %v2149
    %v2151 = vrot.slane %v2150, 2
    %v2152 = vadd.f32 %v2150, %v2151
    %v2153 = vrot.slane %v2152, 1
    %v2154 = vadd.f32 %v2152, %v2153
    %v2155 = vld [vmem:[%s969] sm:$0xff]
    %v2156 = vld [vmem:[%s969 + $0x8] sm:$0xff]
    %v2157 = vld [vmem:[%s969 + $0x10] sm:$0xff]
    %v2158 = vld [vmem:[%s969 + $0x18] sm:$0xff]
    %v2159 = vld [vmem:[%s969 + $0x20] sm:$0xff]
    %v2160 = vld [vmem:[%s969 + $0x28] sm:$0xff]
    %v2161 = vld [vmem:[%s969 + $0x30] sm:$0xff]
    %v2162 = vld [vmem:[%s969 + $0x38] sm:$0xff]
    %2163 = vmatprep.subr.mxu0 0.0
    %2164 = vmatpush1.msra.mxu0 %v2144
    %2165 = vmatprep.subr.mxu0 0.0
    %2166 = vmatpush1.msra.mxu0 %v2145
    %2167 = vmatprep.subr.mxu0 0.0
    %2168 = vmatpush1.msra.mxu0 0.0
    %2169 = vmatprep.subr.mxu0 0.0
    %2170 = vmatpush1.msra.mxu0 0.0
    %2171 = vmatprep.subr.mxu0 0.0
    %2172 = vmatpush1.msra.mxu0 0.0
    %2173 = vmatprep.subr.mxu0 0.0
    %2174 = vmatpush1.msra.mxu0 0.0
    %2175 = vmatprep.subr.mxu0 0.0
    %2176 = vmatpush1.msra.mxu0 0.0
    %2177 = vmatprep.subr.mxu0 0.0
    %2178 = vmatpush1.msra.mxu0 0.0
    %2179 = vmatprep.subr.mxu0 0.0
    %2180 = vmatpush1.msra.mxu0 0.0
    %2181 = vmatprep.subr.mxu0 0.0
    %2182 = vmatpush1.msra.mxu0 0.0
    %2183 = vmatprep.subr.mxu0 0.0
    %2184 = vmatpush1.msra.mxu0 0.0
    %2185 = vmatprep.subr.mxu0 0.0
    %2186 = vmatpush1.msra.mxu0 0.0
    %2187 = vmatprep.subr.mxu0 0.0
    %2188 = vmatpush1.msra.mxu0 0.0
    %2189 = vmatprep.subr.mxu0 0.0
    %2190 = vmatpush1.msra.mxu0 0.0
    %2191 = vmatprep.subr.mxu0 0.0
    %2192 = vmatpush1.msra.mxu0 0.0
    %2193 = vmatprep.subr.mxu0 0.0
    %2194 = vmatpush1.msra.mxu0 0.0
    %2195 = vmatprep.subr.mxu0 0.0
    %2196 = vmatpush1.msra.mxu0 0.0
    %2197 = vmatprep.subr.mxu0 0.0
    %2198 = vmatpush1.msra.mxu0 0.0
    %2199 = vmatprep.subr.mxu0 0.0
    %2200 = vmatpush1.msra.mxu0 0.0
    %2201 = vmatprep.subr.mxu0 0.0
    %2202 = vmatpush1.msra.mxu0 0.0
    %2203 = vmatprep.subr.mxu0 0.0
    %2204 = vmatpush1.msra.mxu0 0.0
    %2205 = vmatprep.subr.mxu0 0.0
    %2206 = vmatpush1.msra.mxu0 0.0
    %2207 = vmatprep.subr.mxu0 0.0
    %2208 = vmatpush1.msra.mxu0 0.0
    %2209 = vmatprep.subr.mxu0 0.0
    %2210 = vmatpush1.msra.mxu0 0.0
    %2211 = vmatprep.subr.mxu0 0.0
    %2212 = vmatpush1.msra.mxu0 0.0
    %2213 = vmatprep.subr.mxu0 0.0
    %2214 = vmatpush1.msra.mxu0 0.0
    %2215 = vmatprep.subr.mxu0 0.0
    %2216 = vmatpush1.msra.mxu0 0.0
    %2217 = vmatprep.subr.mxu0 0.0
    %2218 = vmatpush1.msra.mxu0 0.0
    %2219 = vmatprep.subr.mxu0 0.0
    %2220 = vmatpush1.msra.mxu0 0.0
    %2221 = vmatprep.subr.mxu0 0.0
    %2222 = vmatpush1.msra.mxu0 0.0
    %2223 = vmatprep.subr.mxu0 0.0
    %2224 = vmatpush1.msra.mxu0 0.0
    %2225 = vmatprep.subr.mxu0 0.0
    %2226 = vmatpush1.msra.mxu0 0.0
    %2227 = vmatprep.mubr.f32.mxu0 0.0
    %2228 = vmatmul.mubr.f32.gmra.mrb[0].mxu0 %v1300
    %v2229 = vpop.f32.mrb[0].mxu0
    %v2230 = vadd.f32 0.0, %v2229
    %v2231 = vpop.f32.mrb[0].mxu0
    %2232 = vmatprep.mubr.f32.mxu0 0.0
    %2233 = vmatmul.mubr.f32.gmra.mrb[0].mxu0 %v1303
    %v2234 = vpop.f32.mrb[0].mxu0
    %v2235 = vadd.f32 0.0, %v2234
    %v2236 = vpop.f32.mrb[0].mxu0
    %2237 = vmatprep.mubr.f32.mxu0 0.0
    %2238 = vmatmul.mubr.f32.gmra.mrb[0].mxu0 %v1306
    %v2239 = vpop.f32.mrb[0].mxu0
    %v2240 = vadd.f32 0.0, %v2239
    %v2241 = vpop.f32.mrb[0].mxu0
    %2242 = vmatprep.mubr.f32.mxu0 0.0
    %2243 = vmatmul.mubr.f32.gmra.mrb[0].mxu0 %v1309
    %v2244 = vpop.f32.mrb[0].mxu0
    %v2245 = vadd.f32 0.0, %v2244
    %v2246 = vpop.f32.mrb[0].mxu0
    %2247 = vmatprep.mubr.f32.mxu0 0.0
    %2248 = vmatmul.mubr.f32.gmra.mrb[0].mxu0 %v1312
    %v2249 = vpop.f32.mrb[0].mxu0
    %v2250 = vadd.f32 0.0, %v2249
    %v2251 = vpop.f32.mrb[0].mxu0
    %2252 = vmatprep.mubr.f32.mxu0 0.0
    %2253 = vmatmul.mubr.f32.gmra.mrb[0].mxu0 %v1315
    %v2254 = vpop.f32.mrb[0].mxu0
    %v2255 = vadd.f32 0.0, %v2254
    %v2256 = vpop.f32.mrb[0].mxu0
    %2257 = vmatprep.mubr.f32.mxu0 0.0
    %2258 = vmatmul.mubr.f32.gmra.mrb[0].mxu0 %v1318
    %v2259 = vpop.f32.mrb[0].mxu0
    %v2260 = vadd.f32 0.0, %v2259
    %v2261 = vpop.f32.mrb[0].mxu0
    %2262 = vmatprep.mubr.f32.mxu0 0.0
    %2263 = vmatmul.mubr.f32.gmra.mrb[0].mxu0 %v1321
    %v2264 = vpop.f32.mrb[0].mxu0
    %v2265 = vadd.f32 0.0, %v2264
    %v2266 = vpop.f32.mrb[0].mxu0
    %2267 = vdwg.mxu0
    %v2268 = vadd.f32 %v2155, %v2230
    %v2269 = vadd.f32 %v2156, %v2235
    %v2270 = vadd.f32 %v2157, %v2240
    %v2271 = vadd.f32 %v2158, %v2245
    %v2272 = vadd.f32 %v2159, %v2250
    %v2273 = vadd.f32 %v2160, %v2255
    %v2274 = vadd.f32 %v2161, %v2260
    %v2275 = vadd.f32 %v2162, %v2265
    %v2276 = vmul.f32 %v2268, 0.5
    %v2277 = vmul.f32 %v2269, 0.5
    %v2278 = vtanh.pop %v2276
    %v2279 = vtanh.pop %v2277
    %v2280 = vadd.f32 %v2278, 1.0
    %v2281 = vadd.f32 %v2279, 1.0
    %v2282 = vmul.f32 %v2280, 0.5
    %v2283 = vmul.f32 %v2281, 0.5
    %v2284 = vmul.f32 %v2270, 0.5
    %v2285 = vmul.f32 %v2271, 0.5
    %v2286 = vtanh.pop %v2284
    %v2287 = vtanh.pop %v2285
    %v2288 = vadd.f32 %v2286, 1.0
    %v2289 = vadd.f32 %v2287, 1.0
    %v2290 = vmul.f32 %v2288, 0.5
    %v2291 = vmul.f32 %v2289, 0.5
    %v2292 = vtanh.pop %v2272
    %v2293 = vtanh.pop %v2273
    %v2294 = vmul.f32 %v2274, 0.5
    %v2295 = vmul.f32 %v2275, 0.5
    %v2296 = vtanh.pop %v2294
    %v2297 = vtanh.pop %v2295
    %v2298 = vadd.f32 %v2296, 1.0
    %v2299 = vadd.f32 %v2297, 1.0
    %v2300 = vmul.f32 %v2298, 0.5
    %v2301 = vmul.f32 %v2299, 0.5
    %v2302 = vmul.f32 %v2290, %v2140
    %v2303 = vmul.f32 %v2291, %v2141
    %v2304 = vmul.f32 %v2282, %v2292
    %v2305 = vmul.f32 %v2283, %v2293
    %v2306 = vadd.f32 %v2302, %v2304
    %v2307 = vadd.f32 %v2303, %v2305
    %v2308 = vtanh.pop %v2306
    %v2309 = vtanh.pop %v2307
    %v2310 = vmul.f32 %v2300, %v2308
    %v2311 = vmul.f32 %v2301, %v2309
    %v2312 = vmul.f32 %v2310, %v1475
    %v2313 = vmul.f32 %v2311, %v1480
    %v2314 = vadd.f32 %v2312, %v2313
    %v2315 = vrot.slane %v2314, 4
    %v2316 = vadd.f32 %v2314, %v2315
    %v2317 = vrot.slane %v2316, 2
    %v2318 = vadd.f32 %v2316, %v2317
    %v2319 = vrot.slane %v2318, 1
    %v2320 = vadd.f32 %v2318, %v2319
    %v2321 = vld [vmem:[%s1120] sm:$0xff]
    %v2322 = vld [vmem:[%s1120 + $0x8] sm:$0xff]
    %v2323 = vld [vmem:[%s1120 + $0x10] sm:$0xff]
    %v2324 = vld [vmem:[%s1120 + $0x18] sm:$0xff]
    %v2325 = vld [vmem:[%s1120 + $0x20] sm:$0xff]
    %v2326 = vld [vmem:[%s1120 + $0x28] sm:$0xff]
    %v2327 = vld [vmem:[%s1120 + $0x30] sm:$0xff]
    %v2328 = vld [vmem:[%s1120 + $0x38] sm:$0xff]
    %2329 = vmatprep.subr.mxu0 0.0
    %2330 = vmatpush1.msra.mxu0 %v2310
    %2331 = vmatprep.subr.mxu0 0.0
    %2332 = vmatpush1.msra.mxu0 %v2311
    %2333 = vmatprep.subr.mxu0 0.0
    %2334 = vmatpush1.msra.mxu0 0.0
    %2335 = vmatprep.subr.mxu0 0.0
    %2336 = vmatpush1.msra.mxu0 0.0
    %2337 = vmatprep.subr.mxu0 0.0
    %2338 = vmatpush1.msra.mxu0 0.0
    %2339 = vmatprep.subr.mxu0 0.0
    %2340 = vmatpush1.msra.mxu0 0.0
    %2341 = vmatprep.subr.mxu0 0.0
    %2342 = vmatpush1.msra.mxu0 0.0
    %2343 = vmatprep.subr.mxu0 0.0
    %2344 = vmatpush1.msra.mxu0 0.0
    %2345 = vmatprep.subr.mxu0 0.0
    %2346 = vmatpush1.msra.mxu0 0.0
    %2347 = vmatprep.subr.mxu0 0.0
    %2348 = vmatpush1.msra.mxu0 0.0
    %2349 = vmatprep.subr.mxu0 0.0
    %2350 = vmatpush1.msra.mxu0 0.0
    %2351 = vmatprep.subr.mxu0 0.0
    %2352 = vmatpush1.msra.mxu0 0.0
    %2353 = vmatprep.subr.mxu0 0.0
    %2354 = vmatpush1.msra.mxu0 0.0
    %2355 = vmatprep.subr.mxu0 0.0
    %2356 = vmatpush1.msra.mxu0 0.0
    %2357 = vmatprep.subr.mxu0 0.0
    %2358 = vmatpush1.msra.mxu0 0.0
    %2359 = vmatprep.subr.mxu0 0.0
    %2360 = vmatpush1.msra.mxu0 0.0
    %2361 = vmatprep.subr.mxu0 0.0
    %2362 = vmatpush1.msra.mxu0 0.0
    %2363 = vmatprep.subr.mxu0 0.0
    %2364 = vmatpush1.msra.mxu0 0.0
    %2365 = vmatprep.subr.mxu0 0.0
    %2366 = vmatpush1.msra.mxu0 0.0
    %2367 = vmatprep.subr.mxu0 0.0
    %2368 = vmatpush1.msra.mxu0 0.0
    %2369 = vmatprep.subr.mxu0 0.0
    %2370 = vmatpush1.msra.mxu0 0.0
    %2371 = vmatprep.subr.mxu0 0.0
    %2372 = vmatpush1.msra.mxu0 0.0
    %2373 = vmatprep.subr.mxu0 0.0
    %2374 = vmatpush1.msra.mxu0 0.0
    %2375 = vmatprep.subr.mxu0 0.0
    %2376 = vmatpush1.msra.mxu0 0.0
    %2377 = vmatprep.subr.mxu0 0.0
    %2378 = vmatpush1.msra.mxu0 0.0
    %2379 = vmatprep.subr.mxu0 0.0
    %2380 = vmatpush1.msra.mxu0 0.0
    %2381 = vmatprep.subr.mxu0 0.0
    %2382 = vmatpush1.msra.mxu0 0.0
    %2383 = vmatprep.subr.mxu0 0.0
    %2384 = vmatpush1.msra.mxu0 0.0
    %2385 = vmatprep.subr.mxu0 0.0
    %2386 = vmatpush1.msra.mxu0 0.0
    %2387 = vmatprep.subr.mxu0 0.0
    %2388 = vmatpush1.msra.mxu0 0.0
    %2389 = vmatprep.subr.mxu0 0.0
    %2390 = vmatpush1.msra.mxu0 0.0
    %2391 = vmatprep.subr.mxu0 0.0
    %2392 = vmatpush1.msra.mxu0 0.0
    %2393 = vmatprep.mubr.f32.mxu0 0.0
    %2394 = vmatmul.mubr.f32.gmra.mrb[0].mxu0 %v1300
    %v2395 = vpop.f32.mrb[0].mxu0
    %v2396 = vadd.f32 0.0, %v2395
    %v2397 = vpop.f32.mrb[0].mxu0
    %2398 = vmatprep.mubr.f32.mxu0 0.0
    %2399 = vmatmul.mubr.f32.gmra.mrb[0].mxu0 %v1303
    %v2400 = vpop.f32.mrb[0].mxu0
    %v2401 = vadd.f32 0.0, %v2400
    %v2402 = vpop.f32.mrb[0].mxu0
    %2403 = vmatprep.mubr.f32.mxu0 0.0
    %2404 = vmatmul.mubr.f32.gmra.mrb[0].mxu0 %v1306
    %v2405 = vpop.f32.mrb[0].mxu0
    %v2406 = vadd.f32 0.0, %v2405
    %v2407 = vpop.f32.mrb[0].mxu0
    %2408 = vmatprep.mubr.f32.mxu0 0.0
    %2409 = vmatmul.mubr.f32.gmra.mrb[0].mxu0 %v1309
    %v2410 = vpop.f32.mrb[0].mxu0
    %v2411 = vadd.f32 0.0, %v2410
    %v2412 = vpop.f32.mrb[0].mxu0
    %2413 = vmatprep.mubr.f32.mxu0 0.0
    %2414 = vmatmul.mubr.f32.gmra.mrb[0].mxu0 %v1312
    %v2415 = vpop.f32.mrb[0].mxu0
    %v2416 = vadd.f32 0.0, %v2415
    %v2417 = vpop.f32.mrb[0].mxu0
    %2418 = vmatprep.mubr.f32.mxu0 0.0
    %2419 = vmatmul.mubr.f32.gmra.mrb[0].mxu0 %v1315
    %v2420 = vpop.f32.mrb[0].mxu0
    %v2421 = vadd.f32 0.0, %v2420
    %v2422 = vpop.f32.mrb[0].mxu0
    %2423 = vmatprep.mubr.f32.mxu0 0.0
    %2424 = vmatmul.mubr.f32.gmra.mrb[0].mxu0 %v1318
    %v2425 = vpop.f32.mrb[0].mxu0
    %v2426 = vadd.f32 0.0, %v2425
    %v2427 = vpop.f32.mrb[0].mxu0
    %2428 = vmatprep.mubr.f32.mxu0 0.0
    %2429 = vmatmul.mubr.f32.gmra.mrb[0].mxu0 %v1321
    %v2430 = vpop.f32.mrb[0].mxu0
    %v2431 = vadd.f32 0.0, %v2430
    %v2432 = vpop.f32.mrb[0].mxu0
    %2433 = vdwg.mxu0
    %v2434 = vadd.f32 %v2321, %v2396
    %v2435 = vadd.f32 %v2322, %v2401
    %v2436 = vadd.f32 %v2323, %v2406
    %v2437 = vadd.f32 %v2324, %v2411
    %v2438 = vadd.f32 %v2325, %v2416
    %v2439 = vadd.f32 %v2326, %v2421
    %v2440 = vadd.f32 %v2327, %v2426
    %v2441 = vadd.f32 %v2328, %v2431
    %v2442 = vmul.f32 %v2434, 0.5
    %v2443 = vmul.f32 %v2435, 0.5
    %v2444 = vtanh.pop %v2442
    %v2445 = vtanh.pop %v2443
    %v2446 = vadd.f32 %v2444, 1.0
    %v2447 = vadd.f32 %v2445, 1.0
    %v2448 = vmul.f32 %v2446, 0.5
    %v2449 = vmul.f32 %v2447, 0.5
    %v2450 = vmul.f32 %v2436, 0.5
    %v2451 = vmul.f32 %v2437, 0.5
    %v2452 = vtanh.pop %v2450
    %v2453 = vtanh.pop %v2451
    %v2454 = vadd.f32 %v2452, 1.0
    %v2455 = vadd.f32 %v2453, 1.0
    %v2456 = vmul.f32 %v2454, 0.5
    %v2457 = vmul.f32 %v2455, 0.5
    %v2458 = vtanh.pop %v2438
    %v2459 = vtanh.pop %v2439
    %v2460 = vmul.f32 %v2440, 0.5
    %v2461 = vmul.f32 %v2441, 0.5
    %v2462 = vtanh.pop %v2460
    %v2463 = vtanh.pop %v2461
    %v2464 = vadd.f32 %v2462, 1.0
    %v2465 = vadd.f32 %v2463, 1.0
    %v2466 = vmul.f32 %v2464, 0.5
    %v2467 = vmul.f32 %v2465, 0.5
    %v2468 = vmul.f32 %v2456, %v2306
    %v2469 = vmul.f32 %v2457, %v2307
    %v2470 = vmul.f32 %v2448, %v2458
    %v2471 = vmul.f32 %v2449, %v2459
    %v2472 = vadd.f32 %v2468, %v2470
    %v2473 = vadd.f32 %v2469, %v2471
    %v2474 = vtanh.pop %v2472
    %v2475 = vtanh.pop %v2473
    %v2476 = vmul.f32 %v2466, %v2474
    %v2477 = vmul.f32 %v2467, %v2475
    %v2478 = vmul.f32 %v2476, %v1475
    %v2479 = vmul.f32 %v2477, %v1480
    %v2480 = vadd.f32 %v2478, %v2479
    %v2481 = vrot.slane %v2480, 4
    %v2482 = vadd.f32 %v2480, %v2481
    %v2483 = vrot.slane %v2482, 2
    %v2484 = vadd.f32 %v2482, %v2483
    %v2485 = vrot.slane %v2484, 1
    %v2486 = vadd.f32 %v2484, %v2485
    %v2487 = vld [vmem:[%s1271] sm:$0xff]
    %v2488 = vld [vmem:[%s1271 + $0x8] sm:$0xff]
    %v2489 = vld [vmem:[%s1271 + $0x10] sm:$0xff]
    %v2490 = vld [vmem:[%s1271 + $0x18] sm:$0xff]
    %v2491 = vld [vmem:[%s1271 + $0x20] sm:$0xff]
    %v2492 = vld [vmem:[%s1271 + $0x28] sm:$0xff]
    %v2493 = vld [vmem:[%s1271 + $0x30] sm:$0xff]
    %v2494 = vld [vmem:[%s1271 + $0x38] sm:$0xff]
    %2495 = vmatprep.subr.mxu0 0.0
    %2496 = vmatpush1.msra.mxu0 %v2476
    %2497 = vmatprep.subr.mxu0 0.0
    %2498 = vmatpush1.msra.mxu0 %v2477
    %2499 = vmatprep.subr.mxu0 0.0
    %2500 = vmatpush1.msra.mxu0 0.0
    %2501 = vmatprep.subr.mxu0 0.0
    %2502 = vmatpush1.msra.mxu0 0.0
    %2503 = vmatprep.subr.mxu0 0.0
    %2504 = vmatpush1.msra.mxu0 0.0
    %2505 = vmatprep.subr.mxu0 0.0
    %2506 = vmatpush1.msra.mxu0 0.0
    %2507 = vmatprep.subr.mxu0 0.0
    %2508 = vmatpush1.msra.mxu0 0.0
    %2509 = vmatprep.subr.mxu0 0.0
    %2510 = vmatpush1.msra.mxu0 0.0
    %2511 = vmatprep.subr.mxu0 0.0
    %2512 = vmatpush1.msra.mxu0 0.0
    %2513 = vmatprep.subr.mxu0 0.0
    %2514 = vmatpush1.msra.mxu0 0.0
    %2515 = vmatprep.subr.mxu0 0.0
    %2516 = vmatpush1.msra.mxu0 0.0
    %2517 = vmatprep.subr.mxu0 0.0
    %2518 = vmatpush1.msra.mxu0 0.0
    %2519 = vmatprep.subr.mxu0 0.0
    %2520 = vmatpush1.msra.mxu0 0.0
    %2521 = vmatprep.subr.mxu0 0.0
    %2522 = vmatpush1.msra.mxu0 0.0
    %2523 = vmatprep.subr.mxu0 0.0
    %2524 = vmatpush1.msra.mxu0 0.0
    %2525 = vmatprep.subr.mxu0 0.0
    %2526 = vmatpush1.msra.mxu0 0.0
    %2527 = vmatprep.subr.mxu0 0.0
    %2528 = vmatpush1.msra.mxu0 0.0
    %2529 = vmatprep.subr.mxu0 0.0
    %2530 = vmatpush1.msra.mxu0 0.0
    %2531 = vmatprep.subr.mxu0 0.0
    %2532 = vmatpush1.msra.mxu0 0.0
    %2533 = vmatprep.subr.mxu0 0.0
    %2534 = vmatpush1.msra.mxu0 0.0
    %2535 = vmatprep.subr.mxu0 0.0
    %2536 = vmatpush1.msra.mxu0 0.0
    %2537 = vmatprep.subr.mxu0 0.0
    %2538 = vmatpush1.msra.mxu0 0.0
    %2539 = vmatprep.subr.mxu0 0.0
    %2540 = vmatpush1.msra.mxu0 0.0
    %2541 = vmatprep.subr.mxu0 0.0
    %2542 = vmatpush1.msra.mxu0 0.0
    %2543 = vmatprep.subr.mxu0 0.0
    %2544 = vmatpush1.msra.mxu0 0.0
    %2545 = vmatprep.subr.mxu0 0.0
    %2546 = vmatpush1.msra.mxu0 0.0
    %2547 = vmatprep.subr.mxu0 0.0
    %2548 = vmatpush1.msra.mxu0 0.0
    %2549 = vmatprep.subr.mxu0 0.0
    %2550 = vmatpush1.msra.mxu0 0.0
    %2551 = vmatprep.subr.mxu0 0.0
    %2552 = vmatpush1.msra.mxu0 0.0
    %2553 = vmatprep.subr.mxu0 0.0
    %2554 = vmatpush1.msra.mxu0 0.0
    %2555 = vmatprep.subr.mxu0 0.0
    %2556 = vmatpush1.msra.mxu0 0.0
    %2557 = vmatprep.subr.mxu0 0.0
    %2558 = vmatpush1.msra.mxu0 0.0
    %2559 = vmatprep.mubr.f32.mxu0 0.0
    %2560 = vmatmul.mubr.f32.gmra.mrb[0].mxu0 %v1300
    %v2561 = vpop.f32.mrb[0].mxu0
    %v2562 = vadd.f32 0.0, %v2561
    %v2563 = vpop.f32.mrb[0].mxu0
    %2564 = vmatprep.mubr.f32.mxu0 0.0
    %2565 = vmatmul.mubr.f32.gmra.mrb[0].mxu0 %v1303
    %v2566 = vpop.f32.mrb[0].mxu0
    %v2567 = vadd.f32 0.0, %v2566
    %v2568 = vpop.f32.mrb[0].mxu0
    %2569 = vmatprep.mubr.f32.mxu0 0.0
    %2570 = vmatmul.mubr.f32.gmra.mrb[0].mxu0 %v1306
    %v2571 = vpop.f32.mrb[0].mxu0
    %v2572 = vadd.f32 0.0, %v2571
    %v2573 = vpop.f32.mrb[0].mxu0
    %2574 = vmatprep.mubr.f32.mxu0 0.0
    %2575 = vmatmul.mubr.f32.gmra.mrb[0].mxu0 %v1309
    %v2576 = vpop.f32.mrb[0].mxu0
    %v2577 = vadd.f32 0.0, %v2576
    %v2578 = vpop.f32.mrb[0].mxu0
    %2579 = vmatprep.mubr.f32.mxu0 0.0
    %2580 = vmatmul.mubr.f32.gmra.mrb[0].mxu0 %v1312
    %v2581 = vpop.f32.mrb[0].mxu0
    %v2582 = vadd.f32 0.0, %v2581
    %v2583 = vpop.f32.mrb[0].mxu0
    %2584 = vmatprep.mubr.f32.mxu0 0.0
    %2585 = vmatmul.mubr.f32.gmra.mrb[0].mxu0 %v1315
    %v2586 = vpop.f32.mrb[0].mxu0
    %v2587 = vadd.f32 0.0, %v2586
    %v2588 = vpop.f32.mrb[0].mxu0
    %2589 = vmatprep.mubr.f32.mxu0 0.0
    %2590 = vmatmul.mubr.f32.gmra.mrb[0].mxu0 %v1318
    %v2591 = vpop.f32.mrb[0].mxu0
    %v2592 = vadd.f32 0.0, %v2591
    %v2593 = vpop.f32.mrb[0].mxu0
    %2594 = vmatprep.mubr.f32.mxu0 0.0
    %2595 = vmatmul.mubr.f32.gmra.mrb[0].mxu0 %v1321
    %v2596 = vpop.f32.mrb[0].mxu0
    %v2597 = vadd.f32 0.0, %v2596
    %v2598 = vpop.f32.mrb[0].mxu0
    %2599 = vdwg.mxu0
    %v2600 = vadd.f32 %v2487, %v2562
    %v2601 = vadd.f32 %v2488, %v2567
    %v2602 = vadd.f32 %v2489, %v2572
    %v2603 = vadd.f32 %v2490, %v2577
    %v2604 = vadd.f32 %v2491, %v2582
    %v2605 = vadd.f32 %v2492, %v2587
    %v2606 = vadd.f32 %v2493, %v2592
    %v2607 = vadd.f32 %v2494, %v2597
    %v2608 = vmul.f32 %v2600, 0.5
    %v2609 = vmul.f32 %v2601, 0.5
    %v2610 = vtanh.pop %v2608
    %v2611 = vtanh.pop %v2609
    %v2612 = vadd.f32 %v2610, 1.0
    %v2613 = vadd.f32 %v2611, 1.0
    %v2614 = vmul.f32 %v2612, 0.5
    %v2615 = vmul.f32 %v2613, 0.5
    %v2616 = vmul.f32 %v2602, 0.5
    %v2617 = vmul.f32 %v2603, 0.5
    %v2618 = vtanh.pop %v2616
    %v2619 = vtanh.pop %v2617
    %v2620 = vadd.f32 %v2618, 1.0
    %v2621 = vadd.f32 %v2619, 1.0
    %v2622 = vmul.f32 %v2620, 0.5
    %v2623 = vmul.f32 %v2621, 0.5
    %v2624 = vtanh.pop %v2604
    %v2625 = vtanh.pop %v2605
    %v2626 = vmul.f32 %v2606, 0.5
    %v2627 = vmul.f32 %v2607, 0.5
    %v2628 = vtanh.pop %v2626
    %v2629 = vtanh.pop %v2627
    %v2630 = vadd.f32 %v2628, 1.0
    %v2631 = vadd.f32 %v2629, 1.0
    %v2632 = vmul.f32 %v2630, 0.5
    %v2633 = vmul.f32 %v2631, 0.5
    %v2634 = vmul.f32 %v2622, %v2472
    %v2635 = vmul.f32 %v2623, %v2473
    %v2636 = vmul.f32 %v2614, %v2624
    %v2637 = vmul.f32 %v2615, %v2625
    %v2638 = vadd.f32 %v2634, %v2636
    %v2639 = vadd.f32 %v2635, %v2637
    %v2640 = vtanh.pop %v2638
    %v2641 = vtanh.pop %v2639
    %v2642 = vmul.f32 %v2632, %v2640
    %v2643 = vmul.f32 %v2633, %v2641
    %v2644 = vmul.f32 %v2642, %v1475
    %v2645 = vmul.f32 %v2643, %v1480
    %v2646 = vadd.f32 %v2644, %v2645
    %v2647 = vrot.slane %v2646, 4
    %v2648 = vadd.f32 %v2646, %v2647
    %v2649 = vrot.slane %v2648, 2
    %v2650 = vadd.f32 %v2648, %v2649
    %v2651 = vrot.slane %v2650, 1
    %v2652 = vadd.f32 %v2650, %v2651
    %vm2653 = vcmask 1040384
    %v2654 = vsel %vm2653, %v1490, %v1656
    %vm2655 = vcmask 1041408
    %v2656 = vsel %vm2655, %v2654, %v1822
    %vm2657 = vcmask 1042432
    %v2658 = vsel %vm2657, %v2656, %v1988
    %vm2659 = vcmask 1043456
    %v2660 = vsel %vm2659, %v2658, %v2154
    %vm2661 = vcmask 1044480
    %v2662 = vsel %vm2661, %v2660, %v2320
    %vm2663 = vcmask 1045504
    %v2664 = vsel %vm2663, %v2662, %v2486
    %vm2665 = vcmask 1046528
    %v2666 = vsel %vm2665, %v2664, %v2652
    %s2667 = sld [smem:[#allocation3]]
    %v2668 = vstv %s2667
    %v2669 = vadd.f32 %v2666, %v2668
    %2670 = vst [vmem:[#allocation4] sm:$0xff] %v2669
    // Predicated region
    $region26: #{tpu_custom_call.1} parent=1 // pred_check
      _
    $region27: #{tpu_custom_call.1} parent=1 // pred_check_branch
      %2672 = sbr.rel (0) target = $region29
    $region28: #{tpu_custom_call.1} parent=1 // pred_region
      %s2674 = ssub.s32 128, 128
      %2675 = vsyncadd [#allocation5], %s2674
      %s2677 = sshll.u32 [#allocation4], 4
      %s2678 = int_to_ptr.vmem [resolvable:$true] %s2677
      %2680 = dma.vmem_to_hbm [thread:$0]  %s2678, 128, %s6, [#allocation5]
    $region29: #{tpu_custom_call.1} parent=1 // pred_fallthru
      _
    // Predicated region
    $region30: #{tpu_custom_call.1} parent=1 // pred_check
      _
    $region31: #{tpu_custom_call.1} parent=1 // pred_check_branch
      %2682 = sbr.rel (0) target = $region33
    $region32: #{tpu_custom_call.1} parent=1 // pred_region
      %2683 = dma.done [#allocation5], 128
    $region33: #{tpu_custom_call.1} parent=1 // pred_fallthru
      _
    %2684 = vsyncpa [#allocation5], 1

</llo_original>
